<compile_context>
chip_gen: v5e
topology: v5e:2x2
jax: 0.10.0
libtpu: 0.0.40
codegen_flags: <defaults>
</compile_context>

<pallas_src>
import jax
import jax.numpy as jnp
from jax.experimental import pallas as pl
from jax.experimental.pallas import tpu as pltpu


def _luong_attention_kernel(qp_ref, bias_ref, keys_ref, values_ref,
                            ctx_ref, alpha_ref):
    qp = qp_ref[...]        # (TB, 1, K)  pre-projected query (query @ W), input dtype
    bias = bias_ref[...]    # (TB, 1, S)  f32 additive mask bias (0 valid / -1e30 masked)
    keys = keys_ref[...]    # (TB, S, K)  input dtype (f32 or bf16)
    vals = values_ref[...]  # (TB, S, V)  input dtype (f32 or bf16)

    # scores[b, 0, s] = sum_k qp[b, 0, k] * keys[b, s, k]   (f32 accumulation on MXU)
    scores = jnp.einsum('bqk,bsk->bqs', qp, keys,
                        preferred_element_type=jnp.float32) + bias

    # Numerically-stable softmax over source positions (all f32).
    smax = jnp.max(scores, axis=-1, keepdims=True)
    e = jnp.exp(scores - smax)
    denom = jnp.sum(e, axis=-1, keepdims=True)
    # Exact reciprocal (keeps sum(alphas)==1 to ~1e-7) + cheap multiply instead
    # of a per-element VALU divide.
    alphas = e * pl.reciprocal(denom, approx=False)        # (TB, 1, S) f32

    # context[b, 0, v] = sum_s alphas[b, 0, s] * vals[b, s, v]   (MXU, f32 acc)
    ctx = jnp.einsum('bqs,bsv->bqv', alphas.astype(vals.dtype), vals,
                     preferred_element_type=jnp.float32)

    ctx_ref[...] = ctx.astype(ctx_ref.dtype)
    alpha_ref[...] = alphas.astype(alpha_ref.dtype)


def luong_attention(query, mask, keys, values, weight, *, block_b=32,
                    vmem_budget_bytes=48 * 1024 * 1024):
    """Luong attention forward. Returns (context (B,1,V), alphas (B,1,S)).

    `weight` is key_layer.weight with shape (hidden_size, key_size); the key
    projection of the module is folded algebraically into a single query-side
    projection (q @ W) computed here in the wrapper.

    block_b: batch rows per grid step.  Bigger tiles amortize the ~0.35us
    per-step pipeline overhead (important on v7x where a small tile's DMA time
    at 3.2 TB/s is below that overhead); it is auto-shrunk to keep the
    double-buffered keys+values tiles within `vmem_budget_bytes`, which is also
    passed to Mosaic as vmem_limit_bytes (scoped defaults are 16/32/32 MiB on
    v5e/v6e/v7x).
    """
    B, one, H = query.shape
    assert one == 1
    Bk, S, K = keys.shape
    Bv, Sv, V = values.shape
    assert Bk == B and Bv == B and Sv == S
    assert weight.shape == (H, K)
    assert mask.shape == (B, 1, S)

    out_dtype = query.dtype

    # Hoisted projection: one well-shaped (B,H)x(H,K) matmul, f32 accumulate,
    # streamed to the kernel in the keys dtype (bf16 halves this tiny stream).
    q_proj = jnp.einsum('bqh,hk->bqk', query, weight,
                        preferred_element_type=jnp.float32).astype(keys.dtype)

    # Mask as additive bias. Large-finite (not -inf) so a fully-masked row
    # cannot produce (-inf) - (-inf) = NaN; exp(-1e30 - max) underflows to 0.
    bias = jnp.where(mask, jnp.float32(0.0), jnp.float32(-1e30)).astype(jnp.float32)

    # --- batch tile selection -------------------------------------------------
    item = lambda dt: jnp.dtype(dt).itemsize
    per_batch_bytes = (S * (K * item(keys.dtype) + V * item(values.dtype))   # keys+values
                       + K * item(keys.dtype)                               # q_proj row
                       + S * 4                                              # bias row (f32)
                       + V * item(out_dtype) + S * item(out_dtype))         # outputs
    # TODO(synk): tile S with a flash-style online-softmax accumulator if a
    # single batch row's keys+values ever exceed the VMEM budget (very long S).
    assert 2 * per_batch_bytes <= vmem_budget_bytes, (
        "sequence too long for un-tiled S: one double-buffered batch row "
        f"needs {2 * per_batch_bytes} bytes > budget {vmem_budget_bytes}")

    TB = max(1, min(block_b, B))
    # Shrink until double-buffered tiles fit in ~3/4 of the budget (leave
    # headroom for compiler temporaries inside the limit we hand to Mosaic).
    while TB > 1 and 2 * TB * per_batch_bytes > (3 * vmem_budget_bytes) // 4:
        TB = max(1, TB // 2)

    # No padding: partial last block.  Leading-dim blocks need not divide B;
    # last-two dims of every block equal the full array dims, so the (8,128)
    # constraint is satisfied for any TB.  OOB rows of the last block are read
    # as garbage, computed on independently, and never written back.
    grid = (pl.cdiv(B, TB),)

    out_shapes = (
        jax.ShapeDtypeStruct((B, 1, V), out_dtype),   # context
        jax.ShapeDtypeStruct((B, 1, S), out_dtype),   # alphas (input dtype, not f32)
    )

    grid_spec = pltpu.PrefetchScalarGridSpec(
        num_scalar_prefetch=0,
        grid=grid,
        in_specs=[
            pl.BlockSpec((TB, 1, K), lambda b: (b, 0, 0)),   # q_proj
            pl.BlockSpec((TB, 1, S), lambda b: (b, 0, 0)),   # mask bias
            pl.BlockSpec((TB, S, K), lambda b: (b, 0, 0)),   # keys
            pl.BlockSpec((TB, S, V), lambda b: (b, 0, 0)),   # values
        ],
        out_specs=[
            pl.BlockSpec((TB, 1, V), lambda b: (b, 0, 0)),   # context
            pl.BlockSpec((TB, 1, S), lambda b: (b, 0, 0)),   # alphas
        ],
    )

    context, alphas = pl.pallas_call(
        _luong_attention_kernel,
        out_shape=out_shapes,
        grid_spec=grid_spec,
        compiler_params=pltpu.CompilerParams(
            dimension_semantics=("parallel",),                # shards over v7x's 2 TCs
            vmem_limit_bytes=int(vmem_budget_bytes)),         # raise scoped VMEM default
    )(q_proj, bias, keys, values)

    return context, alphas


def _reference(query, mask, keys, values, weight):
    """Faithful re-implementation of the PyTorch module (f32, module op order)."""
    proj_keys = jnp.einsum('bsk,hk->bsh', keys, weight)       # key_layer(keys)
    scores = jnp.einsum('bqh,bsh->bqs', query, proj_keys)     # query @ proj_keys^T
    scores = jnp.where(mask, scores, -jnp.inf)
    alphas = jax.nn.softmax(scores, axis=-1)
    context = jnp.einsum('bqs,bsv->bqv', alphas, values)
    return context, alphas


if __name__ == "__main__":
    # Small deterministic shapes; S, K, V are lane-friendly multiples of 128.
    # B=24 with block_b=16 exercises the no-pad partial last block (rows 16..23
    # valid out of a 16-row tile starting at 16).
    B, S, H, K = 24, 256, 96, 128
    V = 128

    key = jax.random.PRNGKey(0)
    k1, k2, k3, k4 = jax.random.split(key, 4)

    query = jax.random.normal(k1, (B, 1, H), dtype=jnp.float32)
    keys_in = jax.random.normal(k2, (B, S, K), dtype=jnp.float32)
    values = jax.random.normal(k3, (B, S, V), dtype=jnp.float32)
    # key_layer weight, nn.Linear(key_size, hidden_size, bias=False), modest scale.
    weight = (jax.random.uniform(k4, (H, K), dtype=jnp.float32) - 0.5) * (2.0 / K)

    # Mask with varying valid lengths per batch element (no fully-masked rows).
    lengths = (jnp.arange(B) % 4 + 1) * (S // 4)               # 64, 128, 192, 256, ...
    mask = (jnp.arange(S)[None, None, :] < lengths[:, None, None])  # (B,1,S) bool

    ref_ctx, ref_alphas = _reference(query, mask, keys_in, values, weight)

    # ---- f32 run (partial last block: B=24, TB=16, grid=2) ----
    context, alphas = luong_attention(query, mask, keys_in, values, weight,
                                      block_b=16)
    jax.block_until_ready((context, alphas))

    # Exact invariants: probabilities sum to 1, masked positions are exactly 0.
    assert bool(jnp.all(jnp.where(mask, True, alphas == 0.0)))
    assert jnp.allclose(jnp.sum(alphas, axis=-1), 1.0, atol=1e-5)
    # Tolerance covers MXU precision / reassociation between the hoisted
    # (q@W)@keys^T form and the module's keys@W^T form.
    assert jnp.allclose(context, ref_ctx, atol=2e-2, rtol=2e-2)
    assert jnp.allclose(alphas, ref_alphas, atol=2e-2, rtol=2e-2)

    # ---- bf16 run (halved HBM traffic for keys/values; f32 accumulation;
    #      alphas emitted in bf16) ----
    ctx_bf, alphas_bf = luong_attention(
        query.astype(jnp.bfloat16), mask, keys_in.astype(jnp.bfloat16),
        values.astype(jnp.bfloat16), weight.astype(jnp.bfloat16), block_b=8)
    jax.block_until_ready((ctx_bf, alphas_bf))
    assert bool(jnp.all(jnp.where(mask, True, alphas_bf == 0.0)))
    assert jnp.allclose(jnp.sum(alphas_bf.astype(jnp.float32), axis=-1), 1.0,
                        atol=3e-2)
    assert jnp.allclose(ctx_bf.astype(jnp.float32), ref_ctx, atol=5e-2, rtol=5e-2)
    assert jnp.allclose(alphas_bf.astype(jnp.float32), ref_alphas,
                        atol=5e-2, rtol=5e-2)

    print("KERNEL_OK")
</pallas_src>

<mosaic_0001>
module attributes {stable_mosaic.version = 11 : i64} {
  func.func @_luong_attention_kernel(%arg0: i32, %arg1: memref<16x1x128xf32, #tpu.memory_space<vmem>>, %arg2: memref<16x1x256xf32, #tpu.memory_space<vmem>>, %arg3: memref<16x256x128xf32, #tpu.memory_space<vmem>>, %arg4: memref<16x256x128xf32, #tpu.memory_space<vmem>>, %arg5: memref<16x1x128xf32, #tpu.memory_space<vmem>>, %arg6: memref<16x1x256xf32, #tpu.memory_space<vmem>>) attributes {dimension_semantics = [#tpu.dimension_semantics<parallel>], iteration_bounds = array<i64: 2>, scalar_prefetch = 0 : i64, scratch_operands = 0 : i64, tpu.core_type = #tpu.core_type<tc>, window_params = [{transform_indices = @transform_0, window_bounds = array<i64: 16, 1, 128>}, {transform_indices = @transform_1, window_bounds = array<i64: 16, 1, 256>}, {transform_indices = @transform_2, window_bounds = array<i64: 16, 256, 128>}, {transform_indices = @transform_3, window_bounds = array<i64: 16, 256, 128>}, {transform_indices = @transform_4, window_bounds = array<i64: 16, 1, 128>}, {transform_indices = @transform_5, window_bounds = array<i64: 16, 1, 256>}]} {
    %c0 = arith.constant 0 : index
    %c0_0 = arith.constant 0 : index
    %c0_1 = arith.constant 0 : index
    %0 = vector.load %arg1[%c0, %c0_0, %c0_1] : memref<16x1x128xf32, #tpu.memory_space<vmem>>, vector<16x1x128xf32>
    %c0_2 = arith.constant 0 : index
    %c0_3 = arith.constant 0 : index
    %c0_4 = arith.constant 0 : index
    %1 = vector.load %arg2[%c0_2, %c0_3, %c0_4] : memref<16x1x256xf32, #tpu.memory_space<vmem>>, vector<16x1x256xf32>
    %c0_5 = arith.constant 0 : index
    %c0_6 = arith.constant 0 : index
    %c0_7 = arith.constant 0 : index
    %2 = vector.load %arg3[%c0_5, %c0_6, %c0_7] : memref<16x256x128xf32, #tpu.memory_space<vmem>>, vector<16x256x128xf32>
    %c0_8 = arith.constant 0 : index
    %c0_9 = arith.constant 0 : index
    %c0_10 = arith.constant 0 : index
    %3 = vector.load %arg4[%c0_8, %c0_9, %c0_10] : memref<16x256x128xf32, #tpu.memory_space<vmem>>, vector<16x256x128xf32>
    "tpu.trace_start"() <{level = 10 : i32, message = "bqk,bsk->bqs"}> : () -> ()
    %cst = arith.constant dense<0.000000e+00> : vector<16x1x256xf32>
    %4 = tpu.matmul %0, %2, %cst {dimension_numbers = #tpu.dot_dimension_numbers<[2], [2], [1], [1], [0, 0, 0, 1, 1, 1], [0], [0]>} : vector<16x1x128xf32>, vector<16x256x128xf32>, vector<16x1x256xf32> -> vector<16x1x256xf32>
    "tpu.trace_stop"() : () -> ()
    %5 = arith.addf %4, %1 : vector<16x1x256xf32>
    %cst_11 = arith.constant dense<0xFF800000> : vector<16x1xf32>
    %6 = vector.multi_reduction <maximumf>, %5, %cst_11 [2] : vector<16x1x256xf32> to vector<16x1xf32>
    %7 = vector.shape_cast %6 : vector<16x1xf32> to vector<16x1x1xf32>
    %8 = vector.broadcast %7 : vector<16x1x1xf32> to vector<16x1x256xf32>
    %9 = arith.subf %5, %8 : vector<16x1x256xf32>
    %10 = math.exp %9 : vector<16x1x256xf32>
    %cst_12 = arith.constant dense<0.000000e+00> : vector<16x1xf32>
    %11 = vector.multi_reduction <add>, %10, %cst_12 [2] : vector<16x1x256xf32> to vector<16x1xf32>
    %12 = vector.shape_cast %11 : vector<16x1xf32> to vector<16x1x1xf32>
    %13 = tpu.reciprocal %12 : vector<16x1x1xf32> -> vector<16x1x1xf32>
    %14 = vector.broadcast %13 : vector<16x1x1xf32> to vector<16x1x256xf32>
    %15 = arith.mulf %10, %14 : vector<16x1x256xf32>
    "tpu.trace_start"() <{level = 10 : i32, message = "bqs,bsv->bqv"}> : () -> ()
    %cst_13 = arith.constant dense<0.000000e+00> : vector<16x1x128xf32>
    %16 = tpu.matmul %15, %3, %cst_13 {dimension_numbers = #tpu.dot_dimension_numbers<[2], [1], [1], [2], [0, 0, 0, 1, 1, 2], [0], [0]>} : vector<16x1x256xf32>, vector<16x256x128xf32>, vector<16x1x128xf32> -> vector<16x1x128xf32>
    "tpu.trace_stop"() : () -> ()
    %c0_14 = arith.constant 0 : index
    %c0_15 = arith.constant 0 : index
    %c0_16 = arith.constant 0 : index
    %17 = vector.load %arg5[%c0_14, %c0_15, %c0_16] : memref<16x1x128xf32, #tpu.memory_space<vmem>>, vector<16x1x128xf32>
    tpu.vector_store %arg5[%c0_14, %c0_15, %c0_16], %16 {strides = array<i32>} : memref<16x1x128xf32, #tpu.memory_space<vmem>>, vector<16x1x128xf32>,
    %c0_17 = arith.constant 0 : index
    %c0_18 = arith.constant 0 : index
    %c0_19 = arith.constant 0 : index
    %18 = vector.load %arg6[%c0_17, %c0_18, %c0_19] : memref<16x1x256xf32, #tpu.memory_space<vmem>>, vector<16x1x256xf32>
    tpu.vector_store %arg6[%c0_17, %c0_18, %c0_19], %15 {strides = array<i32>} : memref<16x1x256xf32, #tpu.memory_space<vmem>>, vector<16x1x256xf32>,
    return
  }
  func.func @transform_0(%arg0: i32) -> (i32, i32, i32) {
    %c0_i32 = arith.constant 0 : i32
    %c0_i32_0 = arith.constant 0 : i32
    %c0_i32_1 = arith.constant 0 : i32
    return %arg0, %c0_i32, %c0_i32_0 : i32, i32, i32
  }
  func.func @transform_1(%arg0: i32) -> (i32, i32, i32) {
    %c0_i32 = arith.constant 0 : i32
    %c0_i32_0 = arith.constant 0 : i32
    %c0_i32_1 = arith.constant 0 : i32
    return %arg0, %c0_i32, %c0_i32_0 : i32, i32, i32
  }
  func.func @transform_2(%arg0: i32) -> (i32, i32, i32) {
    %c0_i32 = arith.constant 0 : i32
    %c0_i32_0 = arith.constant 0 : i32
    %c0_i32_1 = arith.constant 0 : i32
    return %arg0, %c0_i32, %c0_i32_0 : i32, i32, i32
  }
  func.func @transform_3(%arg0: i32) -> (i32, i32, i32) {
    %c0_i32 = arith.constant 0 : i32
    %c0_i32_0 = arith.constant 0 : i32
    %c0_i32_1 = arith.constant 0 : i32
    return %arg0, %c0_i32, %c0_i32_0 : i32, i32, i32
  }
  func.func @transform_4(%arg0: i32) -> (i32, i32, i32) {
    %c0_i32 = arith.constant 0 : i32
    %c0_i32_0 = arith.constant 0 : i32
    %c0_i32_1 = arith.constant 0 : i32
    return %arg0, %c0_i32, %c0_i32_0 : i32, i32, i32
  }
  func.func @transform_5(%arg0: i32) -> (i32, i32, i32) {
    %c0_i32 = arith.constant 0 : i32
    %c0_i32_0 = arith.constant 0 : i32
    %c0_i32_1 = arith.constant 0 : i32
    return %arg0, %c0_i32, %c0_i32_0 : i32, i32, i32
  }
}

</mosaic_0001>

<llo_original>
// kernel: tpu_custom_call.1
$region0: #{tpu_custom_call.1}
  #allocation0 [shape = 'u32[]', space=smem, size = 0x4, offset = 0x4, fixed_abs, tag = 'smem constant byte address 0x4 - core index']
  #allocation1 [shape = 'u32[72,128]{1,0:T(1,128)}', space=vmem, size = 0x9000, scoped, tag = 'internal scratch']
  %s0 = inlined_call_operand.hbm [shape: f32[24,1,128], index: 0, kind: input, shape index: {}]
  %s1 = inlined_call_operand.hbm [shape: f32[24,1,256], index: 1, kind: input, shape index: {}]
  %s2 = inlined_call_operand.hbm [shape: f32[24,256,128], index: 2, kind: input, shape index: {}]
  %s3 = inlined_call_operand.hbm [shape: f32[24,256,128], index: 3, kind: input, shape index: {}]
  %s4 = inlined_call_operand.hbm [shape: f32[24,1,128], index: 4, kind: output, shape index: {0}]
  %s5 = inlined_call_operand.hbm [shape: f32[24,1,256], index: 5, kind: output, shape index: {1}]
  %6 = xla_tuple %s4, %s5
  %s7 = sld [smem:[#allocation0]]
  $region73: #{tpu_custom_call.1} parent=0
    _
  %s9 = ssub.s32 1, %s7
  %s10 = scalar_select 0, %s9, %s7
  $region1: #{tpu_custom_call.1} parent=0
    #allocation2 [shape = 'u8[16384]{0}', space=vmem, size = 0x4000, scoped, tag = 'input window, operand 0']
    #allocation3 [shape = 's32[2]{0}', space=sflag, size = 0x8, scoped, tag = 'scoped memory for tpu_custom_call.1']
    #allocation4 [shape = 's32[2]{0}', space=sflag, size = 0x8, scoped, tag = 'scoped memory for tpu_custom_call.1']
    #allocation5 [shape = 'u8[32768]{0}', space=vmem, size = 0x8000, scoped, tag = 'input window, operand 1']
    #allocation6 [shape = 's32[2]{0}', space=sflag, size = 0x8, scoped, tag = 'scoped memory for tpu_custom_call.1']
    #allocation7 [shape = 'u8[4194304]{0}', space=vmem, size = 0x400000, scoped, tag = 'input window, operand 2']
    #allocation8 [shape = 'u8[4194304]{0}', space=vmem, size = 0x400000, scoped, tag = 'input window, operand 3']
    #allocation9 [shape = 's32[2]{0}', space=sflag, size = 0x8, scoped, tag = 'scoped memory for tpu_custom_call.1']
    #allocation10 [shape = 'u8[16384]{0}', space=vmem, size = 0x4000, scoped, tag = 'output window, operand 0']
    #allocation11 [shape = 'u8[32768]{0}', space=vmem, size = 0x8000, scoped, tag = 'output window, operand 1']
    #allocation12 [shape = 's32[2]{0}', space=sflag, size = 0x8, scoped, tag = 'scoped memory for tpu_custom_call.1']
    %11 = vsyncpa [#allocation3], 0
    %s12 = scalar_lea.sflag [#allocation3], 1
    %13 = vsyncpa %s12, 0
    %14 = vsyncpa [#allocation6], 0
    %s15 = scalar_lea.sflag [#allocation6], 1
    %16 = vsyncpa %s15, 0
    %17 = vsyncpa [#allocation9], 0
    %s18 = scalar_lea.sflag [#allocation9], 1
    %19 = vsyncpa %s18, 0
    %20 = vsyncpa [#allocation4], 0
    %s21 = scalar_lea.sflag [#allocation4], 1
    %22 = vsyncpa %s21, 0
    %23 = vsyncpa [#allocation12], 0
    %s24 = scalar_lea.sflag [#allocation12], 1
    %25 = vsyncpa %s24, 0
    loop: start=0, step=1, limit=4
    $region2: #{tpu_custom_call.1} parent=1 // loop_pre_header
      _
    $region3: #{tpu_custom_call.1} parent=1 // loop_header
      %s27 = sphi 0, %s31
      %p28 = scmp.ge.s32.totalorder %s27, 4
      %s37 = sphi 0, %s39
      %s40 = sphi 0, %s37
      %s41 = sphi 0, %s40
      %s57 = sphi 0, %s41
      %s63 = sphi 0, %s65
      %s66 = sphi 0, %s63
      %s67 = sphi 0, %s66
      %s83 = sphi 0, %s67
      %s89 = sphi 0, %s91
      %s92 = sphi 0, %s89
      %s93 = sphi 0, %s92
      %s109 = sphi 0, %s93
      %s115 = sphi 0, %s117
      %s118 = sphi 0, %s115
      %s119 = sphi 0, %s118
      %s135 = sphi 0, %s119
      %s141 = sphi 0, %s143
      %s144 = sphi 0, %s141
      %s145 = sphi 0, %s144
      %s161 = sphi 0, %s145
      %s167 = sphi 0, %s169
      %s170 = sphi 0, %s167
      %s171 = sphi 0, %s170
      %s187 = sphi 0, %s171
    $region4: #{tpu_custom_call.1} parent=1 // loop_header_branch
      %30 = sbr.rel (%p28) target = $region8
    $region5: #{tpu_custom_call.1} parent=1 // loop_body
      %s32 = ssub.s32 %s27, 1
      %s33 = ssub.s32 %s27, 2
      %s34 = sadd.s32 %s27, 1
      %s35 = ssub.s32 %s27, %s34
      %p36 = scmp.eq.s32.totalorder %s35, 0
      %s38 = sadd.s32 %s37, 1
      %s39 = scalar_select %p36, %s37, %s38
      %p42 = pneg %p36
      %p43 = scmp.eq.s32.totalorder %s27, 1
      %p44 = por %p42, %p43
      %p45 = scmp.ne.s32.totalorder %s37, %s40
      %p46 = scmp.eq.s32.totalorder %s27, 0
      %p47 = por %p45, %p46
      %p48 = scmp.ne.s32.totalorder %s37, %s40
      %p49 = scmp.eq.s32.totalorder %s32, 1
      %p50 = por %p48, %p49
      %p51 = scmp.ne.s32.totalorder %s40, %s41
      %p52 = scmp.eq.s32.totalorder %s32, 0
      %p53 = por %p51, %p52
      %p54 = scmp.ne.s32.totalorder %s40, %s41
      %p55 = scmp.eq.s32.totalorder %s33, 1
      %p56 = por %p54, %p55
      %p58 = scmp.ne.s32.totalorder %s41, %s57
      %p59 = scmp.eq.s32.totalorder %s33, 0
      %p60 = por %p58, %p59
      %s61 = ssub.s32 %s27, %s34
      %p62 = scmp.eq.s32.totalorder %s61, 0
      %s64 = sadd.s32 %s63, 1
      %s65 = scalar_select %p62, %s63, %s64
      %p68 = pneg %p62
      %p69 = scmp.eq.s32.totalorder %s27, 1
      %p70 = por %p68, %p69
      %p71 = scmp.ne.s32.totalorder %s63, %s66
      %p72 = scmp.eq.s32.totalorder %s27, 0
      %p73 = por %p71, %p72
      %p74 = scmp.ne.s32.totalorder %s63, %s66
      %p75 = scmp.eq.s32.totalorder %s32, 1
      %p76 = por %p74, %p75
      %p77 = scmp.ne.s32.totalorder %s66, %s67
      %p78 = scmp.eq.s32.totalorder %s32, 0
      %p79 = por %p77, %p78
      %p80 = scmp.ne.s32.totalorder %s66, %s67
      %p81 = scmp.eq.s32.totalorder %s33, 1
      %p82 = por %p80, %p81
      %p84 = scmp.ne.s32.totalorder %s67, %s83
      %p85 = scmp.eq.s32.totalorder %s33, 0
      %p86 = por %p84, %p85
      %s87 = ssub.s32 %s27, %s34
      %p88 = scmp.eq.s32.totalorder %s87, 0
      %s90 = sadd.s32 %s89, 1
      %s91 = scalar_select %p88, %s89, %s90
      %p94 = pneg %p88
      %p95 = scmp.eq.s32.totalorder %s27, 1
      %p96 = por %p94, %p95
      %p97 = scmp.ne.s32.totalorder %s89, %s92
      %p98 = scmp.eq.s32.totalorder %s27, 0
      %p99 = por %p97, %p98
      %p100 = scmp.ne.s32.totalorder %s89, %s92
      %p101 = scmp.eq.s32.totalorder %s32, 1
      %p102 = por %p100, %p101
      %p103 = scmp.ne.s32.totalorder %s92, %s93
      %p104 = scmp.eq.s32.totalorder %s32, 0
      %p105 = por %p103, %p104
      %p106 = scmp.ne.s32.totalorder %s92, %s93
      %p107 = scmp.eq.s32.totalorder %s33, 1
      %p108 = por %p106, %p107
      %p110 = scmp.ne.s32.totalorder %s93, %s109
      %p111 = scmp.eq.s32.totalorder %s33, 0
      %p112 = por %p110, %p111
      %s113 = ssub.s32 %s27, %s34
      %p114 = scmp.eq.s32.totalorder %s113, 0
      %s116 = sadd.s32 %s115, 1
      %s117 = scalar_select %p114, %s115, %s116
      %p120 = pneg %p114
      %p121 = scmp.eq.s32.totalorder %s27, 1
      %p122 = por %p120, %p121
      %p123 = scmp.ne.s32.totalorder %s115, %s118
      %p124 = scmp.eq.s32.totalorder %s27, 0
      %p125 = por %p123, %p124
      %p126 = scmp.ne.s32.totalorder %s115, %s118
      %p127 = scmp.eq.s32.totalorder %s32, 1
      %p128 = por %p126, %p127
      %p129 = scmp.ne.s32.totalorder %s118, %s119
      %p130 = scmp.eq.s32.totalorder %s32, 0
      %p131 = por %p129, %p130
      %p132 = scmp.ne.s32.totalorder %s118, %s119
      %p133 = scmp.eq.s32.totalorder %s33, 1
      %p134 = por %p132, %p133
      %p136 = scmp.ne.s32.totalorder %s119, %s135
      %p137 = scmp.eq.s32.totalorder %s33, 0
      %p138 = por %p136, %p137
      %s139 = ssub.s32 %s27, %s34
      %p140 = scmp.eq.s32.totalorder %s139, 0
      %s142 = sadd.s32 %s141, 1
      %s143 = scalar_select %p140, %s141, %s142
      %p146 = pneg %p140
      %p147 = scmp.eq.s32.totalorder %s27, 1
      %p148 = por %p146, %p147
      %p149 = scmp.ne.s32.totalorder %s141, %s144
      %p150 = scmp.eq.s32.totalorder %s27, 0
      %p151 = por %p149, %p150
      %p152 = scmp.ne.s32.totalorder %s141, %s144
      %p153 = scmp.eq.s32.totalorder %s32, 1
      %p154 = por %p152, %p153
      %p155 = scmp.ne.s32.totalorder %s144, %s145
      %p156 = scmp.eq.s32.totalorder %s32, 0
      %p157 = por %p155, %p156
      %p158 = scmp.ne.s32.totalorder %s144, %s145
      %p159 = scmp.eq.s32.totalorder %s33, 1
      %p160 = por %p158, %p159
      %p162 = scmp.ne.s32.totalorder %s145, %s161
      %p163 = scmp.eq.s32.totalorder %s33, 0
      %p164 = por %p162, %p163
      %s165 = ssub.s32 %s27, %s34
      %p166 = scmp.eq.s32.totalorder %s165, 0
      %s168 = sadd.s32 %s167, 1
      %s169 = scalar_select %p166, %s167, %s168
      %p172 = pneg %p166
      %p173 = scmp.eq.s32.totalorder %s27, 1
      %p174 = por %p172, %p173
      %p175 = scmp.ne.s32.totalorder %s167, %s170
      %p176 = scmp.eq.s32.totalorder %s27, 0
      %p177 = por %p175, %p176
      %p178 = scmp.ne.s32.totalorder %s167, %s170
      %p179 = scmp.eq.s32.totalorder %s32, 1
      %p180 = por %p178, %p179
      %p181 = scmp.ne.s32.totalorder %s170, %s171
      %p182 = scmp.eq.s32.totalorder %s32, 0
      %p183 = por %p181, %p182
      %p184 = scmp.ne.s32.totalorder %s170, %s171
      %p185 = scmp.eq.s32.totalorder %s33, 1
      %p186 = por %p184, %p185
      %p188 = scmp.ne.s32.totalorder %s171, %s187
      %p189 = scmp.eq.s32.totalorder %s33, 0
      %p190 = por %p188, %p189
      %p191 = scmp.le.s32.totalorder 1, %s27
      %p192 = scmp.lt.s32.totalorder %s27, 3
      %p193 = pnand %p191, %p192
      %p194 = pneg %p193
      // Predicated region
      $region9: #{tpu_custom_call.1} parent=5 // pred_check
        _
      $region10: #{tpu_custom_call.1} parent=5 // pred_check_branch
        %196 = sbr.rel (%p193) target = $region12
      $region11: #{tpu_custom_call.1} parent=5 // pred_region
        %s197 = ssub.s32 %s27, 1
      $region12: #{tpu_custom_call.1} parent=5 // pred_fallthru
        _
      %p198 = scmp.lt.s32.totalorder %s27, 2
      // Predicated region
      $region13: #{tpu_custom_call.1} parent=5 // pred_check
        %p199 = pneg %p198
      $region14: #{tpu_custom_call.1} parent=5 // pred_check_branch
        %201 = sbr.rel (%p199) target = $region16
      $region15: #{tpu_custom_call.1} parent=5 // pred_region
        // Predicated region
        $region17: #{tpu_custom_call.1} parent=15 // pred_check
          %p202 = pneg %p47
        $region18: #{tpu_custom_call.1} parent=15 // pred_check_branch
          %204 = sbr.rel (%p202) target = $region20
        $region19: #{tpu_custom_call.1} parent=15 // pred_region
          %s205 = sand.u32 %s37, 1
          %s206 = scalar_lea.sflag [#allocation3], %s205
          %s207 = sand.u32 %s37, 1
          %s208 = smul.addr %s207, 16
          %s209 = scalar_lea.vmem [#allocation2], %s208
          %s210 = smul.u32 16, %s27
          %s211 = ssub.s32 24, %s210
          %p212 = scmp.lt.s32.totalorder %s211, 16
          %s213 = scalar_select %p212, %s211, 16
          %s214 = ssub.s32 16, %s213
          %s215 = sshll.u32 %s214, 4
          %216 = vsyncadd %s206, %s215
          %p217 = scmp.ne.s32.totalorder 0, %s213
          %s218 = scalar_lea.hbm %s0, %s210
          %s219 = sshll.u32 %s218, 4
          %s220 = int_to_ptr.hbm [resolvable:$true] %s219
          %s221 = sshll.u32 %s209, 4
          %s222 = int_to_ptr.vmem [resolvable:$true] %s221
          %s223 = sshll.u32 %s213, 4
          %227 = dma.hbm_to_vmem [thread:$0]  (%p217), %s220, %s223, %s222, %s206, 16, 16, 1
        $region20: #{tpu_custom_call.1} parent=15 // pred_fallthru
          _
        // Predicated region
        $region21: #{tpu_custom_call.1} parent=15 // pred_check
          %p228 = pneg %p73
        $region22: #{tpu_custom_call.1} parent=15 // pred_check_branch
          %230 = sbr.rel (%p228) target = $region24
        $region23: #{tpu_custom_call.1} parent=15 // pred_region
          %s231 = sand.u32 %s27, 1
          %s232 = scalar_lea.sflag [#allocation6], %s231
          %s233 = sand.u32 %s63, 1
          %s234 = smul.addr %s233, 32
          %s235 = scalar_lea.vmem [#allocation5], %s234
          %s236 = smul.u32 16, %s27
          %s237 = ssub.s32 24, %s236
          %p238 = scmp.lt.s32.totalorder %s237, 16
          %s239 = scalar_select %p238, %s237, 16
          %s240 = smul.u32 %s239, 2
          %s241 = ssub.s32 32, %s240
          %s242 = sshll.u32 %s241, 4
          %243 = vsyncadd %s232, %s242
          %p244 = scmp.ne.s32.totalorder 0, %s240
          %s245 = smul.addr %s236, 2
          %s246 = scalar_lea.hbm %s1, %s245
          %s247 = smul.u32 2, %s239
          %s248 = sshll.u32 %s246, 4
          %s249 = int_to_ptr.hbm [resolvable:$true] %s248
          %s250 = sshll.u32 %s235, 4
          %s251 = int_to_ptr.vmem [resolvable:$true] %s250
          %s252 = sshll.u32 %s247, 4
          %256 = dma.hbm_to_vmem [thread:$0]  (%p244), %s249, %s252, %s251, %s232, 32, 32, 2
        $region24: #{tpu_custom_call.1} parent=15 // pred_fallthru
          _
        // Predicated region
        $region25: #{tpu_custom_call.1} parent=15 // pred_check
          %p257 = pneg %p99
        $region26: #{tpu_custom_call.1} parent=15 // pred_check_branch
          %259 = sbr.rel (%p257) target = $region28
        $region27: #{tpu_custom_call.1} parent=15 // pred_region
          %s260 = sand.u32 %s27, 1
          %s261 = scalar_lea.sflag [#allocation6], %s260
          %s262 = sand.u32 %s89, 1
          %s263 = smul.addr %s262, 4096
          %s264 = scalar_lea.vmem [#allocation7], %s263
          %s265 = smul.u32 16, %s27
          %s266 = ssub.s32 24, %s265
          %p267 = scmp.lt.s32.totalorder %s266, 16
          %s268 = scalar_select %p267, %s266, 16
          %s269 = smul.u32 8, %s268
          %s270 = smul.u32 %s269, 32
          %s271 = ssub.s32 4096, %s270
          %s272 = sshll.u32 %s271, 4
          %273 = vsyncadd %s261, %s272
          %p274 = scmp.ne.s32.totalorder 0, %s270
          %s275 = smul.addr %s265, 32
          %s276 = smul.addr %s275, 8
          %s277 = scalar_lea.hbm %s2, %s276
          %s278 = smul.u32 %s268, 32
          %s279 = smul.u32 8, %s278
          %s280 = sshll.u32 %s277, 4
          %s281 = int_to_ptr.hbm [resolvable:$true] %s280
          %s282 = sshll.u32 %s264, 4
          %s283 = int_to_ptr.vmem [resolvable:$true] %s282
          %s284 = sshll.u32 %s279, 4
          %288 = dma.hbm_to_vmem [thread:$0]  (%p274), %s281, %s284, %s283, %s261, 128, 128, 8
        $region28: #{tpu_custom_call.1} parent=15 // pred_fallthru
          _
        // Predicated region
        $region29: #{tpu_custom_call.1} parent=15 // pred_check
          %p289 = pneg %p125
        $region30: #{tpu_custom_call.1} parent=15 // pred_check_branch
          %291 = sbr.rel (%p289) target = $region32
        $region31: #{tpu_custom_call.1} parent=15 // pred_region
          %s292 = sand.u32 %s115, 1
          %s293 = scalar_lea.sflag [#allocation9], %s292
          %s294 = sand.u32 %s115, 1
          %s295 = smul.addr %s294, 4096
          %s296 = scalar_lea.vmem [#allocation8], %s295
          %s297 = smul.u32 16, %s27
          %s298 = ssub.s32 24, %s297
          %p299 = scmp.lt.s32.totalorder %s298, 16
          %s300 = scalar_select %p299, %s298, 16
          %s301 = smul.u32 8, %s300
          %s302 = smul.u32 %s301, 32
          %s303 = ssub.s32 4096, %s302
          %s304 = sshll.u32 %s303, 4
          %305 = vsyncadd %s293, %s304
          %p306 = scmp.ne.s32.totalorder 0, %s302
          %s307 = smul.addr %s297, 32
          %s308 = smul.addr %s307, 8
          %s309 = scalar_lea.hbm %s3, %s308
          %s310 = smul.u32 %s300, 32
          %s311 = smul.u32 8, %s310
          %s312 = sshll.u32 %s309, 4
          %s313 = int_to_ptr.hbm [resolvable:$true] %s312
          %s314 = sshll.u32 %s296, 4
          %s315 = int_to_ptr.vmem [resolvable:$true] %s314
          %s316 = sshll.u32 %s311, 4
          %320 = dma.hbm_to_vmem [thread:$0]  (%p306), %s313, %s316, %s315, %s293, 128, 128, 8
        $region32: #{tpu_custom_call.1} parent=15 // pred_fallthru
          _
      $region16: #{tpu_custom_call.1} parent=5 // pred_fallthru
        _
      %p321 = scmp.le.s32.totalorder 1, %s27
      %p322 = scmp.lt.s32.totalorder %s27, 3
      %p323 = pnand %p321, %p322
      %p324 = pneg %p323
      // Predicated region
      $region33: #{tpu_custom_call.1} parent=5 // pred_check
        _
      $region34: #{tpu_custom_call.1} parent=5 // pred_check_branch
        %326 = sbr.rel (%p323) target = $region36
      $region35: #{tpu_custom_call.1} parent=5 // pred_region
        %s327 = ssub.s32 %s27, 1
        %s328 = sand.u32 %s40, 1
        %s329 = scalar_lea.sflag [#allocation3], %s328
        %s330 = sand.u32 %s40, 1
        %s331 = smul.addr %s330, 16
        %s332 = scalar_lea.vmem [#allocation2], %s331
        // Predicated region
        $region37: #{tpu_custom_call.1} parent=35 // pred_check
          %p333 = pneg %p53
        $region38: #{tpu_custom_call.1} parent=35 // pred_check_branch
          %335 = sbr.rel (%p333) target = $region40
        $region39: #{tpu_custom_call.1} parent=35 // pred_region
          %337 = dma.done %s329, 256
        $region40: #{tpu_custom_call.1} parent=35 // pred_fallthru
          _
        %s338 = sand.u32 %s32, 1
        %s339 = scalar_lea.sflag [#allocation6], %s338
        %s340 = sand.u32 %s66, 1
        %s341 = smul.addr %s340, 32
        %s342 = scalar_lea.vmem [#allocation5], %s341
        // Predicated region
        $region41: #{tpu_custom_call.1} parent=35 // pred_check
          %p343 = pneg %p79
        $region42: #{tpu_custom_call.1} parent=35 // pred_check_branch
          %345 = sbr.rel (%p343) target = $region44
        $region43: #{tpu_custom_call.1} parent=35 // pred_region
          %347 = dma.done %s339, 512
        $region44: #{tpu_custom_call.1} parent=35 // pred_fallthru
          _
        %s348 = sand.u32 %s32, 1
        %s349 = scalar_lea.sflag [#allocation6], %s348
        %s350 = sand.u32 %s92, 1
        %s351 = smul.addr %s350, 4096
        %s352 = scalar_lea.vmem [#allocation7], %s351
        // Predicated region
        $region45: #{tpu_custom_call.1} parent=35 // pred_check
          %p353 = pneg %p105
        $region46: #{tpu_custom_call.1} parent=35 // pred_check_branch
          %355 = sbr.rel (%p353) target = $region48
        $region47: #{tpu_custom_call.1} parent=35 // pred_region
          %357 = dma.done %s349, 65536
        $region48: #{tpu_custom_call.1} parent=35 // pred_fallthru
          _
        %s358 = sand.u32 %s118, 1
        %s359 = scalar_lea.sflag [#allocation9], %s358
        %s360 = sand.u32 %s118, 1
        %s361 = smul.addr %s360, 4096
        %s362 = scalar_lea.vmem [#allocation8], %s361
        // Predicated region
        $region49: #{tpu_custom_call.1} parent=35 // pred_check
          %p363 = pneg %p131
        $region50: #{tpu_custom_call.1} parent=35 // pred_check_branch
          %365 = sbr.rel (%p363) target = $region52
        $region51: #{tpu_custom_call.1} parent=35 // pred_region
          %367 = dma.done %s359, 65536
        $region52: #{tpu_custom_call.1} parent=35 // pred_fallthru
          _
        %s368 = sand.u32 %s40, 1
        %s369 = scalar_lea.sflag [#allocation3], %s368
        %s370 = sand.u32 %s40, 1
        %s371 = smul.addr %s370, 16
        %s372 = scalar_lea.vmem [#allocation2], %s371
        %p373 = pneg %p53
        %p374 = pneg %p50
        %s375 = sand.u32 %s32, 1
        %s376 = scalar_lea.sflag [#allocation6], %s375
        %s377 = sand.u32 %s66, 1
        %s378 = smul.addr %s377, 32
        %s379 = scalar_lea.vmem [#allocation5], %s378
        %p380 = pneg %p79
        %p381 = pneg %p76
        %s382 = sand.u32 %s32, 1
        %s383 = scalar_lea.sflag [#allocation6], %s382
        %s384 = sand.u32 %s92, 1
        %s385 = smul.addr %s384, 4096
        %s386 = scalar_lea.vmem [#allocation7], %s385
        %p387 = pneg %p105
        %p388 = pneg %p102
        %s389 = sand.u32 %s118, 1
        %s390 = scalar_lea.sflag [#allocation9], %s389
        %s391 = sand.u32 %s118, 1
        %s392 = smul.addr %s391, 4096
        %s393 = scalar_lea.vmem [#allocation8], %s392
        %p394 = pneg %p131
        %p395 = pneg %p128
        %p396 = pneg %p157
        %p397 = pneg %p154
        %s398 = sand.u32 %s144, 1
        %s399 = scalar_lea.sflag [#allocation4], %s398
        %s400 = sand.u32 %s144, 1
        %s401 = smul.addr %s400, 16
        %s402 = scalar_lea.vmem [#allocation10], %s401
        %p403 = pneg %p183
        %p404 = pneg %p180
        %s405 = sand.u32 %s170, 1
        %s406 = scalar_lea.sflag [#allocation12], %s405
        %s407 = sand.u32 %s170, 1
        %s408 = smul.addr %s407, 32
        %s409 = scalar_lea.vmem [#allocation11], %s408
        %s410 = smul.u32 16, %s32
        %s411 = ssub.s32 24, %s410
        %p412 = scmp.lt.s32.totalorder %s411, 16
        %s413 = scalar_select %p412, %s411, 16
        %s414 = smul.u32 16, %s32
        %s415 = ssub.s32 24, %s414
        %p416 = scmp.lt.s32.totalorder %s415, 16
        %s417 = scalar_select %p416, %s415, 16
        %s418 = smul.u32 %s417, 2
        %s419 = smul.u32 16, %s32
        %s420 = ssub.s32 24, %s419
        %p421 = scmp.lt.s32.totalorder %s420, 16
        %s422 = scalar_select %p421, %s420, 16
        %s423 = smul.u32 8, %s422
        %s424 = smul.u32 %s423, 32
        %s425 = smul.u32 16, %s32
        %s426 = ssub.s32 24, %s425
        %p427 = scmp.lt.s32.totalorder %s426, 16
        %s428 = scalar_select %p427, %s426, 16
        %s429 = smul.u32 8, %s428
        %s430 = smul.u32 %s429, 32
        %s431 = smul.u32 16, %s32
        %s432 = ssub.s32 24, %s431
        %p433 = scmp.lt.s32.totalorder %s432, 16
        %s434 = scalar_select %p433, %s432, 16
        %s435 = smul.u32 16, %s32
        %s436 = ssub.s32 24, %s435
        %p437 = scmp.lt.s32.totalorder %s436, 16
        %s438 = scalar_select %p437, %s436, 16
        %s439 = smul.u32 %s438, 2
        %v440 = vld [vmem:[%s332] sm:$0x1]
        %v441 = vld [vmem:[%s332 + $0x1] sm:$0x1]
        %v442 = vld [vmem:[%s332 + $0x2] sm:$0x1]
        %v443 = vld [vmem:[%s332 + $0x3] sm:$0x1]
        %v444 = vld [vmem:[%s332 + $0x4] sm:$0x1]
        %v445 = vld [vmem:[%s332 + $0x5] sm:$0x1]
        %v446 = vld [vmem:[%s332 + $0x6] sm:$0x1]
        %v447 = vld [vmem:[%s332 + $0x7] sm:$0x1]
        %v448 = vld [vmem:[%s332 + $0x8] sm:$0x1]
        %v449 = vld [vmem:[%s332 + $0x9] sm:$0x1]
        %v450 = vld [vmem:[%s332 + $0xa] sm:$0x1]
        %v451 = vld [vmem:[%s332 + $0xb] sm:$0x1]
        %v452 = vld [vmem:[%s332 + $0xc] sm:$0x1]
        %v453 = vld [vmem:[%s332 + $0xd] sm:$0x1]
        %v454 = vld [vmem:[%s332 + $0xe] sm:$0x1]
        %v455 = vld [vmem:[%s332 + $0xf] sm:$0x1]
        %v456 = vld [vmem:[%s342] sm:$0x3]
        %v457 = vld [vmem:[%s342 + $0x2] sm:$0x3]
        %v458 = vld [vmem:[%s342 + $0x4] sm:$0x3]
        %v459 = vld [vmem:[%s342 + $0x6] sm:$0x3]
        %v460 = vld [vmem:[%s342 + $0x8] sm:$0x3]
        %v461 = vld [vmem:[%s342 + $0xa] sm:$0x3]
        %v462 = vld [vmem:[%s342 + $0xc] sm:$0x3]
        %v463 = vld [vmem:[%s342 + $0xe] sm:$0x3]
        %v464 = vld [vmem:[%s342 + $0x10] sm:$0x3]
        %v465 = vld [vmem:[%s342 + $0x12] sm:$0x3]
        %v466 = vld [vmem:[%s342 + $0x14] sm:$0x3]
        %v467 = vld [vmem:[%s342 + $0x16] sm:$0x3]
        %v468 = vld [vmem:[%s342 + $0x18] sm:$0x3]
        %v469 = vld [vmem:[%s342 + $0x1a] sm:$0x3]
        %v470 = vld [vmem:[%s342 + $0x1c] sm:$0x3]
        %v471 = vld [vmem:[%s342 + $0x1e] sm:$0x3]
        %v472 = vld [vmem:[%s352] sm:$0xff]
        %v473 = vld [vmem:[%s352 + $0x8] sm:$0xff]
        %v474 = vld [vmem:[%s352 + $0x10] sm:$0xff]
        %v475 = vld [vmem:[%s352 + $0x18] sm:$0xff]
        %v476 = vld [vmem:[%s352 + $0x20] sm:$0xff]
        %v477 = vld [vmem:[%s352 + $0x28] sm:$0xff]
        %v478 = vld [vmem:[%s352 + $0x30] sm:$0xff]
        %v479 = vld [vmem:[%s352 + $0x38] sm:$0xff]
        %v480 = vld [vmem:[%s352 + $0x40] sm:$0xff]
        %v481 = vld [vmem:[%s352 + $0x48] sm:$0xff]
        %v482 = vld [vmem:[%s352 + $0x50] sm:$0xff]
        %v483 = vld [vmem:[%s352 + $0x58] sm:$0xff]
        %v484 = vld [vmem:[%s352 + $0x60] sm:$0xff]
        %v485 = vld [vmem:[%s352 + $0x68] sm:$0xff]
        %v486 = vld [vmem:[%s352 + $0x70] sm:$0xff]
        %v487 = vld [vmem:[%s352 + $0x78] sm:$0xff]
        %v488 = vld [vmem:[%s352 + $0x80] sm:$0xff]
        %v489 = vld [vmem:[%s352 + $0x88] sm:$0xff]
        %v490 = vld [vmem:[%s352 + $0x90] sm:$0xff]
        %v491 = vld [vmem:[%s352 + $0x98] sm:$0xff]
        %v492 = vld [vmem:[%s352 + $0xa0] sm:$0xff]
        %v493 = vld [vmem:[%s352 + $0xa8] sm:$0xff]
        %v494 = vld [vmem:[%s352 + $0xb0] sm:$0xff]
        %v495 = vld [vmem:[%s352 + $0xb8] sm:$0xff]
        %v496 = vld [vmem:[%s352 + $0xc0] sm:$0xff]
        %v497 = vld [vmem:[%s352 + $0xc8] sm:$0xff]
        %v498 = vld [vmem:[%s352 + $0xd0] sm:$0xff]
        %v499 = vld [vmem:[%s352 + $0xd8] sm:$0xff]
        %v500 = vld [vmem:[%s352 + $0xe0] sm:$0xff]
        %v501 = vld [vmem:[%s352 + $0xe8] sm:$0xff]
        %v502 = vld [vmem:[%s352 + $0xf0] sm:$0xff]
        %v503 = vld [vmem:[%s352 + $0xf8] sm:$0xff]
        %v504 = vld [vmem:[%s352 + $0x100] sm:$0xff]
        %v505 = vld [vmem:[%s352 + $0x108] sm:$0xff]
        %v506 = vld [vmem:[%s352 + $0x110] sm:$0xff]
        %v507 = vld [vmem:[%s352 + $0x118] sm:$0xff]
        %v508 = vld [vmem:[%s352 + $0x120] sm:$0xff]
        %v509 = vld [vmem:[%s352 + $0x128] sm:$0xff]
        %v510 = vld [vmem:[%s352 + $0x130] sm:$0xff]
        %v511 = vld [vmem:[%s352 + $0x138] sm:$0xff]
        %v512 = vld [vmem:[%s352 + $0x140] sm:$0xff]
        %v513 = vld [vmem:[%s352 + $0x148] sm:$0xff]
        %v514 = vld [vmem:[%s352 + $0x150] sm:$0xff]
        %v515 = vld [vmem:[%s352 + $0x158] sm:$0xff]
        %v516 = vld [vmem:[%s352 + $0x160] sm:$0xff]
        %v517 = vld [vmem:[%s352 + $0x168] sm:$0xff]
        %v518 = vld [vmem:[%s352 + $0x170] sm:$0xff]
        %v519 = vld [vmem:[%s352 + $0x178] sm:$0xff]
        %v520 = vld [vmem:[%s352 + $0x180] sm:$0xff]
        %v521 = vld [vmem:[%s352 + $0x188] sm:$0xff]
        %v522 = vld [vmem:[%s352 + $0x190] sm:$0xff]
        %v523 = vld [vmem:[%s352 + $0x198] sm:$0xff]
        %v524 = vld [vmem:[%s352 + $0x1a0] sm:$0xff]
        %v525 = vld [vmem:[%s352 + $0x1a8] sm:$0xff]
        %v526 = vld [vmem:[%s352 + $0x1b0] sm:$0xff]
        %v527 = vld [vmem:[%s352 + $0x1b8] sm:$0xff]
        %v528 = vld [vmem:[%s352 + $0x1c0] sm:$0xff]
        %v529 = vld [vmem:[%s352 + $0x1c8] sm:$0xff]
        %v530 = vld [vmem:[%s352 + $0x1d0] sm:$0xff]
        %v531 = vld [vmem:[%s352 + $0x1d8] sm:$0xff]
        %v532 = vld [vmem:[%s352 + $0x1e0] sm:$0xff]
        %v533 = vld [vmem:[%s352 + $0x1e8] sm:$0xff]
        %v534 = vld [vmem:[%s352 + $0x1f0] sm:$0xff]
        %v535 = vld [vmem:[%s352 + $0x1f8] sm:$0xff]
        %v536 = vld [vmem:[%s352 + $0x200] sm:$0xff]
        %v537 = vld [vmem:[%s352 + $0x208] sm:$0xff]
        %v538 = vld [vmem:[%s352 + $0x210] sm:$0xff]
        %v539 = vld [vmem:[%s352 + $0x218] sm:$0xff]
        %v540 = vld [vmem:[%s352 + $0x220] sm:$0xff]
        %v541 = vld [vmem:[%s352 + $0x228] sm:$0xff]
        %v542 = vld [vmem:[%s352 + $0x230] sm:$0xff]
        %v543 = vld [vmem:[%s352 + $0x238] sm:$0xff]
        %v544 = vld [vmem:[%s352 + $0x240] sm:$0xff]
        %v545 = vld [vmem:[%s352 + $0x248] sm:$0xff]
        %v546 = vld [vmem:[%s352 + $0x250] sm:$0xff]
        %v547 = vld [vmem:[%s352 + $0x258] sm:$0xff]
        %v548 = vld [vmem:[%s352 + $0x260] sm:$0xff]
        %v549 = vld [vmem:[%s352 + $0x268] sm:$0xff]
        %v550 = vld [vmem:[%s352 + $0x270] sm:$0xff]
        %v551 = vld [vmem:[%s352 + $0x278] sm:$0xff]
        %v552 = vld [vmem:[%s352 + $0x280] sm:$0xff]
        %v553 = vld [vmem:[%s352 + $0x288] sm:$0xff]
        %v554 = vld [vmem:[%s352 + $0x290] sm:$0xff]
        %v555 = vld [vmem:[%s352 + $0x298] sm:$0xff]
        %v556 = vld [vmem:[%s352 + $0x2a0] sm:$0xff]
        %v557 = vld [vmem:[%s352 + $0x2a8] sm:$0xff]
        %v558 = vld [vmem:[%s352 + $0x2b0] sm:$0xff]
        %v559 = vld [vmem:[%s352 + $0x2b8] sm:$0xff]
        %v560 = vld [vmem:[%s352 + $0x2c0] sm:$0xff]
        %v561 = vld [vmem:[%s352 + $0x2c8] sm:$0xff]
        %v562 = vld [vmem:[%s352 + $0x2d0] sm:$0xff]
        %v563 = vld [vmem:[%s352 + $0x2d8] sm:$0xff]
        %v564 = vld [vmem:[%s352 + $0x2e0] sm:$0xff]
        %v565 = vld [vmem:[%s352 + $0x2e8] sm:$0xff]
        %v566 = vld [vmem:[%s352 + $0x2f0] sm:$0xff]
        %v567 = vld [vmem:[%s352 + $0x2f8] sm:$0xff]
        %v568 = vld [vmem:[%s352 + $0x300] sm:$0xff]
        %v569 = vld [vmem:[%s352 + $0x308] sm:$0xff]
        %v570 = vld [vmem:[%s352 + $0x310] sm:$0xff]
        %v571 = vld [vmem:[%s352 + $0x318] sm:$0xff]
        %v572 = vld [vmem:[%s352 + $0x320] sm:$0xff]
        %v573 = vld [vmem:[%s352 + $0x328] sm:$0xff]
        %v574 = vld [vmem:[%s352 + $0x330] sm:$0xff]
        %v575 = vld [vmem:[%s352 + $0x338] sm:$0xff]
        %v576 = vld [vmem:[%s352 + $0x340] sm:$0xff]
        %v577 = vld [vmem:[%s352 + $0x348] sm:$0xff]
        %v578 = vld [vmem:[%s352 + $0x350] sm:$0xff]
        %v579 = vld [vmem:[%s352 + $0x358] sm:$0xff]
        %v580 = vld [vmem:[%s352 + $0x360] sm:$0xff]
        %v581 = vld [vmem:[%s352 + $0x368] sm:$0xff]
        %v582 = vld [vmem:[%s352 + $0x370] sm:$0xff]
        %v583 = vld [vmem:[%s352 + $0x378] sm:$0xff]
        %v584 = vld [vmem:[%s352 + $0x380] sm:$0xff]
        %v585 = vld [vmem:[%s352 + $0x388] sm:$0xff]
        %v586 = vld [vmem:[%s352 + $0x390] sm:$0xff]
        %v587 = vld [vmem:[%s352 + $0x398] sm:$0xff]
        %v588 = vld [vmem:[%s352 + $0x3a0] sm:$0xff]
        %v589 = vld [vmem:[%s352 + $0x3a8] sm:$0xff]
        %v590 = vld [vmem:[%s352 + $0x3b0] sm:$0xff]
        %v591 = vld [vmem:[%s352 + $0x3b8] sm:$0xff]
        %v592 = vld [vmem:[%s352 + $0x3c0] sm:$0xff]
        %v593 = vld [vmem:[%s352 + $0x3c8] sm:$0xff]
        %v594 = vld [vmem:[%s352 + $0x3d0] sm:$0xff]
        %v595 = vld [vmem:[%s352 + $0x3d8] sm:$0xff]
        %v596 = vld [vmem:[%s352 + $0x3e0] sm:$0xff]
        %v597 = vld [vmem:[%s352 + $0x3e8] sm:$0xff]
        %v598 = vld [vmem:[%s352 + $0x3f0] sm:$0xff]
        %v599 = vld [vmem:[%s352 + $0x3f8] sm:$0xff]
        %v600 = vld [vmem:[%s352 + $0x400] sm:$0xff]
        %v601 = vld [vmem:[%s352 + $0x408] sm:$0xff]
        %v602 = vld [vmem:[%s352 + $0x410] sm:$0xff]
        %v603 = vld [vmem:[%s352 + $0x418] sm:$0xff]
        %v604 = vld [vmem:[%s352 + $0x420] sm:$0xff]
        %v605 = vld [vmem:[%s352 + $0x428] sm:$0xff]
        %v606 = vld [vmem:[%s352 + $0x430] sm:$0xff]
        %v607 = vld [vmem:[%s352 + $0x438] sm:$0xff]
        %v608 = vld [vmem:[%s352 + $0x440] sm:$0xff]
        %v609 = vld [vmem:[%s352 + $0x448] sm:$0xff]
        %v610 = vld [vmem:[%s352 + $0x450] sm:$0xff]
        %v611 = vld [vmem:[%s352 + $0x458] sm:$0xff]
        %v612 = vld [vmem:[%s352 + $0x460] sm:$0xff]
        %v613 = vld [vmem:[%s352 + $0x468] sm:$0xff]
        %v614 = vld [vmem:[%s352 + $0x470] sm:$0xff]
        %v615 = vld [vmem:[%s352 + $0x478] sm:$0xff]
        %v616 = vld [vmem:[%s352 + $0x480] sm:$0xff]
        %v617 = vld [vmem:[%s352 + $0x488] sm:$0xff]
        %v618 = vld [vmem:[%s352 + $0x490] sm:$0xff]
        %v619 = vld [vmem:[%s352 + $0x498] sm:$0xff]
        %v620 = vld [vmem:[%s352 + $0x4a0] sm:$0xff]
        %v621 = vld [vmem:[%s352 + $0x4a8] sm:$0xff]
        %v622 = vld [vmem:[%s352 + $0x4b0] sm:$0xff]
        %v623 = vld [vmem:[%s352 + $0x4b8] sm:$0xff]
        %v624 = vld [vmem:[%s352 + $0x4c0] sm:$0xff]
        %v625 = vld [vmem:[%s352 + $0x4c8] sm:$0xff]
        %v626 = vld [vmem:[%s352 + $0x4d0] sm:$0xff]
        %v627 = vld [vmem:[%s352 + $0x4d8] sm:$0xff]
        %v628 = vld [vmem:[%s352 + $0x4e0] sm:$0xff]
        %v629 = vld [vmem:[%s352 + $0x4e8] sm:$0xff]
        %v630 = vld [vmem:[%s352 + $0x4f0] sm:$0xff]
        %v631 = vld [vmem:[%s352 + $0x4f8] sm:$0xff]
        %v632 = vld [vmem:[%s352 + $0x500] sm:$0xff]
        %v633 = vld [vmem:[%s352 + $0x508] sm:$0xff]
        %v634 = vld [vmem:[%s352 + $0x510] sm:$0xff]
        %v635 = vld [vmem:[%s352 + $0x518] sm:$0xff]
        %v636 = vld [vmem:[%s352 + $0x520] sm:$0xff]
        %v637 = vld [vmem:[%s352 + $0x528] sm:$0xff]
        %v638 = vld [vmem:[%s352 + $0x530] sm:$0xff]
        %v639 = vld [vmem:[%s352 + $0x538] sm:$0xff]
        %v640 = vld [vmem:[%s352 + $0x540] sm:$0xff]
        %v641 = vld [vmem:[%s352 + $0x548] sm:$0xff]
        %v642 = vld [vmem:[%s352 + $0x550] sm:$0xff]
        %v643 = vld [vmem:[%s352 + $0x558] sm:$0xff]
        %v644 = vld [vmem:[%s352 + $0x560] sm:$0xff]
        %v645 = vld [vmem:[%s352 + $0x568] sm:$0xff]
        %v646 = vld [vmem:[%s352 + $0x570] sm:$0xff]
        %v647 = vld [vmem:[%s352 + $0x578] sm:$0xff]
        %v648 = vld [vmem:[%s352 + $0x580] sm:$0xff]
        %v649 = vld [vmem:[%s352 + $0x588] sm:$0xff]
        %v650 = vld [vmem:[%s352 + $0x590] sm:$0xff]
        %v651 = vld [vmem:[%s352 + $0x598] sm:$0xff]
        %v652 = vld [vmem:[%s352 + $0x5a0] sm:$0xff]
        %v653 = vld [vmem:[%s352 + $0x5a8] sm:$0xff]
        %v654 = vld [vmem:[%s352 + $0x5b0] sm:$0xff]
        %v655 = vld [vmem:[%s352 + $0x5b8] sm:$0xff]
        %v656 = vld [vmem:[%s352 + $0x5c0] sm:$0xff]
        %v657 = vld [vmem:[%s352 + $0x5c8] sm:$0xff]
        %v658 = vld [vmem:[%s352 + $0x5d0] sm:$0xff]
        %v659 = vld [vmem:[%s352 + $0x5d8] sm:$0xff]
        %v660 = vld [vmem:[%s352 + $0x5e0] sm:$0xff]
        %v661 = vld [vmem:[%s352 + $0x5e8] sm:$0xff]
        %v662 = vld [vmem:[%s352 + $0x5f0] sm:$0xff]
        %v663 = vld [vmem:[%s352 + $0x5f8] sm:$0xff]
        %v664 = vld [vmem:[%s352 + $0x600] sm:$0xff]
        %v665 = vld [vmem:[%s352 + $0x608] sm:$0xff]
        %v666 = vld [vmem:[%s352 + $0x610] sm:$0xff]
        %v667 = vld [vmem:[%s352 + $0x618] sm:$0xff]
        %v668 = vld [vmem:[%s352 + $0x620] sm:$0xff]
        %v669 = vld [vmem:[%s352 + $0x628] sm:$0xff]
        %v670 = vld [vmem:[%s352 + $0x630] sm:$0xff]
        %v671 = vld [vmem:[%s352 + $0x638] sm:$0xff]
        %v672 = vld [vmem:[%s352 + $0x640] sm:$0xff]
        %v673 = vld [vmem:[%s352 + $0x648] sm:$0xff]
        %v674 = vld [vmem:[%s352 + $0x650] sm:$0xff]
        %v675 = vld [vmem:[%s352 + $0x658] sm:$0xff]
        %v676 = vld [vmem:[%s352 + $0x660] sm:$0xff]
        %v677 = vld [vmem:[%s352 + $0x668] sm:$0xff]
        %v678 = vld [vmem:[%s352 + $0x670] sm:$0xff]
        %v679 = vld [vmem:[%s352 + $0x678] sm:$0xff]
        %v680 = vld [vmem:[%s352 + $0x680] sm:$0xff]
        %v681 = vld [vmem:[%s352 + $0x688] sm:$0xff]
        %v682 = vld [vmem:[%s352 + $0x690] sm:$0xff]
        %v683 = vld [vmem:[%s352 + $0x698] sm:$0xff]
        %v684 = vld [vmem:[%s352 + $0x6a0] sm:$0xff]
        %v685 = vld [vmem:[%s352 + $0x6a8] sm:$0xff]
        %v686 = vld [vmem:[%s352 + $0x6b0] sm:$0xff]
        %v687 = vld [vmem:[%s352 + $0x6b8] sm:$0xff]
        %v688 = vld [vmem:[%s352 + $0x6c0] sm:$0xff]
        %v689 = vld [vmem:[%s352 + $0x6c8] sm:$0xff]
        %v690 = vld [vmem:[%s352 + $0x6d0] sm:$0xff]
        %v691 = vld [vmem:[%s352 + $0x6d8] sm:$0xff]
        %v692 = vld [vmem:[%s352 + $0x6e0] sm:$0xff]
        %v693 = vld [vmem:[%s352 + $0x6e8] sm:$0xff]
        %v694 = vld [vmem:[%s352 + $0x6f0] sm:$0xff]
        %v695 = vld [vmem:[%s352 + $0x6f8] sm:$0xff]
        %v696 = vld [vmem:[%s352 + $0x700] sm:$0xff]
        %v697 = vld [vmem:[%s352 + $0x708] sm:$0xff]
        %v698 = vld [vmem:[%s352 + $0x710] sm:$0xff]
        %v699 = vld [vmem:[%s352 + $0x718] sm:$0xff]
        %v700 = vld [vmem:[%s352 + $0x720] sm:$0xff]
        %v701 = vld [vmem:[%s352 + $0x728] sm:$0xff]
        %v702 = vld [vmem:[%s352 + $0x730] sm:$0xff]
        %v703 = vld [vmem:[%s352 + $0x738] sm:$0xff]
        %v704 = vld [vmem:[%s352 + $0x740] sm:$0xff]
        %v705 = vld [vmem:[%s352 + $0x748] sm:$0xff]
        %v706 = vld [vmem:[%s352 + $0x750] sm:$0xff]
        %v707 = vld [vmem:[%s352 + $0x758] sm:$0xff]
        %v708 = vld [vmem:[%s352 + $0x760] sm:$0xff]
        %v709 = vld [vmem:[%s352 + $0x768] sm:$0xff]
        %v710 = vld [vmem:[%s352 + $0x770] sm:$0xff]
        %v711 = vld [vmem:[%s352 + $0x778] sm:$0xff]
        %v712 = vld [vmem:[%s352 + $0x780] sm:$0xff]
        %v713 = vld [vmem:[%s352 + $0x788] sm:$0xff]
        %v714 = vld [vmem:[%s352 + $0x790] sm:$0xff]
        %v715 = vld [vmem:[%s352 + $0x798] sm:$0xff]
        %v716 = vld [vmem:[%s352 + $0x7a0] sm:$0xff]
        %v717 = vld [vmem:[%s352 + $0x7a8] sm:$0xff]
        %v718 = vld [vmem:[%s352 + $0x7b0] sm:$0xff]
        %v719 = vld [vmem:[%s352 + $0x7b8] sm:$0xff]
        %v720 = vld [vmem:[%s352 + $0x7c0] sm:$0xff]
        %v721 = vld [vmem:[%s352 + $0x7c8] sm:$0xff]
        %v722 = vld [vmem:[%s352 + $0x7d0] sm:$0xff]
        %v723 = vld [vmem:[%s352 + $0x7d8] sm:$0xff]
        %v724 = vld [vmem:[%s352 + $0x7e0] sm:$0xff]
        %v725 = vld [vmem:[%s352 + $0x7e8] sm:$0xff]
        %v726 = vld [vmem:[%s352 + $0x7f0] sm:$0xff]
        %v727 = vld [vmem:[%s352 + $0x7f8] sm:$0xff]
        %v728 = vld [vmem:[%s352 + $0x800] sm:$0xff]
        %v729 = vld [vmem:[%s352 + $0x808] sm:$0xff]
        %v730 = vld [vmem:[%s352 + $0x810] sm:$0xff]
        %v731 = vld [vmem:[%s352 + $0x818] sm:$0xff]
        %v732 = vld [vmem:[%s352 + $0x820] sm:$0xff]
        %v733 = vld [vmem:[%s352 + $0x828] sm:$0xff]
        %v734 = vld [vmem:[%s352 + $0x830] sm:$0xff]
        %v735 = vld [vmem:[%s352 + $0x838] sm:$0xff]
        %v736 = vld [vmem:[%s352 + $0x840] sm:$0xff]
        %v737 = vld [vmem:[%s352 + $0x848] sm:$0xff]
        %v738 = vld [vmem:[%s352 + $0x850] sm:$0xff]
        %v739 = vld [vmem:[%s352 + $0x858] sm:$0xff]
        %v740 = vld [vmem:[%s352 + $0x860] sm:$0xff]
        %v741 = vld [vmem:[%s352 + $0x868] sm:$0xff]
        %v742 = vld [vmem:[%s352 + $0x870] sm:$0xff]
        %v743 = vld [vmem:[%s352 + $0x878] sm:$0xff]
        %v744 = vld [vmem:[%s352 + $0x880] sm:$0xff]
        %v745 = vld [vmem:[%s352 + $0x888] sm:$0xff]
        %v746 = vld [vmem:[%s352 + $0x890] sm:$0xff]
        %v747 = vld [vmem:[%s352 + $0x898] sm:$0xff]
        %v748 = vld [vmem:[%s352 + $0x8a0] sm:$0xff]
        %v749 = vld [vmem:[%s352 + $0x8a8] sm:$0xff]
        %v750 = vld [vmem:[%s352 + $0x8b0] sm:$0xff]
        %v751 = vld [vmem:[%s352 + $0x8b8] sm:$0xff]
        %v752 = vld [vmem:[%s352 + $0x8c0] sm:$0xff]
        %v753 = vld [vmem:[%s352 + $0x8c8] sm:$0xff]
        %v754 = vld [vmem:[%s352 + $0x8d0] sm:$0xff]
        %v755 = vld [vmem:[%s352 + $0x8d8] sm:$0xff]
        %v756 = vld [vmem:[%s352 + $0x8e0] sm:$0xff]
        %v757 = vld [vmem:[%s352 + $0x8e8] sm:$0xff]
        %v758 = vld [vmem:[%s352 + $0x8f0] sm:$0xff]
        %v759 = vld [vmem:[%s352 + $0x8f8] sm:$0xff]
        %v760 = vld [vmem:[%s352 + $0x900] sm:$0xff]
        %v761 = vld [vmem:[%s352 + $0x908] sm:$0xff]
        %v762 = vld [vmem:[%s352 + $0x910] sm:$0xff]
        %v763 = vld [vmem:[%s352 + $0x918] sm:$0xff]
        %v764 = vld [vmem:[%s352 + $0x920] sm:$0xff]
        %v765 = vld [vmem:[%s352 + $0x928] sm:$0xff]
        %v766 = vld [vmem:[%s352 + $0x930] sm:$0xff]
        %v767 = vld [vmem:[%s352 + $0x938] sm:$0xff]
        %v768 = vld [vmem:[%s352 + $0x940] sm:$0xff]
        %v769 = vld [vmem:[%s352 + $0x948] sm:$0xff]
        %v770 = vld [vmem:[%s352 + $0x950] sm:$0xff]
        %v771 = vld [vmem:[%s352 + $0x958] sm:$0xff]
        %v772 = vld [vmem:[%s352 + $0x960] sm:$0xff]
        %v773 = vld [vmem:[%s352 + $0x968] sm:$0xff]
        %v774 = vld [vmem:[%s352 + $0x970] sm:$0xff]
        %v775 = vld [vmem:[%s352 + $0x978] sm:$0xff]
        %v776 = vld [vmem:[%s352 + $0x980] sm:$0xff]
        %v777 = vld [vmem:[%s352 + $0x988] sm:$0xff]
        %v778 = vld [vmem:[%s352 + $0x990] sm:$0xff]
        %v779 = vld [vmem:[%s352 + $0x998] sm:$0xff]
        %v780 = vld [vmem:[%s352 + $0x9a0] sm:$0xff]
        %v781 = vld [vmem:[%s352 + $0x9a8] sm:$0xff]
        %v782 = vld [vmem:[%s352 + $0x9b0] sm:$0xff]
        %v783 = vld [vmem:[%s352 + $0x9b8] sm:$0xff]
        %v784 = vld [vmem:[%s352 + $0x9c0] sm:$0xff]
        %v785 = vld [vmem:[%s352 + $0x9c8] sm:$0xff]
        %v786 = vld [vmem:[%s352 + $0x9d0] sm:$0xff]
        %v787 = vld [vmem:[%s352 + $0x9d8] sm:$0xff]
        %v788 = vld [vmem:[%s352 + $0x9e0] sm:$0xff]
        %v789 = vld [vmem:[%s352 + $0x9e8] sm:$0xff]
        %v790 = vld [vmem:[%s352 + $0x9f0] sm:$0xff]
        %v791 = vld [vmem:[%s352 + $0x9f8] sm:$0xff]
        %v792 = vld [vmem:[%s352 + $0xa00] sm:$0xff]
        %v793 = vld [vmem:[%s352 + $0xa08] sm:$0xff]
        %v794 = vld [vmem:[%s352 + $0xa10] sm:$0xff]
        %v795 = vld [vmem:[%s352 + $0xa18] sm:$0xff]
        %v796 = vld [vmem:[%s352 + $0xa20] sm:$0xff]
        %v797 = vld [vmem:[%s352 + $0xa28] sm:$0xff]
        %v798 = vld [vmem:[%s352 + $0xa30] sm:$0xff]
        %v799 = vld [vmem:[%s352 + $0xa38] sm:$0xff]
        %v800 = vld [vmem:[%s352 + $0xa40] sm:$0xff]
        %v801 = vld [vmem:[%s352 + $0xa48] sm:$0xff]
        %v802 = vld [vmem:[%s352 + $0xa50] sm:$0xff]
        %v803 = vld [vmem:[%s352 + $0xa58] sm:$0xff]
        %v804 = vld [vmem:[%s352 + $0xa60] sm:$0xff]
        %v805 = vld [vmem:[%s352 + $0xa68] sm:$0xff]
        %v806 = vld [vmem:[%s352 + $0xa70] sm:$0xff]
        %v807 = vld [vmem:[%s352 + $0xa78] sm:$0xff]
        %v808 = vld [vmem:[%s352 + $0xa80] sm:$0xff]
        %v809 = vld [vmem:[%s352 + $0xa88] sm:$0xff]
        %v810 = vld [vmem:[%s352 + $0xa90] sm:$0xff]
        %v811 = vld [vmem:[%s352 + $0xa98] sm:$0xff]
        %v812 = vld [vmem:[%s352 + $0xaa0] sm:$0xff]
        %v813 = vld [vmem:[%s352 + $0xaa8] sm:$0xff]
        %v814 = vld [vmem:[%s352 + $0xab0] sm:$0xff]
        %v815 = vld [vmem:[%s352 + $0xab8] sm:$0xff]
        %v816 = vld [vmem:[%s352 + $0xac0] sm:$0xff]
        %v817 = vld [vmem:[%s352 + $0xac8] sm:$0xff]
        %v818 = vld [vmem:[%s352 + $0xad0] sm:$0xff]
        %v819 = vld [vmem:[%s352 + $0xad8] sm:$0xff]
        %v820 = vld [vmem:[%s352 + $0xae0] sm:$0xff]
        %v821 = vld [vmem:[%s352 + $0xae8] sm:$0xff]
        %v822 = vld [vmem:[%s352 + $0xaf0] sm:$0xff]
        %v823 = vld [vmem:[%s352 + $0xaf8] sm:$0xff]
        %v824 = vld [vmem:[%s352 + $0xb00] sm:$0xff]
        %v825 = vld [vmem:[%s352 + $0xb08] sm:$0xff]
        %v826 = vld [vmem:[%s352 + $0xb10] sm:$0xff]
        %v827 = vld [vmem:[%s352 + $0xb18] sm:$0xff]
        %v828 = vld [vmem:[%s352 + $0xb20] sm:$0xff]
        %v829 = vld [vmem:[%s352 + $0xb28] sm:$0xff]
        %v830 = vld [vmem:[%s352 + $0xb30] sm:$0xff]
        %v831 = vld [vmem:[%s352 + $0xb38] sm:$0xff]
        %v832 = vld [vmem:[%s352 + $0xb40] sm:$0xff]
        %v833 = vld [vmem:[%s352 + $0xb48] sm:$0xff]
        %v834 = vld [vmem:[%s352 + $0xb50] sm:$0xff]
        %v835 = vld [vmem:[%s352 + $0xb58] sm:$0xff]
        %v836 = vld [vmem:[%s352 + $0xb60] sm:$0xff]
        %v837 = vld [vmem:[%s352 + $0xb68] sm:$0xff]
        %v838 = vld [vmem:[%s352 + $0xb70] sm:$0xff]
        %v839 = vld [vmem:[%s352 + $0xb78] sm:$0xff]
        %v840 = vld [vmem:[%s352 + $0xb80] sm:$0xff]
        %v841 = vld [vmem:[%s352 + $0xb88] sm:$0xff]
        %v842 = vld [vmem:[%s352 + $0xb90] sm:$0xff]
        %v843 = vld [vmem:[%s352 + $0xb98] sm:$0xff]
        %v844 = vld [vmem:[%s352 + $0xba0] sm:$0xff]
        %v845 = vld [vmem:[%s352 + $0xba8] sm:$0xff]
        %v846 = vld [vmem:[%s352 + $0xbb0] sm:$0xff]
        %v847 = vld [vmem:[%s352 + $0xbb8] sm:$0xff]
        %v848 = vld [vmem:[%s352 + $0xbc0] sm:$0xff]
        %v849 = vld [vmem:[%s352 + $0xbc8] sm:$0xff]
        %v850 = vld [vmem:[%s352 + $0xbd0] sm:$0xff]
        %v851 = vld [vmem:[%s352 + $0xbd8] sm:$0xff]
        %v852 = vld [vmem:[%s352 + $0xbe0] sm:$0xff]
        %v853 = vld [vmem:[%s352 + $0xbe8] sm:$0xff]
        %v854 = vld [vmem:[%s352 + $0xbf0] sm:$0xff]
        %v855 = vld [vmem:[%s352 + $0xbf8] sm:$0xff]
        %v856 = vld [vmem:[%s352 + $0xc00] sm:$0xff]
        %v857 = vld [vmem:[%s352 + $0xc08] sm:$0xff]
        %v858 = vld [vmem:[%s352 + $0xc10] sm:$0xff]
        %v859 = vld [vmem:[%s352 + $0xc18] sm:$0xff]
        %v860 = vld [vmem:[%s352 + $0xc20] sm:$0xff]
        %v861 = vld [vmem:[%s352 + $0xc28] sm:$0xff]
        %v862 = vld [vmem:[%s352 + $0xc30] sm:$0xff]
        %v863 = vld [vmem:[%s352 + $0xc38] sm:$0xff]
        %v864 = vld [vmem:[%s352 + $0xc40] sm:$0xff]
        %v865 = vld [vmem:[%s352 + $0xc48] sm:$0xff]
        %v866 = vld [vmem:[%s352 + $0xc50] sm:$0xff]
        %v867 = vld [vmem:[%s352 + $0xc58] sm:$0xff]
        %v868 = vld [vmem:[%s352 + $0xc60] sm:$0xff]
        %v869 = vld [vmem:[%s352 + $0xc68] sm:$0xff]
        %v870 = vld [vmem:[%s352 + $0xc70] sm:$0xff]
        %v871 = vld [vmem:[%s352 + $0xc78] sm:$0xff]
        %v872 = vld [vmem:[%s352 + $0xc80] sm:$0xff]
        %v873 = vld [vmem:[%s352 + $0xc88] sm:$0xff]
        %v874 = vld [vmem:[%s352 + $0xc90] sm:$0xff]
        %v875 = vld [vmem:[%s352 + $0xc98] sm:$0xff]
        %v876 = vld [vmem:[%s352 + $0xca0] sm:$0xff]
        %v877 = vld [vmem:[%s352 + $0xca8] sm:$0xff]
        %v878 = vld [vmem:[%s352 + $0xcb0] sm:$0xff]
        %v879 = vld [vmem:[%s352 + $0xcb8] sm:$0xff]
        %v880 = vld [vmem:[%s352 + $0xcc0] sm:$0xff]
        %v881 = vld [vmem:[%s352 + $0xcc8] sm:$0xff]
        %v882 = vld [vmem:[%s352 + $0xcd0] sm:$0xff]
        %v883 = vld [vmem:[%s352 + $0xcd8] sm:$0xff]
        %v884 = vld [vmem:[%s352 + $0xce0] sm:$0xff]
        %v885 = vld [vmem:[%s352 + $0xce8] sm:$0xff]
        %v886 = vld [vmem:[%s352 + $0xcf0] sm:$0xff]
        %v887 = vld [vmem:[%s352 + $0xcf8] sm:$0xff]
        %v888 = vld [vmem:[%s352 + $0xd00] sm:$0xff]
        %v889 = vld [vmem:[%s352 + $0xd08] sm:$0xff]
        %v890 = vld [vmem:[%s352 + $0xd10] sm:$0xff]
        %v891 = vld [vmem:[%s352 + $0xd18] sm:$0xff]
        %v892 = vld [vmem:[%s352 + $0xd20] sm:$0xff]
        %v893 = vld [vmem:[%s352 + $0xd28] sm:$0xff]
        %v894 = vld [vmem:[%s352 + $0xd30] sm:$0xff]
        %v895 = vld [vmem:[%s352 + $0xd38] sm:$0xff]
        %v896 = vld [vmem:[%s352 + $0xd40] sm:$0xff]
        %v897 = vld [vmem:[%s352 + $0xd48] sm:$0xff]
        %v898 = vld [vmem:[%s352 + $0xd50] sm:$0xff]
        %v899 = vld [vmem:[%s352 + $0xd58] sm:$0xff]
        %v900 = vld [vmem:[%s352 + $0xd60] sm:$0xff]
        %v901 = vld [vmem:[%s352 + $0xd68] sm:$0xff]
        %v902 = vld [vmem:[%s352 + $0xd70] sm:$0xff]
        %v903 = vld [vmem:[%s352 + $0xd78] sm:$0xff]
        %v904 = vld [vmem:[%s352 + $0xd80] sm:$0xff]
        %v905 = vld [vmem:[%s352 + $0xd88] sm:$0xff]
        %v906 = vld [vmem:[%s352 + $0xd90] sm:$0xff]
        %v907 = vld [vmem:[%s352 + $0xd98] sm:$0xff]
        %v908 = vld [vmem:[%s352 + $0xda0] sm:$0xff]
        %v909 = vld [vmem:[%s352 + $0xda8] sm:$0xff]
        %v910 = vld [vmem:[%s352 + $0xdb0] sm:$0xff]
        %v911 = vld [vmem:[%s352 + $0xdb8] sm:$0xff]
        %v912 = vld [vmem:[%s352 + $0xdc0] sm:$0xff]
        %v913 = vld [vmem:[%s352 + $0xdc8] sm:$0xff]
        %v914 = vld [vmem:[%s352 + $0xdd0] sm:$0xff]
        %v915 = vld [vmem:[%s352 + $0xdd8] sm:$0xff]
        %v916 = vld [vmem:[%s352 + $0xde0] sm:$0xff]
        %v917 = vld [vmem:[%s352 + $0xde8] sm:$0xff]
        %v918 = vld [vmem:[%s352 + $0xdf0] sm:$0xff]
        %v919 = vld [vmem:[%s352 + $0xdf8] sm:$0xff]
        %v920 = vld [vmem:[%s352 + $0xe00] sm:$0xff]
        %v921 = vld [vmem:[%s352 + $0xe08] sm:$0xff]
        %v922 = vld [vmem:[%s352 + $0xe10] sm:$0xff]
        %v923 = vld [vmem:[%s352 + $0xe18] sm:$0xff]
        %v924 = vld [vmem:[%s352 + $0xe20] sm:$0xff]
        %v925 = vld [vmem:[%s352 + $0xe28] sm:$0xff]
        %v926 = vld [vmem:[%s352 + $0xe30] sm:$0xff]
        %v927 = vld [vmem:[%s352 + $0xe38] sm:$0xff]
        %v928 = vld [vmem:[%s352 + $0xe40] sm:$0xff]
        %v929 = vld [vmem:[%s352 + $0xe48] sm:$0xff]
        %v930 = vld [vmem:[%s352 + $0xe50] sm:$0xff]
        %v931 = vld [vmem:[%s352 + $0xe58] sm:$0xff]
        %v932 = vld [vmem:[%s352 + $0xe60] sm:$0xff]
        %v933 = vld [vmem:[%s352 + $0xe68] sm:$0xff]
        %v934 = vld [vmem:[%s352 + $0xe70] sm:$0xff]
        %v935 = vld [vmem:[%s352 + $0xe78] sm:$0xff]
        %v936 = vld [vmem:[%s352 + $0xe80] sm:$0xff]
        %v937 = vld [vmem:[%s352 + $0xe88] sm:$0xff]
        %v938 = vld [vmem:[%s352 + $0xe90] sm:$0xff]
        %v939 = vld [vmem:[%s352 + $0xe98] sm:$0xff]
        %v940 = vld [vmem:[%s352 + $0xea0] sm:$0xff]
        %v941 = vld [vmem:[%s352 + $0xea8] sm:$0xff]
        %v942 = vld [vmem:[%s352 + $0xeb0] sm:$0xff]
        %v943 = vld [vmem:[%s352 + $0xeb8] sm:$0xff]
        %v944 = vld [vmem:[%s352 + $0xec0] sm:$0xff]
        %v945 = vld [vmem:[%s352 + $0xec8] sm:$0xff]
        %v946 = vld [vmem:[%s352 + $0xed0] sm:$0xff]
        %v947 = vld [vmem:[%s352 + $0xed8] sm:$0xff]
        %v948 = vld [vmem:[%s352 + $0xee0] sm:$0xff]
        %v949 = vld [vmem:[%s352 + $0xee8] sm:$0xff]
        %v950 = vld [vmem:[%s352 + $0xef0] sm:$0xff]
        %v951 = vld [vmem:[%s352 + $0xef8] sm:$0xff]
        %v952 = vld [vmem:[%s352 + $0xf00] sm:$0xff]
        %v953 = vld [vmem:[%s352 + $0xf08] sm:$0xff]
        %v954 = vld [vmem:[%s352 + $0xf10] sm:$0xff]
        %v955 = vld [vmem:[%s352 + $0xf18] sm:$0xff]
        %v956 = vld [vmem:[%s352 + $0xf20] sm:$0xff]
        %v957 = vld [vmem:[%s352 + $0xf28] sm:$0xff]
        %v958 = vld [vmem:[%s352 + $0xf30] sm:$0xff]
        %v959 = vld [vmem:[%s352 + $0xf38] sm:$0xff]
        %v960 = vld [vmem:[%s352 + $0xf40] sm:$0xff]
        %v961 = vld [vmem:[%s352 + $0xf48] sm:$0xff]
        %v962 = vld [vmem:[%s352 + $0xf50] sm:$0xff]
        %v963 = vld [vmem:[%s352 + $0xf58] sm:$0xff]
        %v964 = vld [vmem:[%s352 + $0xf60] sm:$0xff]
        %v965 = vld [vmem:[%s352 + $0xf68] sm:$0xff]
        %v966 = vld [vmem:[%s352 + $0xf70] sm:$0xff]
        %v967 = vld [vmem:[%s352 + $0xf78] sm:$0xff]
        %v968 = vld [vmem:[%s352 + $0xf80] sm:$0xff]
        %v969 = vld [vmem:[%s352 + $0xf88] sm:$0xff]
        %v970 = vld [vmem:[%s352 + $0xf90] sm:$0xff]
        %v971 = vld [vmem:[%s352 + $0xf98] sm:$0xff]
        %v972 = vld [vmem:[%s352 + $0xfa0] sm:$0xff]
        %v973 = vld [vmem:[%s352 + $0xfa8] sm:$0xff]
        %v974 = vld [vmem:[%s352 + $0xfb0] sm:$0xff]
        %v975 = vld [vmem:[%s352 + $0xfb8] sm:$0xff]
        %v976 = vld [vmem:[%s352 + $0xfc0] sm:$0xff]
        %v977 = vld [vmem:[%s352 + $0xfc8] sm:$0xff]
        %v978 = vld [vmem:[%s352 + $0xfd0] sm:$0xff]
        %v979 = vld [vmem:[%s352 + $0xfd8] sm:$0xff]
        %v980 = vld [vmem:[%s352 + $0xfe0] sm:$0xff]
        %v981 = vld [vmem:[%s352 + $0xfe8] sm:$0xff]
        %v982 = vld [vmem:[%s352 + $0xff0] sm:$0xff]
        %v983 = vld [vmem:[%s352 + $0xff8] sm:$0xff]
        %v984 = vld [vmem:[%s362] sm:$0xff]
        %v985 = vld [vmem:[%s362 + $0x8] sm:$0xff]
        %v986 = vld [vmem:[%s362 + $0x10] sm:$0xff]
        %v987 = vld [vmem:[%s362 + $0x18] sm:$0xff]
        %v988 = vld [vmem:[%s362 + $0x20] sm:$0xff]
        %v989 = vld [vmem:[%s362 + $0x28] sm:$0xff]
        %v990 = vld [vmem:[%s362 + $0x30] sm:$0xff]
        %v991 = vld [vmem:[%s362 + $0x38] sm:$0xff]
        %v992 = vld [vmem:[%s362 + $0x40] sm:$0xff]
        %v993 = vld [vmem:[%s362 + $0x48] sm:$0xff]
        %v994 = vld [vmem:[%s362 + $0x50] sm:$0xff]
        %v995 = vld [vmem:[%s362 + $0x58] sm:$0xff]
        %v996 = vld [vmem:[%s362 + $0x60] sm:$0xff]
        %v997 = vld [vmem:[%s362 + $0x68] sm:$0xff]
        %v998 = vld [vmem:[%s362 + $0x70] sm:$0xff]
        %v999 = vld [vmem:[%s362 + $0x78] sm:$0xff]
        %v1000 = vld [vmem:[%s362 + $0x80] sm:$0xff]
        %v1001 = vld [vmem:[%s362 + $0x88] sm:$0xff]
        %v1002 = vld [vmem:[%s362 + $0x90] sm:$0xff]
        %v1003 = vld [vmem:[%s362 + $0x98] sm:$0xff]
        %v1004 = vld [vmem:[%s362 + $0xa0] sm:$0xff]
        %v1005 = vld [vmem:[%s362 + $0xa8] sm:$0xff]
        %v1006 = vld [vmem:[%s362 + $0xb0] sm:$0xff]
        %v1007 = vld [vmem:[%s362 + $0xb8] sm:$0xff]
        %v1008 = vld [vmem:[%s362 + $0xc0] sm:$0xff]
        %v1009 = vld [vmem:[%s362 + $0xc8] sm:$0xff]
        %v1010 = vld [vmem:[%s362 + $0xd0] sm:$0xff]
        %v1011 = vld [vmem:[%s362 + $0xd8] sm:$0xff]
        %v1012 = vld [vmem:[%s362 + $0xe0] sm:$0xff]
        %v1013 = vld [vmem:[%s362 + $0xe8] sm:$0xff]
        %v1014 = vld [vmem:[%s362 + $0xf0] sm:$0xff]
        %v1015 = vld [vmem:[%s362 + $0xf8] sm:$0xff]
        %v1016 = vld [vmem:[%s362 + $0x100] sm:$0xff]
        %v1017 = vld [vmem:[%s362 + $0x108] sm:$0xff]
        %v1018 = vld [vmem:[%s362 + $0x110] sm:$0xff]
        %v1019 = vld [vmem:[%s362 + $0x118] sm:$0xff]
        %v1020 = vld [vmem:[%s362 + $0x120] sm:$0xff]
        %v1021 = vld [vmem:[%s362 + $0x128] sm:$0xff]
        %v1022 = vld [vmem:[%s362 + $0x130] sm:$0xff]
        %v1023 = vld [vmem:[%s362 + $0x138] sm:$0xff]
        %v1024 = vld [vmem:[%s362 + $0x140] sm:$0xff]
        %v1025 = vld [vmem:[%s362 + $0x148] sm:$0xff]
        %v1026 = vld [vmem:[%s362 + $0x150] sm:$0xff]
        %v1027 = vld [vmem:[%s362 + $0x158] sm:$0xff]
        %v1028 = vld [vmem:[%s362 + $0x160] sm:$0xff]
        %v1029 = vld [vmem:[%s362 + $0x168] sm:$0xff]
        %v1030 = vld [vmem:[%s362 + $0x170] sm:$0xff]
        %v1031 = vld [vmem:[%s362 + $0x178] sm:$0xff]
        %v1032 = vld [vmem:[%s362 + $0x180] sm:$0xff]
        %v1033 = vld [vmem:[%s362 + $0x188] sm:$0xff]
        %v1034 = vld [vmem:[%s362 + $0x190] sm:$0xff]
        %v1035 = vld [vmem:[%s362 + $0x198] sm:$0xff]
        %v1036 = vld [vmem:[%s362 + $0x1a0] sm:$0xff]
        %v1037 = vld [vmem:[%s362 + $0x1a8] sm:$0xff]
        %v1038 = vld [vmem:[%s362 + $0x1b0] sm:$0xff]
        %v1039 = vld [vmem:[%s362 + $0x1b8] sm:$0xff]
        %v1040 = vld [vmem:[%s362 + $0x1c0] sm:$0xff]
        %v1041 = vld [vmem:[%s362 + $0x1c8] sm:$0xff]
        %v1042 = vld [vmem:[%s362 + $0x1d0] sm:$0xff]
        %v1043 = vld [vmem:[%s362 + $0x1d8] sm:$0xff]
        %v1044 = vld [vmem:[%s362 + $0x1e0] sm:$0xff]
        %v1045 = vld [vmem:[%s362 + $0x1e8] sm:$0xff]
        %v1046 = vld [vmem:[%s362 + $0x1f0] sm:$0xff]
        %v1047 = vld [vmem:[%s362 + $0x1f8] sm:$0xff]
        %v1048 = vld [vmem:[%s362 + $0x200] sm:$0xff]
        %v1049 = vld [vmem:[%s362 + $0x208] sm:$0xff]
        %v1050 = vld [vmem:[%s362 + $0x210] sm:$0xff]
        %v1051 = vld [vmem:[%s362 + $0x218] sm:$0xff]
        %v1052 = vld [vmem:[%s362 + $0x220] sm:$0xff]
        %v1053 = vld [vmem:[%s362 + $0x228] sm:$0xff]
        %v1054 = vld [vmem:[%s362 + $0x230] sm:$0xff]
        %v1055 = vld [vmem:[%s362 + $0x238] sm:$0xff]
        %v1056 = vld [vmem:[%s362 + $0x240] sm:$0xff]
        %v1057 = vld [vmem:[%s362 + $0x248] sm:$0xff]
        %v1058 = vld [vmem:[%s362 + $0x250] sm:$0xff]
        %v1059 = vld [vmem:[%s362 + $0x258] sm:$0xff]
        %v1060 = vld [vmem:[%s362 + $0x260] sm:$0xff]
        %v1061 = vld [vmem:[%s362 + $0x268] sm:$0xff]
        %v1062 = vld [vmem:[%s362 + $0x270] sm:$0xff]
        %v1063 = vld [vmem:[%s362 + $0x278] sm:$0xff]
        %v1064 = vld [vmem:[%s362 + $0x280] sm:$0xff]
        %v1065 = vld [vmem:[%s362 + $0x288] sm:$0xff]
        %v1066 = vld [vmem:[%s362 + $0x290] sm:$0xff]
        %v1067 = vld [vmem:[%s362 + $0x298] sm:$0xff]
        %v1068 = vld [vmem:[%s362 + $0x2a0] sm:$0xff]
        %v1069 = vld [vmem:[%s362 + $0x2a8] sm:$0xff]
        %v1070 = vld [vmem:[%s362 + $0x2b0] sm:$0xff]
        %v1071 = vld [vmem:[%s362 + $0x2b8] sm:$0xff]
        %v1072 = vld [vmem:[%s362 + $0x2c0] sm:$0xff]
        %v1073 = vld [vmem:[%s362 + $0x2c8] sm:$0xff]
        %v1074 = vld [vmem:[%s362 + $0x2d0] sm:$0xff]
        %v1075 = vld [vmem:[%s362 + $0x2d8] sm:$0xff]
        %v1076 = vld [vmem:[%s362 + $0x2e0] sm:$0xff]
        %v1077 = vld [vmem:[%s362 + $0x2e8] sm:$0xff]
        %v1078 = vld [vmem:[%s362 + $0x2f0] sm:$0xff]
        %v1079 = vld [vmem:[%s362 + $0x2f8] sm:$0xff]
        %v1080 = vld [vmem:[%s362 + $0x300] sm:$0xff]
        %v1081 = vld [vmem:[%s362 + $0x308] sm:$0xff]
        %v1082 = vld [vmem:[%s362 + $0x310] sm:$0xff]
        %v1083 = vld [vmem:[%s362 + $0x318] sm:$0xff]
        %v1084 = vld [vmem:[%s362 + $0x320] sm:$0xff]
        %v1085 = vld [vmem:[%s362 + $0x328] sm:$0xff]
        %v1086 = vld [vmem:[%s362 + $0x330] sm:$0xff]
        %v1087 = vld [vmem:[%s362 + $0x338] sm:$0xff]
        %v1088 = vld [vmem:[%s362 + $0x340] sm:$0xff]
        %v1089 = vld [vmem:[%s362 + $0x348] sm:$0xff]
        %v1090 = vld [vmem:[%s362 + $0x350] sm:$0xff]
        %v1091 = vld [vmem:[%s362 + $0x358] sm:$0xff]
        %v1092 = vld [vmem:[%s362 + $0x360] sm:$0xff]
        %v1093 = vld [vmem:[%s362 + $0x368] sm:$0xff]
        %v1094 = vld [vmem:[%s362 + $0x370] sm:$0xff]
        %v1095 = vld [vmem:[%s362 + $0x378] sm:$0xff]
        %v1096 = vld [vmem:[%s362 + $0x380] sm:$0xff]
        %v1097 = vld [vmem:[%s362 + $0x388] sm:$0xff]
        %v1098 = vld [vmem:[%s362 + $0x390] sm:$0xff]
        %v1099 = vld [vmem:[%s362 + $0x398] sm:$0xff]
        %v1100 = vld [vmem:[%s362 + $0x3a0] sm:$0xff]
        %v1101 = vld [vmem:[%s362 + $0x3a8] sm:$0xff]
        %v1102 = vld [vmem:[%s362 + $0x3b0] sm:$0xff]
        %v1103 = vld [vmem:[%s362 + $0x3b8] sm:$0xff]
        %v1104 = vld [vmem:[%s362 + $0x3c0] sm:$0xff]
        %v1105 = vld [vmem:[%s362 + $0x3c8] sm:$0xff]
        %v1106 = vld [vmem:[%s362 + $0x3d0] sm:$0xff]
        %v1107 = vld [vmem:[%s362 + $0x3d8] sm:$0xff]
        %v1108 = vld [vmem:[%s362 + $0x3e0] sm:$0xff]
        %v1109 = vld [vmem:[%s362 + $0x3e8] sm:$0xff]
        %v1110 = vld [vmem:[%s362 + $0x3f0] sm:$0xff]
        %v1111 = vld [vmem:[%s362 + $0x3f8] sm:$0xff]
        %v1112 = vld [vmem:[%s362 + $0x400] sm:$0xff]
        %v1113 = vld [vmem:[%s362 + $0x408] sm:$0xff]
        %v1114 = vld [vmem:[%s362 + $0x410] sm:$0xff]
        %v1115 = vld [vmem:[%s362 + $0x418] sm:$0xff]
        %v1116 = vld [vmem:[%s362 + $0x420] sm:$0xff]
        %v1117 = vld [vmem:[%s362 + $0x428] sm:$0xff]
        %v1118 = vld [vmem:[%s362 + $0x430] sm:$0xff]
        %v1119 = vld [vmem:[%s362 + $0x438] sm:$0xff]
        %v1120 = vld [vmem:[%s362 + $0x440] sm:$0xff]
        %v1121 = vld [vmem:[%s362 + $0x448] sm:$0xff]
        %v1122 = vld [vmem:[%s362 + $0x450] sm:$0xff]
        %v1123 = vld [vmem:[%s362 + $0x458] sm:$0xff]
        %v1124 = vld [vmem:[%s362 + $0x460] sm:$0xff]
        %v1125 = vld [vmem:[%s362 + $0x468] sm:$0xff]
        %v1126 = vld [vmem:[%s362 + $0x470] sm:$0xff]
        %v1127 = vld [vmem:[%s362 + $0x478] sm:$0xff]
        %v1128 = vld [vmem:[%s362 + $0x480] sm:$0xff]
        %v1129 = vld [vmem:[%s362 + $0x488] sm:$0xff]
        %v1130 = vld [vmem:[%s362 + $0x490] sm:$0xff]
        %v1131 = vld [vmem:[%s362 + $0x498] sm:$0xff]
        %v1132 = vld [vmem:[%s362 + $0x4a0] sm:$0xff]
        %v1133 = vld [vmem:[%s362 + $0x4a8] sm:$0xff]
        %v1134 = vld [vmem:[%s362 + $0x4b0] sm:$0xff]
        %v1135 = vld [vmem:[%s362 + $0x4b8] sm:$0xff]
        %v1136 = vld [vmem:[%s362 + $0x4c0] sm:$0xff]
        %v1137 = vld [vmem:[%s362 + $0x4c8] sm:$0xff]
        %v1138 = vld [vmem:[%s362 + $0x4d0] sm:$0xff]
        %v1139 = vld [vmem:[%s362 + $0x4d8] sm:$0xff]
        %v1140 = vld [vmem:[%s362 + $0x4e0] sm:$0xff]
        %v1141 = vld [vmem:[%s362 + $0x4e8] sm:$0xff]
        %v1142 = vld [vmem:[%s362 + $0x4f0] sm:$0xff]
        %v1143 = vld [vmem:[%s362 + $0x4f8] sm:$0xff]
        %v1144 = vld [vmem:[%s362 + $0x500] sm:$0xff]
        %v1145 = vld [vmem:[%s362 + $0x508] sm:$0xff]
        %v1146 = vld [vmem:[%s362 + $0x510] sm:$0xff]
        %v1147 = vld [vmem:[%s362 + $0x518] sm:$0xff]
        %v1148 = vld [vmem:[%s362 + $0x520] sm:$0xff]
        %v1149 = vld [vmem:[%s362 + $0x528] sm:$0xff]
        %v1150 = vld [vmem:[%s362 + $0x530] sm:$0xff]
        %v1151 = vld [vmem:[%s362 + $0x538] sm:$0xff]
        %v1152 = vld [vmem:[%s362 + $0x540] sm:$0xff]
        %v1153 = vld [vmem:[%s362 + $0x548] sm:$0xff]
        %v1154 = vld [vmem:[%s362 + $0x550] sm:$0xff]
        %v1155 = vld [vmem:[%s362 + $0x558] sm:$0xff]
        %v1156 = vld [vmem:[%s362 + $0x560] sm:$0xff]
        %v1157 = vld [vmem:[%s362 + $0x568] sm:$0xff]
        %v1158 = vld [vmem:[%s362 + $0x570] sm:$0xff]
        %v1159 = vld [vmem:[%s362 + $0x578] sm:$0xff]
        %v1160 = vld [vmem:[%s362 + $0x580] sm:$0xff]
        %v1161 = vld [vmem:[%s362 + $0x588] sm:$0xff]
        %v1162 = vld [vmem:[%s362 + $0x590] sm:$0xff]
        %v1163 = vld [vmem:[%s362 + $0x598] sm:$0xff]
        %v1164 = vld [vmem:[%s362 + $0x5a0] sm:$0xff]
        %v1165 = vld [vmem:[%s362 + $0x5a8] sm:$0xff]
        %v1166 = vld [vmem:[%s362 + $0x5b0] sm:$0xff]
        %v1167 = vld [vmem:[%s362 + $0x5b8] sm:$0xff]
        %v1168 = vld [vmem:[%s362 + $0x5c0] sm:$0xff]
        %v1169 = vld [vmem:[%s362 + $0x5c8] sm:$0xff]
        %v1170 = vld [vmem:[%s362 + $0x5d0] sm:$0xff]
        %v1171 = vld [vmem:[%s362 + $0x5d8] sm:$0xff]
        %v1172 = vld [vmem:[%s362 + $0x5e0] sm:$0xff]
        %v1173 = vld [vmem:[%s362 + $0x5e8] sm:$0xff]
        %v1174 = vld [vmem:[%s362 + $0x5f0] sm:$0xff]
        %v1175 = vld [vmem:[%s362 + $0x5f8] sm:$0xff]
        %v1176 = vld [vmem:[%s362 + $0x600] sm:$0xff]
        %v1177 = vld [vmem:[%s362 + $0x608] sm:$0xff]
        %v1178 = vld [vmem:[%s362 + $0x610] sm:$0xff]
        %v1179 = vld [vmem:[%s362 + $0x618] sm:$0xff]
        %v1180 = vld [vmem:[%s362 + $0x620] sm:$0xff]
        %v1181 = vld [vmem:[%s362 + $0x628] sm:$0xff]
        %v1182 = vld [vmem:[%s362 + $0x630] sm:$0xff]
        %v1183 = vld [vmem:[%s362 + $0x638] sm:$0xff]
        %v1184 = vld [vmem:[%s362 + $0x640] sm:$0xff]
        %v1185 = vld [vmem:[%s362 + $0x648] sm:$0xff]
        %v1186 = vld [vmem:[%s362 + $0x650] sm:$0xff]
        %v1187 = vld [vmem:[%s362 + $0x658] sm:$0xff]
        %v1188 = vld [vmem:[%s362 + $0x660] sm:$0xff]
        %v1189 = vld [vmem:[%s362 + $0x668] sm:$0xff]
        %v1190 = vld [vmem:[%s362 + $0x670] sm:$0xff]
        %v1191 = vld [vmem:[%s362 + $0x678] sm:$0xff]
        %v1192 = vld [vmem:[%s362 + $0x680] sm:$0xff]
        %v1193 = vld [vmem:[%s362 + $0x688] sm:$0xff]
        %v1194 = vld [vmem:[%s362 + $0x690] sm:$0xff]
        %v1195 = vld [vmem:[%s362 + $0x698] sm:$0xff]
        %v1196 = vld [vmem:[%s362 + $0x6a0] sm:$0xff]
        %v1197 = vld [vmem:[%s362 + $0x6a8] sm:$0xff]
        %v1198 = vld [vmem:[%s362 + $0x6b0] sm:$0xff]
        %v1199 = vld [vmem:[%s362 + $0x6b8] sm:$0xff]
        %v1200 = vld [vmem:[%s362 + $0x6c0] sm:$0xff]
        %v1201 = vld [vmem:[%s362 + $0x6c8] sm:$0xff]
        %v1202 = vld [vmem:[%s362 + $0x6d0] sm:$0xff]
        %v1203 = vld [vmem:[%s362 + $0x6d8] sm:$0xff]
        %v1204 = vld [vmem:[%s362 + $0x6e0] sm:$0xff]
        %v1205 = vld [vmem:[%s362 + $0x6e8] sm:$0xff]
        %v1206 = vld [vmem:[%s362 + $0x6f0] sm:$0xff]
        %v1207 = vld [vmem:[%s362 + $0x6f8] sm:$0xff]
        %v1208 = vld [vmem:[%s362 + $0x700] sm:$0xff]
        %v1209 = vld [vmem:[%s362 + $0x708] sm:$0xff]
        %v1210 = vld [vmem:[%s362 + $0x710] sm:$0xff]
        %v1211 = vld [vmem:[%s362 + $0x718] sm:$0xff]
        %v1212 = vld [vmem:[%s362 + $0x720] sm:$0xff]
        %v1213 = vld [vmem:[%s362 + $0x728] sm:$0xff]
        %v1214 = vld [vmem:[%s362 + $0x730] sm:$0xff]
        %v1215 = vld [vmem:[%s362 + $0x738] sm:$0xff]
        %v1216 = vld [vmem:[%s362 + $0x740] sm:$0xff]
        %v1217 = vld [vmem:[%s362 + $0x748] sm:$0xff]
        %v1218 = vld [vmem:[%s362 + $0x750] sm:$0xff]
        %v1219 = vld [vmem:[%s362 + $0x758] sm:$0xff]
        %v1220 = vld [vmem:[%s362 + $0x760] sm:$0xff]
        %v1221 = vld [vmem:[%s362 + $0x768] sm:$0xff]
        %v1222 = vld [vmem:[%s362 + $0x770] sm:$0xff]
        %v1223 = vld [vmem:[%s362 + $0x778] sm:$0xff]
        %v1224 = vld [vmem:[%s362 + $0x780] sm:$0xff]
        %v1225 = vld [vmem:[%s362 + $0x788] sm:$0xff]
        %v1226 = vld [vmem:[%s362 + $0x790] sm:$0xff]
        %v1227 = vld [vmem:[%s362 + $0x798] sm:$0xff]
        %v1228 = vld [vmem:[%s362 + $0x7a0] sm:$0xff]
        %v1229 = vld [vmem:[%s362 + $0x7a8] sm:$0xff]
        %v1230 = vld [vmem:[%s362 + $0x7b0] sm:$0xff]
        %v1231 = vld [vmem:[%s362 + $0x7b8] sm:$0xff]
        %v1232 = vld [vmem:[%s362 + $0x7c0] sm:$0xff]
        %v1233 = vld [vmem:[%s362 + $0x7c8] sm:$0xff]
        %v1234 = vld [vmem:[%s362 + $0x7d0] sm:$0xff]
        %v1235 = vld [vmem:[%s362 + $0x7d8] sm:$0xff]
        %v1236 = vld [vmem:[%s362 + $0x7e0] sm:$0xff]
        %v1237 = vld [vmem:[%s362 + $0x7e8] sm:$0xff]
        %v1238 = vld [vmem:[%s362 + $0x7f0] sm:$0xff]
        %v1239 = vld [vmem:[%s362 + $0x7f8] sm:$0xff]
        %v1240 = vld [vmem:[%s362 + $0x800] sm:$0xff]
        %v1241 = vld [vmem:[%s362 + $0x808] sm:$0xff]
        %v1242 = vld [vmem:[%s362 + $0x810] sm:$0xff]
        %v1243 = vld [vmem:[%s362 + $0x818] sm:$0xff]
        %v1244 = vld [vmem:[%s362 + $0x820] sm:$0xff]
        %v1245 = vld [vmem:[%s362 + $0x828] sm:$0xff]
        %v1246 = vld [vmem:[%s362 + $0x830] sm:$0xff]
        %v1247 = vld [vmem:[%s362 + $0x838] sm:$0xff]
        %v1248 = vld [vmem:[%s362 + $0x840] sm:$0xff]
        %v1249 = vld [vmem:[%s362 + $0x848] sm:$0xff]
        %v1250 = vld [vmem:[%s362 + $0x850] sm:$0xff]
        %v1251 = vld [vmem:[%s362 + $0x858] sm:$0xff]
        %v1252 = vld [vmem:[%s362 + $0x860] sm:$0xff]
        %v1253 = vld [vmem:[%s362 + $0x868] sm:$0xff]
        %v1254 = vld [vmem:[%s362 + $0x870] sm:$0xff]
        %v1255 = vld [vmem:[%s362 + $0x878] sm:$0xff]
        %v1256 = vld [vmem:[%s362 + $0x880] sm:$0xff]
        %v1257 = vld [vmem:[%s362 + $0x888] sm:$0xff]
        %v1258 = vld [vmem:[%s362 + $0x890] sm:$0xff]
        %v1259 = vld [vmem:[%s362 + $0x898] sm:$0xff]
        %v1260 = vld [vmem:[%s362 + $0x8a0] sm:$0xff]
        %v1261 = vld [vmem:[%s362 + $0x8a8] sm:$0xff]
        %v1262 = vld [vmem:[%s362 + $0x8b0] sm:$0xff]
        %v1263 = vld [vmem:[%s362 + $0x8b8] sm:$0xff]
        %v1264 = vld [vmem:[%s362 + $0x8c0] sm:$0xff]
        %v1265 = vld [vmem:[%s362 + $0x8c8] sm:$0xff]
        %v1266 = vld [vmem:[%s362 + $0x8d0] sm:$0xff]
        %v1267 = vld [vmem:[%s362 + $0x8d8] sm:$0xff]
        %v1268 = vld [vmem:[%s362 + $0x8e0] sm:$0xff]
        %v1269 = vld [vmem:[%s362 + $0x8e8] sm:$0xff]
        %v1270 = vld [vmem:[%s362 + $0x8f0] sm:$0xff]
        %v1271 = vld [vmem:[%s362 + $0x8f8] sm:$0xff]
        %v1272 = vld [vmem:[%s362 + $0x900] sm:$0xff]
        %v1273 = vld [vmem:[%s362 + $0x908] sm:$0xff]
        %v1274 = vld [vmem:[%s362 + $0x910] sm:$0xff]
        %v1275 = vld [vmem:[%s362 + $0x918] sm:$0xff]
        %v1276 = vld [vmem:[%s362 + $0x920] sm:$0xff]
        %v1277 = vld [vmem:[%s362 + $0x928] sm:$0xff]
        %v1278 = vld [vmem:[%s362 + $0x930] sm:$0xff]
        %v1279 = vld [vmem:[%s362 + $0x938] sm:$0xff]
        %v1280 = vld [vmem:[%s362 + $0x940] sm:$0xff]
        %v1281 = vld [vmem:[%s362 + $0x948] sm:$0xff]
        %v1282 = vld [vmem:[%s362 + $0x950] sm:$0xff]
        %v1283 = vld [vmem:[%s362 + $0x958] sm:$0xff]
        %v1284 = vld [vmem:[%s362 + $0x960] sm:$0xff]
        %v1285 = vld [vmem:[%s362 + $0x968] sm:$0xff]
        %v1286 = vld [vmem:[%s362 + $0x970] sm:$0xff]
        %v1287 = vld [vmem:[%s362 + $0x978] sm:$0xff]
        %v1288 = vld [vmem:[%s362 + $0x980] sm:$0xff]
        %v1289 = vld [vmem:[%s362 + $0x988] sm:$0xff]
        %v1290 = vld [vmem:[%s362 + $0x990] sm:$0xff]
        %v1291 = vld [vmem:[%s362 + $0x998] sm:$0xff]
        %v1292 = vld [vmem:[%s362 + $0x9a0] sm:$0xff]
        %v1293 = vld [vmem:[%s362 + $0x9a8] sm:$0xff]
        %v1294 = vld [vmem:[%s362 + $0x9b0] sm:$0xff]
        %v1295 = vld [vmem:[%s362 + $0x9b8] sm:$0xff]
        %v1296 = vld [vmem:[%s362 + $0x9c0] sm:$0xff]
        %v1297 = vld [vmem:[%s362 + $0x9c8] sm:$0xff]
        %v1298 = vld [vmem:[%s362 + $0x9d0] sm:$0xff]
        %v1299 = vld [vmem:[%s362 + $0x9d8] sm:$0xff]
        %v1300 = vld [vmem:[%s362 + $0x9e0] sm:$0xff]
        %v1301 = vld [vmem:[%s362 + $0x9e8] sm:$0xff]
        %v1302 = vld [vmem:[%s362 + $0x9f0] sm:$0xff]
        %v1303 = vld [vmem:[%s362 + $0x9f8] sm:$0xff]
        %v1304 = vld [vmem:[%s362 + $0xa00] sm:$0xff]
        %v1305 = vld [vmem:[%s362 + $0xa08] sm:$0xff]
        %v1306 = vld [vmem:[%s362 + $0xa10] sm:$0xff]
        %v1307 = vld [vmem:[%s362 + $0xa18] sm:$0xff]
        %v1308 = vld [vmem:[%s362 + $0xa20] sm:$0xff]
        %v1309 = vld [vmem:[%s362 + $0xa28] sm:$0xff]
        %v1310 = vld [vmem:[%s362 + $0xa30] sm:$0xff]
        %v1311 = vld [vmem:[%s362 + $0xa38] sm:$0xff]
        %v1312 = vld [vmem:[%s362 + $0xa40] sm:$0xff]
        %v1313 = vld [vmem:[%s362 + $0xa48] sm:$0xff]
        %v1314 = vld [vmem:[%s362 + $0xa50] sm:$0xff]
        %v1315 = vld [vmem:[%s362 + $0xa58] sm:$0xff]
        %v1316 = vld [vmem:[%s362 + $0xa60] sm:$0xff]
        %v1317 = vld [vmem:[%s362 + $0xa68] sm:$0xff]
        %v1318 = vld [vmem:[%s362 + $0xa70] sm:$0xff]
        %v1319 = vld [vmem:[%s362 + $0xa78] sm:$0xff]
        %v1320 = vld [vmem:[%s362 + $0xa80] sm:$0xff]
        %v1321 = vld [vmem:[%s362 + $0xa88] sm:$0xff]
        %v1322 = vld [vmem:[%s362 + $0xa90] sm:$0xff]
        %v1323 = vld [vmem:[%s362 + $0xa98] sm:$0xff]
        %v1324 = vld [vmem:[%s362 + $0xaa0] sm:$0xff]
        %v1325 = vld [vmem:[%s362 + $0xaa8] sm:$0xff]
        %v1326 = vld [vmem:[%s362 + $0xab0] sm:$0xff]
        %v1327 = vld [vmem:[%s362 + $0xab8] sm:$0xff]
        %v1328 = vld [vmem:[%s362 + $0xac0] sm:$0xff]
        %v1329 = vld [vmem:[%s362 + $0xac8] sm:$0xff]
        %v1330 = vld [vmem:[%s362 + $0xad0] sm:$0xff]
        %v1331 = vld [vmem:[%s362 + $0xad8] sm:$0xff]
        %v1332 = vld [vmem:[%s362 + $0xae0] sm:$0xff]
        %v1333 = vld [vmem:[%s362 + $0xae8] sm:$0xff]
        %v1334 = vld [vmem:[%s362 + $0xaf0] sm:$0xff]
        %v1335 = vld [vmem:[%s362 + $0xaf8] sm:$0xff]
        %v1336 = vld [vmem:[%s362 + $0xb00] sm:$0xff]
        %v1337 = vld [vmem:[%s362 + $0xb08] sm:$0xff]
        %v1338 = vld [vmem:[%s362 + $0xb10] sm:$0xff]
        %v1339 = vld [vmem:[%s362 + $0xb18] sm:$0xff]
        %v1340 = vld [vmem:[%s362 + $0xb20] sm:$0xff]
        %v1341 = vld [vmem:[%s362 + $0xb28] sm:$0xff]
        %v1342 = vld [vmem:[%s362 + $0xb30] sm:$0xff]
        %v1343 = vld [vmem:[%s362 + $0xb38] sm:$0xff]
        %v1344 = vld [vmem:[%s362 + $0xb40] sm:$0xff]
        %v1345 = vld [vmem:[%s362 + $0xb48] sm:$0xff]
        %v1346 = vld [vmem:[%s362 + $0xb50] sm:$0xff]
        %v1347 = vld [vmem:[%s362 + $0xb58] sm:$0xff]
        %v1348 = vld [vmem:[%s362 + $0xb60] sm:$0xff]
        %v1349 = vld [vmem:[%s362 + $0xb68] sm:$0xff]
        %v1350 = vld [vmem:[%s362 + $0xb70] sm:$0xff]
        %v1351 = vld [vmem:[%s362 + $0xb78] sm:$0xff]
        %v1352 = vld [vmem:[%s362 + $0xb80] sm:$0xff]
        %v1353 = vld [vmem:[%s362 + $0xb88] sm:$0xff]
        %v1354 = vld [vmem:[%s362 + $0xb90] sm:$0xff]
        %v1355 = vld [vmem:[%s362 + $0xb98] sm:$0xff]
        %v1356 = vld [vmem:[%s362 + $0xba0] sm:$0xff]
        %v1357 = vld [vmem:[%s362 + $0xba8] sm:$0xff]
        %v1358 = vld [vmem:[%s362 + $0xbb0] sm:$0xff]
        %v1359 = vld [vmem:[%s362 + $0xbb8] sm:$0xff]
        %v1360 = vld [vmem:[%s362 + $0xbc0] sm:$0xff]
        %v1361 = vld [vmem:[%s362 + $0xbc8] sm:$0xff]
        %v1362 = vld [vmem:[%s362 + $0xbd0] sm:$0xff]
        %v1363 = vld [vmem:[%s362 + $0xbd8] sm:$0xff]
        %v1364 = vld [vmem:[%s362 + $0xbe0] sm:$0xff]
        %v1365 = vld [vmem:[%s362 + $0xbe8] sm:$0xff]
        %v1366 = vld [vmem:[%s362 + $0xbf0] sm:$0xff]
        %v1367 = vld [vmem:[%s362 + $0xbf8] sm:$0xff]
        %v1368 = vld [vmem:[%s362 + $0xc00] sm:$0xff]
        %v1369 = vld [vmem:[%s362 + $0xc08] sm:$0xff]
        %v1370 = vld [vmem:[%s362 + $0xc10] sm:$0xff]
        %v1371 = vld [vmem:[%s362 + $0xc18] sm:$0xff]
        %v1372 = vld [vmem:[%s362 + $0xc20] sm:$0xff]
        %v1373 = vld [vmem:[%s362 + $0xc28] sm:$0xff]
        %v1374 = vld [vmem:[%s362 + $0xc30] sm:$0xff]
        %v1375 = vld [vmem:[%s362 + $0xc38] sm:$0xff]
        %v1376 = vld [vmem:[%s362 + $0xc40] sm:$0xff]
        %v1377 = vld [vmem:[%s362 + $0xc48] sm:$0xff]
        %v1378 = vld [vmem:[%s362 + $0xc50] sm:$0xff]
        %v1379 = vld [vmem:[%s362 + $0xc58] sm:$0xff]
        %v1380 = vld [vmem:[%s362 + $0xc60] sm:$0xff]
        %v1381 = vld [vmem:[%s362 + $0xc68] sm:$0xff]
        %v1382 = vld [vmem:[%s362 + $0xc70] sm:$0xff]
        %v1383 = vld [vmem:[%s362 + $0xc78] sm:$0xff]
        %v1384 = vld [vmem:[%s362 + $0xc80] sm:$0xff]
        %v1385 = vld [vmem:[%s362 + $0xc88] sm:$0xff]
        %v1386 = vld [vmem:[%s362 + $0xc90] sm:$0xff]
        %v1387 = vld [vmem:[%s362 + $0xc98] sm:$0xff]
        %v1388 = vld [vmem:[%s362 + $0xca0] sm:$0xff]
        %v1389 = vld [vmem:[%s362 + $0xca8] sm:$0xff]
        %v1390 = vld [vmem:[%s362 + $0xcb0] sm:$0xff]
        %v1391 = vld [vmem:[%s362 + $0xcb8] sm:$0xff]
        %v1392 = vld [vmem:[%s362 + $0xcc0] sm:$0xff]
        %v1393 = vld [vmem:[%s362 + $0xcc8] sm:$0xff]
        %v1394 = vld [vmem:[%s362 + $0xcd0] sm:$0xff]
        %v1395 = vld [vmem:[%s362 + $0xcd8] sm:$0xff]
        %v1396 = vld [vmem:[%s362 + $0xce0] sm:$0xff]
        %v1397 = vld [vmem:[%s362 + $0xce8] sm:$0xff]
        %v1398 = vld [vmem:[%s362 + $0xcf0] sm:$0xff]
        %v1399 = vld [vmem:[%s362 + $0xcf8] sm:$0xff]
        %v1400 = vld [vmem:[%s362 + $0xd00] sm:$0xff]
        %v1401 = vld [vmem:[%s362 + $0xd08] sm:$0xff]
        %v1402 = vld [vmem:[%s362 + $0xd10] sm:$0xff]
        %v1403 = vld [vmem:[%s362 + $0xd18] sm:$0xff]
        %v1404 = vld [vmem:[%s362 + $0xd20] sm:$0xff]
        %v1405 = vld [vmem:[%s362 + $0xd28] sm:$0xff]
        %v1406 = vld [vmem:[%s362 + $0xd30] sm:$0xff]
        %v1407 = vld [vmem:[%s362 + $0xd38] sm:$0xff]
        %v1408 = vld [vmem:[%s362 + $0xd40] sm:$0xff]
        %v1409 = vld [vmem:[%s362 + $0xd48] sm:$0xff]
        %v1410 = vld [vmem:[%s362 + $0xd50] sm:$0xff]
        %v1411 = vld [vmem:[%s362 + $0xd58] sm:$0xff]
        %v1412 = vld [vmem:[%s362 + $0xd60] sm:$0xff]
        %v1413 = vld [vmem:[%s362 + $0xd68] sm:$0xff]
        %v1414 = vld [vmem:[%s362 + $0xd70] sm:$0xff]
        %v1415 = vld [vmem:[%s362 + $0xd78] sm:$0xff]
        %v1416 = vld [vmem:[%s362 + $0xd80] sm:$0xff]
        %v1417 = vld [vmem:[%s362 + $0xd88] sm:$0xff]
        %v1418 = vld [vmem:[%s362 + $0xd90] sm:$0xff]
        %v1419 = vld [vmem:[%s362 + $0xd98] sm:$0xff]
        %v1420 = vld [vmem:[%s362 + $0xda0] sm:$0xff]
        %v1421 = vld [vmem:[%s362 + $0xda8] sm:$0xff]
        %v1422 = vld [vmem:[%s362 + $0xdb0] sm:$0xff]
        %v1423 = vld [vmem:[%s362 + $0xdb8] sm:$0xff]
        %v1424 = vld [vmem:[%s362 + $0xdc0] sm:$0xff]
        %v1425 = vld [vmem:[%s362 + $0xdc8] sm:$0xff]
        %v1426 = vld [vmem:[%s362 + $0xdd0] sm:$0xff]
        %v1427 = vld [vmem:[%s362 + $0xdd8] sm:$0xff]
        %v1428 = vld [vmem:[%s362 + $0xde0] sm:$0xff]
        %v1429 = vld [vmem:[%s362 + $0xde8] sm:$0xff]
        %v1430 = vld [vmem:[%s362 + $0xdf0] sm:$0xff]
        %v1431 = vld [vmem:[%s362 + $0xdf8] sm:$0xff]
        %v1432 = vld [vmem:[%s362 + $0xe00] sm:$0xff]
        %v1433 = vld [vmem:[%s362 + $0xe08] sm:$0xff]
        %v1434 = vld [vmem:[%s362 + $0xe10] sm:$0xff]
        %v1435 = vld [vmem:[%s362 + $0xe18] sm:$0xff]
        %v1436 = vld [vmem:[%s362 + $0xe20] sm:$0xff]
        %v1437 = vld [vmem:[%s362 + $0xe28] sm:$0xff]
        %v1438 = vld [vmem:[%s362 + $0xe30] sm:$0xff]
        %v1439 = vld [vmem:[%s362 + $0xe38] sm:$0xff]
        %v1440 = vld [vmem:[%s362 + $0xe40] sm:$0xff]
        %v1441 = vld [vmem:[%s362 + $0xe48] sm:$0xff]
        %v1442 = vld [vmem:[%s362 + $0xe50] sm:$0xff]
        %v1443 = vld [vmem:[%s362 + $0xe58] sm:$0xff]
        %v1444 = vld [vmem:[%s362 + $0xe60] sm:$0xff]
        %v1445 = vld [vmem:[%s362 + $0xe68] sm:$0xff]
        %v1446 = vld [vmem:[%s362 + $0xe70] sm:$0xff]
        %v1447 = vld [vmem:[%s362 + $0xe78] sm:$0xff]
        %v1448 = vld [vmem:[%s362 + $0xe80] sm:$0xff]
        %v1449 = vld [vmem:[%s362 + $0xe88] sm:$0xff]
        %v1450 = vld [vmem:[%s362 + $0xe90] sm:$0xff]
        %v1451 = vld [vmem:[%s362 + $0xe98] sm:$0xff]
        %v1452 = vld [vmem:[%s362 + $0xea0] sm:$0xff]
        %v1453 = vld [vmem:[%s362 + $0xea8] sm:$0xff]
        %v1454 = vld [vmem:[%s362 + $0xeb0] sm:$0xff]
        %v1455 = vld [vmem:[%s362 + $0xeb8] sm:$0xff]
        %v1456 = vld [vmem:[%s362 + $0xec0] sm:$0xff]
        %v1457 = vld [vmem:[%s362 + $0xec8] sm:$0xff]
        %v1458 = vld [vmem:[%s362 + $0xed0] sm:$0xff]
        %v1459 = vld [vmem:[%s362 + $0xed8] sm:$0xff]
        %v1460 = vld [vmem:[%s362 + $0xee0] sm:$0xff]
        %v1461 = vld [vmem:[%s362 + $0xee8] sm:$0xff]
        %v1462 = vld [vmem:[%s362 + $0xef0] sm:$0xff]
        %v1463 = vld [vmem:[%s362 + $0xef8] sm:$0xff]
        %v1464 = vld [vmem:[%s362 + $0xf00] sm:$0xff]
        %v1465 = vld [vmem:[%s362 + $0xf08] sm:$0xff]
        %v1466 = vld [vmem:[%s362 + $0xf10] sm:$0xff]
        %v1467 = vld [vmem:[%s362 + $0xf18] sm:$0xff]
        %v1468 = vld [vmem:[%s362 + $0xf20] sm:$0xff]
        %v1469 = vld [vmem:[%s362 + $0xf28] sm:$0xff]
        %v1470 = vld [vmem:[%s362 + $0xf30] sm:$0xff]
        %v1471 = vld [vmem:[%s362 + $0xf38] sm:$0xff]
        %v1472 = vld [vmem:[%s362 + $0xf40] sm:$0xff]
        %v1473 = vld [vmem:[%s362 + $0xf48] sm:$0xff]
        %v1474 = vld [vmem:[%s362 + $0xf50] sm:$0xff]
        %v1475 = vld [vmem:[%s362 + $0xf58] sm:$0xff]
        %v1476 = vld [vmem:[%s362 + $0xf60] sm:$0xff]
        %v1477 = vld [vmem:[%s362 + $0xf68] sm:$0xff]
        %v1478 = vld [vmem:[%s362 + $0xf70] sm:$0xff]
        %v1479 = vld [vmem:[%s362 + $0xf78] sm:$0xff]
        %v1480 = vld [vmem:[%s362 + $0xf80] sm:$0xff]
        %v1481 = vld [vmem:[%s362 + $0xf88] sm:$0xff]
        %v1482 = vld [vmem:[%s362 + $0xf90] sm:$0xff]
        %v1483 = vld [vmem:[%s362 + $0xf98] sm:$0xff]
        %v1484 = vld [vmem:[%s362 + $0xfa0] sm:$0xff]
        %v1485 = vld [vmem:[%s362 + $0xfa8] sm:$0xff]
        %v1486 = vld [vmem:[%s362 + $0xfb0] sm:$0xff]
        %v1487 = vld [vmem:[%s362 + $0xfb8] sm:$0xff]
        %v1488 = vld [vmem:[%s362 + $0xfc0] sm:$0xff]
        %v1489 = vld [vmem:[%s362 + $0xfc8] sm:$0xff]
        %v1490 = vld [vmem:[%s362 + $0xfd0] sm:$0xff]
        %v1491 = vld [vmem:[%s362 + $0xfd8] sm:$0xff]
        %v1492 = vld [vmem:[%s362 + $0xfe0] sm:$0xff]
        %v1493 = vld [vmem:[%s362 + $0xfe8] sm:$0xff]
        %v1494 = vld [vmem:[%s362 + $0xff0] sm:$0xff]
        %v1495 = vld [vmem:[%s362 + $0xff8] sm:$0xff]
        %v1497 = vperm.slane %v456, 0
        %v1498 = vperm.slane %v456, 1
        %1501 = vmatpush.xpose.msra.mxu0 %v487
        %1502 = vmatpush.xpose.msra.mxu0 %v486
        %1503 = vmatpush.xpose.msra.mxu0 %v485
        %1504 = vmatpush.xpose.msra.mxu0 %v484
        %1505 = vmatpush.xpose.msra.mxu0 %v483
        %1506 = vmatpush.xpose.msra.mxu0 %v482
        %1507 = vmatpush.xpose.msra.mxu0 %v481
        %1508 = vmatpush.xpose.msra.mxu0 %v480
        %1509 = vmatpush.xpose.msra.mxu0 %v479
        %1510 = vmatpush.xpose.msra.mxu0 %v478
        %1511 = vmatpush.xpose.msra.mxu0 %v477
        %1512 = vmatpush.xpose.msra.mxu0 %v476
        %1513 = vmatpush.xpose.msra.mxu0 %v475
        %1514 = vmatpush.xpose.msra.mxu0 %v474
        %1515 = vmatpush.xpose.msra.mxu0 %v473
        %1516 = vmatpush.xpose.msra.mxu0 %v472
        %1517 = vmatmul.f32.gmra.mxu0 %v440
        %v1518 = vpop.f32.mrf.mxu0
        %v1519 = vadd.f32 %v1497, %v1518
        %1520 = vdwg.mxu0
        %1521 = vmatpush.xpose.msra.mxu0 %v503
        %1522 = vmatpush.xpose.msra.mxu0 %v502
        %1523 = vmatpush.xpose.msra.mxu0 %v501
        %1524 = vmatpush.xpose.msra.mxu0 %v500
        %1525 = vmatpush.xpose.msra.mxu0 %v499
        %1526 = vmatpush.xpose.msra.mxu0 %v498
        %1527 = vmatpush.xpose.msra.mxu0 %v497
        %1528 = vmatpush.xpose.msra.mxu0 %v496
        %1529 = vmatpush.xpose.msra.mxu0 %v495
        %1530 = vmatpush.xpose.msra.mxu0 %v494
        %1531 = vmatpush.xpose.msra.mxu0 %v493
        %1532 = vmatpush.xpose.msra.mxu0 %v492
        %1533 = vmatpush.xpose.msra.mxu0 %v491
        %1534 = vmatpush.xpose.msra.mxu0 %v490
        %1535 = vmatpush.xpose.msra.mxu0 %v489
        %1536 = vmatpush.xpose.msra.mxu0 %v488
        %1537 = vmatmul.f32.gmra.mxu0 %v440
        %v1538 = vpop.f32.mrf.mxu0
        %v1539 = vadd.f32 %v1498, %v1538
        %1540 = vdwg.mxu0
        %v1542 = vperm.slane %v457, 0
        %v1543 = vperm.slane %v457, 1
        %1546 = vmatpush.xpose.msra.mxu0 %v519
        %1547 = vmatpush.xpose.msra.mxu0 %v518
        %1548 = vmatpush.xpose.msra.mxu0 %v517
        %1549 = vmatpush.xpose.msra.mxu0 %v516
        %1550 = vmatpush.xpose.msra.mxu0 %v515
        %1551 = vmatpush.xpose.msra.mxu0 %v514
        %1552 = vmatpush.xpose.msra.mxu0 %v513
        %1553 = vmatpush.xpose.msra.mxu0 %v512
        %1554 = vmatpush.xpose.msra.mxu0 %v511
        %1555 = vmatpush.xpose.msra.mxu0 %v510
        %1556 = vmatpush.xpose.msra.mxu0 %v509
        %1557 = vmatpush.xpose.msra.mxu0 %v508
        %1558 = vmatpush.xpose.msra.mxu0 %v507
        %1559 = vmatpush.xpose.msra.mxu0 %v506
        %1560 = vmatpush.xpose.msra.mxu0 %v505
        %1561 = vmatpush.xpose.msra.mxu0 %v504
        %1562 = vmatmul.f32.gmra.mxu0 %v441
        %v1563 = vpop.f32.mrf.mxu0
        %v1564 = vadd.f32 %v1542, %v1563
        %1565 = vdwg.mxu0
        %1566 = vmatpush.xpose.msra.mxu0 %v535
        %1567 = vmatpush.xpose.msra.mxu0 %v534
        %1568 = vmatpush.xpose.msra.mxu0 %v533
        %1569 = vmatpush.xpose.msra.mxu0 %v532
        %1570 = vmatpush.xpose.msra.mxu0 %v531
        %1571 = vmatpush.xpose.msra.mxu0 %v530
        %1572 = vmatpush.xpose.msra.mxu0 %v529
        %1573 = vmatpush.xpose.msra.mxu0 %v528
        %1574 = vmatpush.xpose.msra.mxu0 %v527
        %1575 = vmatpush.xpose.msra.mxu0 %v526
        %1576 = vmatpush.xpose.msra.mxu0 %v525
        %1577 = vmatpush.xpose.msra.mxu0 %v524
        %1578 = vmatpush.xpose.msra.mxu0 %v523
        %1579 = vmatpush.xpose.msra.mxu0 %v522
        %1580 = vmatpush.xpose.msra.mxu0 %v521
        %1581 = vmatpush.xpose.msra.mxu0 %v520
        %1582 = vmatmul.f32.gmra.mxu0 %v441
        %v1583 = vpop.f32.mrf.mxu0
        %v1584 = vadd.f32 %v1543, %v1583
        %1585 = vdwg.mxu0
        %v1587 = vperm.slane %v458, 0
        %v1588 = vperm.slane %v458, 1
        %1591 = vmatpush.xpose.msra.mxu0 %v551
        %1592 = vmatpush.xpose.msra.mxu0 %v550
        %1593 = vmatpush.xpose.msra.mxu0 %v549
        %1594 = vmatpush.xpose.msra.mxu0 %v548
        %1595 = vmatpush.xpose.msra.mxu0 %v547
        %1596 = vmatpush.xpose.msra.mxu0 %v546
        %1597 = vmatpush.xpose.msra.mxu0 %v545
        %1598 = vmatpush.xpose.msra.mxu0 %v544
        %1599 = vmatpush.xpose.msra.mxu0 %v543
        %1600 = vmatpush.xpose.msra.mxu0 %v542
        %1601 = vmatpush.xpose.msra.mxu0 %v541
        %1602 = vmatpush.xpose.msra.mxu0 %v540
        %1603 = vmatpush.xpose.msra.mxu0 %v539
        %1604 = vmatpush.xpose.msra.mxu0 %v538
        %1605 = vmatpush.xpose.msra.mxu0 %v537
        %1606 = vmatpush.xpose.msra.mxu0 %v536
        %1607 = vmatmul.f32.gmra.mxu0 %v442
        %v1608 = vpop.f32.mrf.mxu0
        %v1609 = vadd.f32 %v1587, %v1608
        %1610 = vdwg.mxu0
        %1611 = vmatpush.xpose.msra.mxu0 %v567
        %1612 = vmatpush.xpose.msra.mxu0 %v566
        %1613 = vmatpush.xpose.msra.mxu0 %v565
        %1614 = vmatpush.xpose.msra.mxu0 %v564
        %1615 = vmatpush.xpose.msra.mxu0 %v563
        %1616 = vmatpush.xpose.msra.mxu0 %v562
        %1617 = vmatpush.xpose.msra.mxu0 %v561
        %1618 = vmatpush.xpose.msra.mxu0 %v560
        %1619 = vmatpush.xpose.msra.mxu0 %v559
        %1620 = vmatpush.xpose.msra.mxu0 %v558
        %1621 = vmatpush.xpose.msra.mxu0 %v557
        %1622 = vmatpush.xpose.msra.mxu0 %v556
        %1623 = vmatpush.xpose.msra.mxu0 %v555
        %1624 = vmatpush.xpose.msra.mxu0 %v554
        %1625 = vmatpush.xpose.msra.mxu0 %v553
        %1626 = vmatpush.xpose.msra.mxu0 %v552
        %1627 = vmatmul.f32.gmra.mxu0 %v442
        %v1628 = vpop.f32.mrf.mxu0
        %v1629 = vadd.f32 %v1588, %v1628
        %1630 = vdwg.mxu0
        %v1632 = vperm.slane %v459, 0
        %v1633 = vperm.slane %v459, 1
        %1636 = vmatpush.xpose.msra.mxu0 %v583
        %1637 = vmatpush.xpose.msra.mxu0 %v582
        %1638 = vmatpush.xpose.msra.mxu0 %v581
        %1639 = vmatpush.xpose.msra.mxu0 %v580
        %1640 = vmatpush.xpose.msra.mxu0 %v579
        %1641 = vmatpush.xpose.msra.mxu0 %v578
        %1642 = vmatpush.xpose.msra.mxu0 %v577
        %1643 = vmatpush.xpose.msra.mxu0 %v576
        %1644 = vmatpush.xpose.msra.mxu0 %v575
        %1645 = vmatpush.xpose.msra.mxu0 %v574
        %1646 = vmatpush.xpose.msra.mxu0 %v573
        %1647 = vmatpush.xpose.msra.mxu0 %v572
        %1648 = vmatpush.xpose.msra.mxu0 %v571
        %1649 = vmatpush.xpose.msra.mxu0 %v570
        %1650 = vmatpush.xpose.msra.mxu0 %v569
        %1651 = vmatpush.xpose.msra.mxu0 %v568
        %1652 = vmatmul.f32.gmra.mxu0 %v443
        %v1653 = vpop.f32.mrf.mxu0
        %v1654 = vadd.f32 %v1632, %v1653
        %1655 = vdwg.mxu0
        %1656 = vmatpush.xpose.msra.mxu0 %v599
        %1657 = vmatpush.xpose.msra.mxu0 %v598
        %1658 = vmatpush.xpose.msra.mxu0 %v597
        %1659 = vmatpush.xpose.msra.mxu0 %v596
        %1660 = vmatpush.xpose.msra.mxu0 %v595
        %1661 = vmatpush.xpose.msra.mxu0 %v594
        %1662 = vmatpush.xpose.msra.mxu0 %v593
        %1663 = vmatpush.xpose.msra.mxu0 %v592
        %1664 = vmatpush.xpose.msra.mxu0 %v591
        %1665 = vmatpush.xpose.msra.mxu0 %v590
        %1666 = vmatpush.xpose.msra.mxu0 %v589
        %1667 = vmatpush.xpose.msra.mxu0 %v588
        %1668 = vmatpush.xpose.msra.mxu0 %v587
        %1669 = vmatpush.xpose.msra.mxu0 %v586
        %1670 = vmatpush.xpose.msra.mxu0 %v585
        %1671 = vmatpush.xpose.msra.mxu0 %v584
        %1672 = vmatmul.f32.gmra.mxu0 %v443
        %v1673 = vpop.f32.mrf.mxu0
        %v1674 = vadd.f32 %v1633, %v1673
        %1675 = vdwg.mxu0
        %v1677 = vperm.slane %v460, 0
        %v1678 = vperm.slane %v460, 1
        %1681 = vmatpush.xpose.msra.mxu0 %v615
        %1682 = vmatpush.xpose.msra.mxu0 %v614
        %1683 = vmatpush.xpose.msra.mxu0 %v613
        %1684 = vmatpush.xpose.msra.mxu0 %v612
        %1685 = vmatpush.xpose.msra.mxu0 %v611
        %1686 = vmatpush.xpose.msra.mxu0 %v610
        %1687 = vmatpush.xpose.msra.mxu0 %v609
        %1688 = vmatpush.xpose.msra.mxu0 %v608
        %1689 = vmatpush.xpose.msra.mxu0 %v607
        %1690 = vmatpush.xpose.msra.mxu0 %v606
        %1691 = vmatpush.xpose.msra.mxu0 %v605
        %1692 = vmatpush.xpose.msra.mxu0 %v604
        %1693 = vmatpush.xpose.msra.mxu0 %v603
        %1694 = vmatpush.xpose.msra.mxu0 %v602
        %1695 = vmatpush.xpose.msra.mxu0 %v601
        %1696 = vmatpush.xpose.msra.mxu0 %v600
        %1697 = vmatmul.f32.gmra.mxu0 %v444
        %v1698 = vpop.f32.mrf.mxu0
        %v1699 = vadd.f32 %v1677, %v1698
        %1700 = vdwg.mxu0
        %1701 = vmatpush.xpose.msra.mxu0 %v631
        %1702 = vmatpush.xpose.msra.mxu0 %v630
        %1703 = vmatpush.xpose.msra.mxu0 %v629
        %1704 = vmatpush.xpose.msra.mxu0 %v628
        %1705 = vmatpush.xpose.msra.mxu0 %v627
        %1706 = vmatpush.xpose.msra.mxu0 %v626
        %1707 = vmatpush.xpose.msra.mxu0 %v625
        %1708 = vmatpush.xpose.msra.mxu0 %v624
        %1709 = vmatpush.xpose.msra.mxu0 %v623
        %1710 = vmatpush.xpose.msra.mxu0 %v622
        %1711 = vmatpush.xpose.msra.mxu0 %v621
        %1712 = vmatpush.xpose.msra.mxu0 %v620
        %1713 = vmatpush.xpose.msra.mxu0 %v619
        %1714 = vmatpush.xpose.msra.mxu0 %v618
        %1715 = vmatpush.xpose.msra.mxu0 %v617
        %1716 = vmatpush.xpose.msra.mxu0 %v616
        %1717 = vmatmul.f32.gmra.mxu0 %v444
        %v1718 = vpop.f32.mrf.mxu0
        %v1719 = vadd.f32 %v1678, %v1718
        %1720 = vdwg.mxu0
        %v1722 = vperm.slane %v461, 0
        %v1723 = vperm.slane %v461, 1
        %1726 = vmatpush.xpose.msra.mxu0 %v647
        %1727 = vmatpush.xpose.msra.mxu0 %v646
        %1728 = vmatpush.xpose.msra.mxu0 %v645
        %1729 = vmatpush.xpose.msra.mxu0 %v644
        %1730 = vmatpush.xpose.msra.mxu0 %v643
        %1731 = vmatpush.xpose.msra.mxu0 %v642
        %1732 = vmatpush.xpose.msra.mxu0 %v641
        %1733 = vmatpush.xpose.msra.mxu0 %v640
        %1734 = vmatpush.xpose.msra.mxu0 %v639
        %1735 = vmatpush.xpose.msra.mxu0 %v638
        %1736 = vmatpush.xpose.msra.mxu0 %v637
        %1737 = vmatpush.xpose.msra.mxu0 %v636
        %1738 = vmatpush.xpose.msra.mxu0 %v635
        %1739 = vmatpush.xpose.msra.mxu0 %v634
        %1740 = vmatpush.xpose.msra.mxu0 %v633
        %1741 = vmatpush.xpose.msra.mxu0 %v632
        %1742 = vmatmul.f32.gmra.mxu0 %v445
        %v1743 = vpop.f32.mrf.mxu0
        %v1744 = vadd.f32 %v1722, %v1743
        %1745 = vdwg.mxu0
        %1746 = vmatpush.xpose.msra.mxu0 %v663
        %1747 = vmatpush.xpose.msra.mxu0 %v662
        %1748 = vmatpush.xpose.msra.mxu0 %v661
        %1749 = vmatpush.xpose.msra.mxu0 %v660
        %1750 = vmatpush.xpose.msra.mxu0 %v659
        %1751 = vmatpush.xpose.msra.mxu0 %v658
        %1752 = vmatpush.xpose.msra.mxu0 %v657
        %1753 = vmatpush.xpose.msra.mxu0 %v656
        %1754 = vmatpush.xpose.msra.mxu0 %v655
        %1755 = vmatpush.xpose.msra.mxu0 %v654
        %1756 = vmatpush.xpose.msra.mxu0 %v653
        %1757 = vmatpush.xpose.msra.mxu0 %v652
        %1758 = vmatpush.xpose.msra.mxu0 %v651
        %1759 = vmatpush.xpose.msra.mxu0 %v650
        %1760 = vmatpush.xpose.msra.mxu0 %v649
        %1761 = vmatpush.xpose.msra.mxu0 %v648
        %1762 = vmatmul.f32.gmra.mxu0 %v445
        %v1763 = vpop.f32.mrf.mxu0
        %v1764 = vadd.f32 %v1723, %v1763
        %1765 = vdwg.mxu0
        %v1767 = vperm.slane %v462, 0
        %v1768 = vperm.slane %v462, 1
        %1771 = vmatpush.xpose.msra.mxu0 %v679
        %1772 = vmatpush.xpose.msra.mxu0 %v678
        %1773 = vmatpush.xpose.msra.mxu0 %v677
        %1774 = vmatpush.xpose.msra.mxu0 %v676
        %1775 = vmatpush.xpose.msra.mxu0 %v675
        %1776 = vmatpush.xpose.msra.mxu0 %v674
        %1777 = vmatpush.xpose.msra.mxu0 %v673
        %1778 = vmatpush.xpose.msra.mxu0 %v672
        %1779 = vmatpush.xpose.msra.mxu0 %v671
        %1780 = vmatpush.xpose.msra.mxu0 %v670
        %1781 = vmatpush.xpose.msra.mxu0 %v669
        %1782 = vmatpush.xpose.msra.mxu0 %v668
        %1783 = vmatpush.xpose.msra.mxu0 %v667
        %1784 = vmatpush.xpose.msra.mxu0 %v666
        %1785 = vmatpush.xpose.msra.mxu0 %v665
        %1786 = vmatpush.xpose.msra.mxu0 %v664
        %1787 = vmatmul.f32.gmra.mxu0 %v446
        %v1788 = vpop.f32.mrf.mxu0
        %v1789 = vadd.f32 %v1767, %v1788
        %1790 = vdwg.mxu0
        %1791 = vmatpush.xpose.msra.mxu0 %v695
        %1792 = vmatpush.xpose.msra.mxu0 %v694
        %1793 = vmatpush.xpose.msra.mxu0 %v693
        %1794 = vmatpush.xpose.msra.mxu0 %v692
        %1795 = vmatpush.xpose.msra.mxu0 %v691
        %1796 = vmatpush.xpose.msra.mxu0 %v690
        %1797 = vmatpush.xpose.msra.mxu0 %v689
        %1798 = vmatpush.xpose.msra.mxu0 %v688
        %1799 = vmatpush.xpose.msra.mxu0 %v687
        %1800 = vmatpush.xpose.msra.mxu0 %v686
        %1801 = vmatpush.xpose.msra.mxu0 %v685
        %1802 = vmatpush.xpose.msra.mxu0 %v684
        %1803 = vmatpush.xpose.msra.mxu0 %v683
        %1804 = vmatpush.xpose.msra.mxu0 %v682
        %1805 = vmatpush.xpose.msra.mxu0 %v681
        %1806 = vmatpush.xpose.msra.mxu0 %v680
        %1807 = vmatmul.f32.gmra.mxu0 %v446
        %v1808 = vpop.f32.mrf.mxu0
        %v1809 = vadd.f32 %v1768, %v1808
        %1810 = vdwg.mxu0
        %v1812 = vperm.slane %v463, 0
        %v1813 = vperm.slane %v463, 1
        %1816 = vmatpush.xpose.msra.mxu0 %v711
        %1817 = vmatpush.xpose.msra.mxu0 %v710
        %1818 = vmatpush.xpose.msra.mxu0 %v709
        %1819 = vmatpush.xpose.msra.mxu0 %v708
        %1820 = vmatpush.xpose.msra.mxu0 %v707
        %1821 = vmatpush.xpose.msra.mxu0 %v706
        %1822 = vmatpush.xpose.msra.mxu0 %v705
        %1823 = vmatpush.xpose.msra.mxu0 %v704
        %1824 = vmatpush.xpose.msra.mxu0 %v703
        %1825 = vmatpush.xpose.msra.mxu0 %v702
        %1826 = vmatpush.xpose.msra.mxu0 %v701
        %1827 = vmatpush.xpose.msra.mxu0 %v700
        %1828 = vmatpush.xpose.msra.mxu0 %v699
        %1829 = vmatpush.xpose.msra.mxu0 %v698
        %1830 = vmatpush.xpose.msra.mxu0 %v697
        %1831 = vmatpush.xpose.msra.mxu0 %v696
        %1832 = vmatmul.f32.gmra.mxu0 %v447
        %v1833 = vpop.f32.mrf.mxu0
        %v1834 = vadd.f32 %v1812, %v1833
        %1835 = vdwg.mxu0
        %1836 = vmatpush.xpose.msra.mxu0 %v727
        %1837 = vmatpush.xpose.msra.mxu0 %v726
        %1838 = vmatpush.xpose.msra.mxu0 %v725
        %1839 = vmatpush.xpose.msra.mxu0 %v724
        %1840 = vmatpush.xpose.msra.mxu0 %v723
        %1841 = vmatpush.xpose.msra.mxu0 %v722
        %1842 = vmatpush.xpose.msra.mxu0 %v721
        %1843 = vmatpush.xpose.msra.mxu0 %v720
        %1844 = vmatpush.xpose.msra.mxu0 %v719
        %1845 = vmatpush.xpose.msra.mxu0 %v718
        %1846 = vmatpush.xpose.msra.mxu0 %v717
        %1847 = vmatpush.xpose.msra.mxu0 %v716
        %1848 = vmatpush.xpose.msra.mxu0 %v715
        %1849 = vmatpush.xpose.msra.mxu0 %v714
        %1850 = vmatpush.xpose.msra.mxu0 %v713
        %1851 = vmatpush.xpose.msra.mxu0 %v712
        %1852 = vmatmul.f32.gmra.mxu0 %v447
        %v1853 = vpop.f32.mrf.mxu0
        %v1854 = vadd.f32 %v1813, %v1853
        %1855 = vdwg.mxu0
        %v1857 = vperm.slane %v464, 0
        %v1858 = vperm.slane %v464, 1
        %1861 = vmatpush.xpose.msra.mxu0 %v743
        %1862 = vmatpush.xpose.msra.mxu0 %v742
        %1863 = vmatpush.xpose.msra.mxu0 %v741
        %1864 = vmatpush.xpose.msra.mxu0 %v740
        %1865 = vmatpush.xpose.msra.mxu0 %v739
        %1866 = vmatpush.xpose.msra.mxu0 %v738
        %1867 = vmatpush.xpose.msra.mxu0 %v737
        %1868 = vmatpush.xpose.msra.mxu0 %v736
        %1869 = vmatpush.xpose.msra.mxu0 %v735
        %1870 = vmatpush.xpose.msra.mxu0 %v734
        %1871 = vmatpush.xpose.msra.mxu0 %v733
        %1872 = vmatpush.xpose.msra.mxu0 %v732
        %1873 = vmatpush.xpose.msra.mxu0 %v731
        %1874 = vmatpush.xpose.msra.mxu0 %v730
        %1875 = vmatpush.xpose.msra.mxu0 %v729
        %1876 = vmatpush.xpose.msra.mxu0 %v728
        %1877 = vmatmul.f32.gmra.mxu0 %v448
        %v1878 = vpop.f32.mrf.mxu0
        %v1879 = vadd.f32 %v1857, %v1878
        %1880 = vdwg.mxu0
        %1881 = vmatpush.xpose.msra.mxu0 %v759
        %1882 = vmatpush.xpose.msra.mxu0 %v758
        %1883 = vmatpush.xpose.msra.mxu0 %v757
        %1884 = vmatpush.xpose.msra.mxu0 %v756
        %1885 = vmatpush.xpose.msra.mxu0 %v755
        %1886 = vmatpush.xpose.msra.mxu0 %v754
        %1887 = vmatpush.xpose.msra.mxu0 %v753
        %1888 = vmatpush.xpose.msra.mxu0 %v752
        %1889 = vmatpush.xpose.msra.mxu0 %v751
        %1890 = vmatpush.xpose.msra.mxu0 %v750
        %1891 = vmatpush.xpose.msra.mxu0 %v749
        %1892 = vmatpush.xpose.msra.mxu0 %v748
        %1893 = vmatpush.xpose.msra.mxu0 %v747
        %1894 = vmatpush.xpose.msra.mxu0 %v746
        %1895 = vmatpush.xpose.msra.mxu0 %v745
        %1896 = vmatpush.xpose.msra.mxu0 %v744
        %1897 = vmatmul.f32.gmra.mxu0 %v448
        %v1898 = vpop.f32.mrf.mxu0
        %v1899 = vadd.f32 %v1858, %v1898
        %1900 = vdwg.mxu0
        %v1902 = vperm.slane %v465, 0
        %v1903 = vperm.slane %v465, 1
        %1906 = vmatpush.xpose.msra.mxu0 %v775
        %1907 = vmatpush.xpose.msra.mxu0 %v774
        %1908 = vmatpush.xpose.msra.mxu0 %v773
        %1909 = vmatpush.xpose.msra.mxu0 %v772
        %1910 = vmatpush.xpose.msra.mxu0 %v771
        %1911 = vmatpush.xpose.msra.mxu0 %v770
        %1912 = vmatpush.xpose.msra.mxu0 %v769
        %1913 = vmatpush.xpose.msra.mxu0 %v768
        %1914 = vmatpush.xpose.msra.mxu0 %v767
        %1915 = vmatpush.xpose.msra.mxu0 %v766
        %1916 = vmatpush.xpose.msra.mxu0 %v765
        %1917 = vmatpush.xpose.msra.mxu0 %v764
        %1918 = vmatpush.xpose.msra.mxu0 %v763
        %1919 = vmatpush.xpose.msra.mxu0 %v762
        %1920 = vmatpush.xpose.msra.mxu0 %v761
        %1921 = vmatpush.xpose.msra.mxu0 %v760
        %1922 = vmatmul.f32.gmra.mxu0 %v449
        %v1923 = vpop.f32.mrf.mxu0
        %v1924 = vadd.f32 %v1902, %v1923
        %1925 = vdwg.mxu0
        %1926 = vmatpush.xpose.msra.mxu0 %v791
        %1927 = vmatpush.xpose.msra.mxu0 %v790
        %1928 = vmatpush.xpose.msra.mxu0 %v789
        %1929 = vmatpush.xpose.msra.mxu0 %v788
        %1930 = vmatpush.xpose.msra.mxu0 %v787
        %1931 = vmatpush.xpose.msra.mxu0 %v786
        %1932 = vmatpush.xpose.msra.mxu0 %v785
        %1933 = vmatpush.xpose.msra.mxu0 %v784
        %1934 = vmatpush.xpose.msra.mxu0 %v783
        %1935 = vmatpush.xpose.msra.mxu0 %v782
        %1936 = vmatpush.xpose.msra.mxu0 %v781
        %1937 = vmatpush.xpose.msra.mxu0 %v780
        %1938 = vmatpush.xpose.msra.mxu0 %v779
        %1939 = vmatpush.xpose.msra.mxu0 %v778
        %1940 = vmatpush.xpose.msra.mxu0 %v777
        %1941 = vmatpush.xpose.msra.mxu0 %v776
        %1942 = vmatmul.f32.gmra.mxu0 %v449
        %v1943 = vpop.f32.mrf.mxu0
        %v1944 = vadd.f32 %v1903, %v1943
        %1945 = vdwg.mxu0
        %v1947 = vperm.slane %v466, 0
        %v1948 = vperm.slane %v466, 1
        %1951 = vmatpush.xpose.msra.mxu0 %v807
        %1952 = vmatpush.xpose.msra.mxu0 %v806
        %1953 = vmatpush.xpose.msra.mxu0 %v805
        %1954 = vmatpush.xpose.msra.mxu0 %v804
        %1955 = vmatpush.xpose.msra.mxu0 %v803
        %1956 = vmatpush.xpose.msra.mxu0 %v802
        %1957 = vmatpush.xpose.msra.mxu0 %v801
        %1958 = vmatpush.xpose.msra.mxu0 %v800
        %1959 = vmatpush.xpose.msra.mxu0 %v799
        %1960 = vmatpush.xpose.msra.mxu0 %v798
        %1961 = vmatpush.xpose.msra.mxu0 %v797
        %1962 = vmatpush.xpose.msra.mxu0 %v796
        %1963 = vmatpush.xpose.msra.mxu0 %v795
        %1964 = vmatpush.xpose.msra.mxu0 %v794
        %1965 = vmatpush.xpose.msra.mxu0 %v793
        %1966 = vmatpush.xpose.msra.mxu0 %v792
        %1967 = vmatmul.f32.gmra.mxu0 %v450
        %v1968 = vpop.f32.mrf.mxu0
        %v1969 = vadd.f32 %v1947, %v1968
        %1970 = vdwg.mxu0
        %1971 = vmatpush.xpose.msra.mxu0 %v823
        %1972 = vmatpush.xpose.msra.mxu0 %v822
        %1973 = vmatpush.xpose.msra.mxu0 %v821
        %1974 = vmatpush.xpose.msra.mxu0 %v820
        %1975 = vmatpush.xpose.msra.mxu0 %v819
        %1976 = vmatpush.xpose.msra.mxu0 %v818
        %1977 = vmatpush.xpose.msra.mxu0 %v817
        %1978 = vmatpush.xpose.msra.mxu0 %v816
        %1979 = vmatpush.xpose.msra.mxu0 %v815
        %1980 = vmatpush.xpose.msra.mxu0 %v814
        %1981 = vmatpush.xpose.msra.mxu0 %v813
        %1982 = vmatpush.xpose.msra.mxu0 %v812
        %1983 = vmatpush.xpose.msra.mxu0 %v811
        %1984 = vmatpush.xpose.msra.mxu0 %v810
        %1985 = vmatpush.xpose.msra.mxu0 %v809
        %1986 = vmatpush.xpose.msra.mxu0 %v808
        %1987 = vmatmul.f32.gmra.mxu0 %v450
        %v1988 = vpop.f32.mrf.mxu0
        %v1989 = vadd.f32 %v1948, %v1988
        %1990 = vdwg.mxu0
        %v1992 = vperm.slane %v467, 0
        %v1993 = vperm.slane %v467, 1
        %1996 = vmatpush.xpose.msra.mxu0 %v839
        %1997 = vmatpush.xpose.msra.mxu0 %v838
        %1998 = vmatpush.xpose.msra.mxu0 %v837
        %1999 = vmatpush.xpose.msra.mxu0 %v836
        %2000 = vmatpush.xpose.msra.mxu0 %v835
        %2001 = vmatpush.xpose.msra.mxu0 %v834
        %2002 = vmatpush.xpose.msra.mxu0 %v833
        %2003 = vmatpush.xpose.msra.mxu0 %v832
        %2004 = vmatpush.xpose.msra.mxu0 %v831
        %2005 = vmatpush.xpose.msra.mxu0 %v830
        %2006 = vmatpush.xpose.msra.mxu0 %v829
        %2007 = vmatpush.xpose.msra.mxu0 %v828
        %2008 = vmatpush.xpose.msra.mxu0 %v827
        %2009 = vmatpush.xpose.msra.mxu0 %v826
        %2010 = vmatpush.xpose.msra.mxu0 %v825
        %2011 = vmatpush.xpose.msra.mxu0 %v824
        %2012 = vmatmul.f32.gmra.mxu0 %v451
        %v2013 = vpop.f32.mrf.mxu0
        %v2014 = vadd.f32 %v1992, %v2013
        %2015 = vdwg.mxu0
        %2016 = vmatpush.xpose.msra.mxu0 %v855
        %2017 = vmatpush.xpose.msra.mxu0 %v854
        %2018 = vmatpush.xpose.msra.mxu0 %v853
        %2019 = vmatpush.xpose.msra.mxu0 %v852
        %2020 = vmatpush.xpose.msra.mxu0 %v851
        %2021 = vmatpush.xpose.msra.mxu0 %v850
        %2022 = vmatpush.xpose.msra.mxu0 %v849
        %2023 = vmatpush.xpose.msra.mxu0 %v848
        %2024 = vmatpush.xpose.msra.mxu0 %v847
        %2025 = vmatpush.xpose.msra.mxu0 %v846
        %2026 = vmatpush.xpose.msra.mxu0 %v845
        %2027 = vmatpush.xpose.msra.mxu0 %v844
        %2028 = vmatpush.xpose.msra.mxu0 %v843
        %2029 = vmatpush.xpose.msra.mxu0 %v842
        %2030 = vmatpush.xpose.msra.mxu0 %v841
        %2031 = vmatpush.xpose.msra.mxu0 %v840
        %2032 = vmatmul.f32.gmra.mxu0 %v451
        %v2033 = vpop.f32.mrf.mxu0
        %v2034 = vadd.f32 %v1993, %v2033
        %2035 = vdwg.mxu0
        %v2037 = vperm.slane %v468, 0
        %v2038 = vperm.slane %v468, 1
        %2041 = vmatpush.xpose.msra.mxu0 %v871
        %2042 = vmatpush.xpose.msra.mxu0 %v870
        %2043 = vmatpush.xpose.msra.mxu0 %v869
        %2044 = vmatpush.xpose.msra.mxu0 %v868
        %2045 = vmatpush.xpose.msra.mxu0 %v867
        %2046 = vmatpush.xpose.msra.mxu0 %v866
        %2047 = vmatpush.xpose.msra.mxu0 %v865
        %2048 = vmatpush.xpose.msra.mxu0 %v864
        %2049 = vmatpush.xpose.msra.mxu0 %v863
        %2050 = vmatpush.xpose.msra.mxu0 %v862
        %2051 = vmatpush.xpose.msra.mxu0 %v861
        %2052 = vmatpush.xpose.msra.mxu0 %v860
        %2053 = vmatpush.xpose.msra.mxu0 %v859
        %2054 = vmatpush.xpose.msra.mxu0 %v858
        %2055 = vmatpush.xpose.msra.mxu0 %v857
        %2056 = vmatpush.xpose.msra.mxu0 %v856
        %2057 = vmatmul.f32.gmra.mxu0 %v452
        %v2058 = vpop.f32.mrf.mxu0
        %v2059 = vadd.f32 %v2037, %v2058
        %2060 = vdwg.mxu0
        %2061 = vmatpush.xpose.msra.mxu0 %v887
        %2062 = vmatpush.xpose.msra.mxu0 %v886
        %2063 = vmatpush.xpose.msra.mxu0 %v885
        %2064 = vmatpush.xpose.msra.mxu0 %v884
        %2065 = vmatpush.xpose.msra.mxu0 %v883
        %2066 = vmatpush.xpose.msra.mxu0 %v882
        %2067 = vmatpush.xpose.msra.mxu0 %v881
        %2068 = vmatpush.xpose.msra.mxu0 %v880
        %2069 = vmatpush.xpose.msra.mxu0 %v879
        %2070 = vmatpush.xpose.msra.mxu0 %v878
        %2071 = vmatpush.xpose.msra.mxu0 %v877
        %2072 = vmatpush.xpose.msra.mxu0 %v876
        %2073 = vmatpush.xpose.msra.mxu0 %v875
        %2074 = vmatpush.xpose.msra.mxu0 %v874
        %2075 = vmatpush.xpose.msra.mxu0 %v873
        %2076 = vmatpush.xpose.msra.mxu0 %v872
        %2077 = vmatmul.f32.gmra.mxu0 %v452
        %v2078 = vpop.f32.mrf.mxu0
        %v2079 = vadd.f32 %v2038, %v2078
        %2080 = vdwg.mxu0
        %v2082 = vperm.slane %v469, 0
        %v2083 = vperm.slane %v469, 1
        %2086 = vmatpush.xpose.msra.mxu0 %v903
        %2087 = vmatpush.xpose.msra.mxu0 %v902
        %2088 = vmatpush.xpose.msra.mxu0 %v901
        %2089 = vmatpush.xpose.msra.mxu0 %v900
        %2090 = vmatpush.xpose.msra.mxu0 %v899
        %2091 = vmatpush.xpose.msra.mxu0 %v898
        %2092 = vmatpush.xpose.msra.mxu0 %v897
        %2093 = vmatpush.xpose.msra.mxu0 %v896
        %2094 = vmatpush.xpose.msra.mxu0 %v895
        %2095 = vmatpush.xpose.msra.mxu0 %v894
        %2096 = vmatpush.xpose.msra.mxu0 %v893
        %2097 = vmatpush.xpose.msra.mxu0 %v892
        %2098 = vmatpush.xpose.msra.mxu0 %v891
        %2099 = vmatpush.xpose.msra.mxu0 %v890
        %2100 = vmatpush.xpose.msra.mxu0 %v889
        %2101 = vmatpush.xpose.msra.mxu0 %v888
        %2102 = vmatmul.f32.gmra.mxu0 %v453
        %v2103 = vpop.f32.mrf.mxu0
        %v2104 = vadd.f32 %v2082, %v2103
        %2105 = vdwg.mxu0
        %2106 = vmatpush.xpose.msra.mxu0 %v919
        %2107 = vmatpush.xpose.msra.mxu0 %v918
        %2108 = vmatpush.xpose.msra.mxu0 %v917
        %2109 = vmatpush.xpose.msra.mxu0 %v916
        %2110 = vmatpush.xpose.msra.mxu0 %v915
        %2111 = vmatpush.xpose.msra.mxu0 %v914
        %2112 = vmatpush.xpose.msra.mxu0 %v913
        %2113 = vmatpush.xpose.msra.mxu0 %v912
        %2114 = vmatpush.xpose.msra.mxu0 %v911
        %2115 = vmatpush.xpose.msra.mxu0 %v910
        %2116 = vmatpush.xpose.msra.mxu0 %v909
        %2117 = vmatpush.xpose.msra.mxu0 %v908
        %2118 = vmatpush.xpose.msra.mxu0 %v907
        %2119 = vmatpush.xpose.msra.mxu0 %v906
        %2120 = vmatpush.xpose.msra.mxu0 %v905
        %2121 = vmatpush.xpose.msra.mxu0 %v904
        %2122 = vmatmul.f32.gmra.mxu0 %v453
        %v2123 = vpop.f32.mrf.mxu0
        %v2124 = vadd.f32 %v2083, %v2123
        %2125 = vdwg.mxu0
        %v2127 = vperm.slane %v470, 0
        %v2128 = vperm.slane %v470, 1
        %2131 = vmatpush.xpose.msra.mxu0 %v935
        %2132 = vmatpush.xpose.msra.mxu0 %v934
        %2133 = vmatpush.xpose.msra.mxu0 %v933
        %2134 = vmatpush.xpose.msra.mxu0 %v932
        %2135 = vmatpush.xpose.msra.mxu0 %v931
        %2136 = vmatpush.xpose.msra.mxu0 %v930
        %2137 = vmatpush.xpose.msra.mxu0 %v929
        %2138 = vmatpush.xpose.msra.mxu0 %v928
        %2139 = vmatpush.xpose.msra.mxu0 %v927
        %2140 = vmatpush.xpose.msra.mxu0 %v926
        %2141 = vmatpush.xpose.msra.mxu0 %v925
        %2142 = vmatpush.xpose.msra.mxu0 %v924
        %2143 = vmatpush.xpose.msra.mxu0 %v923
        %2144 = vmatpush.xpose.msra.mxu0 %v922
        %2145 = vmatpush.xpose.msra.mxu0 %v921
        %2146 = vmatpush.xpose.msra.mxu0 %v920
        %2147 = vmatmul.f32.gmra.mxu0 %v454
        %v2148 = vpop.f32.mrf.mxu0
        %v2149 = vadd.f32 %v2127, %v2148
        %2150 = vdwg.mxu0
        %2151 = vmatpush.xpose.msra.mxu0 %v951
        %2152 = vmatpush.xpose.msra.mxu0 %v950
        %2153 = vmatpush.xpose.msra.mxu0 %v949
        %2154 = vmatpush.xpose.msra.mxu0 %v948
        %2155 = vmatpush.xpose.msra.mxu0 %v947
        %2156 = vmatpush.xpose.msra.mxu0 %v946
        %2157 = vmatpush.xpose.msra.mxu0 %v945
        %2158 = vmatpush.xpose.msra.mxu0 %v944
        %2159 = vmatpush.xpose.msra.mxu0 %v943
        %2160 = vmatpush.xpose.msra.mxu0 %v942
        %2161 = vmatpush.xpose.msra.mxu0 %v941
        %2162 = vmatpush.xpose.msra.mxu0 %v940
        %2163 = vmatpush.xpose.msra.mxu0 %v939
        %2164 = vmatpush.xpose.msra.mxu0 %v938
        %2165 = vmatpush.xpose.msra.mxu0 %v937
        %2166 = vmatpush.xpose.msra.mxu0 %v936
        %2167 = vmatmul.f32.gmra.mxu0 %v454
        %v2168 = vpop.f32.mrf.mxu0
        %v2169 = vadd.f32 %v2128, %v2168
        %2170 = vdwg.mxu0
        %v2172 = vperm.slane %v471, 0
        %v2173 = vperm.slane %v471, 1
        %2176 = vmatpush.xpose.msra.mxu0 %v967
        %2177 = vmatpush.xpose.msra.mxu0 %v966
        %2178 = vmatpush.xpose.msra.mxu0 %v965
        %2179 = vmatpush.xpose.msra.mxu0 %v964
        %2180 = vmatpush.xpose.msra.mxu0 %v963
        %2181 = vmatpush.xpose.msra.mxu0 %v962
        %2182 = vmatpush.xpose.msra.mxu0 %v961
        %2183 = vmatpush.xpose.msra.mxu0 %v960
        %2184 = vmatpush.xpose.msra.mxu0 %v959
        %2185 = vmatpush.xpose.msra.mxu0 %v958
        %2186 = vmatpush.xpose.msra.mxu0 %v957
        %2187 = vmatpush.xpose.msra.mxu0 %v956
        %2188 = vmatpush.xpose.msra.mxu0 %v955
        %2189 = vmatpush.xpose.msra.mxu0 %v954
        %2190 = vmatpush.xpose.msra.mxu0 %v953
        %2191 = vmatpush.xpose.msra.mxu0 %v952
        %2192 = vmatmul.f32.gmra.mxu0 %v455
        %v2193 = vpop.f32.mrf.mxu0
        %v2194 = vadd.f32 %v2172, %v2193
        %2195 = vdwg.mxu0
        %2196 = vmatpush.xpose.msra.mxu0 %v983
        %2197 = vmatpush.xpose.msra.mxu0 %v982
        %2198 = vmatpush.xpose.msra.mxu0 %v981
        %2199 = vmatpush.xpose.msra.mxu0 %v980
        %2200 = vmatpush.xpose.msra.mxu0 %v979
        %2201 = vmatpush.xpose.msra.mxu0 %v978
        %2202 = vmatpush.xpose.msra.mxu0 %v977
        %2203 = vmatpush.xpose.msra.mxu0 %v976
        %2204 = vmatpush.xpose.msra.mxu0 %v975
        %2205 = vmatpush.xpose.msra.mxu0 %v974
        %2206 = vmatpush.xpose.msra.mxu0 %v973
        %2207 = vmatpush.xpose.msra.mxu0 %v972
        %2208 = vmatpush.xpose.msra.mxu0 %v971
        %2209 = vmatpush.xpose.msra.mxu0 %v970
        %2210 = vmatpush.xpose.msra.mxu0 %v969
        %2211 = vmatpush.xpose.msra.mxu0 %v968
        %2212 = vmatmul.f32.gmra.mxu0 %v455
        %v2213 = vpop.f32.mrf.mxu0
        %v2214 = vadd.f32 %v2173, %v2213
        %2215 = vdwg.mxu0
        %vm2216 = vcmask 1040384
        %v2217 = vsel %vm2216, %v1519, -inf
        %v2218 = vsel %vm2216, %v1539, -inf
        %v2219 = vmax.f32 %v2217, %v2218
        %2220 = vmax.xlane.f32.xlu0 %v2219
        %v2221 = vpop.xlane.xlu0 %2220
        %v2222 = vsel %vm2216, %v1564, -inf
        %v2223 = vsel %vm2216, %v1584, -inf
        %v2224 = vmax.f32 %v2222, %v2223
        %2225 = vmax.xlane.f32.xlu0 %v2224
        %v2226 = vpop.xlane.xlu0 %2225
        %v2227 = vsel %vm2216, %v1609, -inf
        %v2228 = vsel %vm2216, %v1629, -inf
        %v2229 = vmax.f32 %v2227, %v2228
        %2230 = vmax.xlane.f32.xlu0 %v2229
        %v2231 = vpop.xlane.xlu0 %2230
        %v2232 = vsel %vm2216, %v1654, -inf
        %v2233 = vsel %vm2216, %v1674, -inf
        %v2234 = vmax.f32 %v2232, %v2233
        %2235 = vmax.xlane.f32.xlu0 %v2234
        %v2236 = vpop.xlane.xlu0 %2235
        %v2237 = vsel %vm2216, %v1699, -inf
        %v2238 = vsel %vm2216, %v1719, -inf
        %v2239 = vmax.f32 %v2237, %v2238
        %2240 = vmax.xlane.f32.xlu0 %v2239
        %v2241 = vpop.xlane.xlu0 %2240
        %v2242 = vsel %vm2216, %v1744, -inf
        %v2243 = vsel %vm2216, %v1764, -inf
        %v2244 = vmax.f32 %v2242, %v2243
        %2245 = vmax.xlane.f32.xlu0 %v2244
        %v2246 = vpop.xlane.xlu0 %2245
        %v2247 = vsel %vm2216, %v1789, -inf
        %v2248 = vsel %vm2216, %v1809, -inf
        %v2249 = vmax.f32 %v2247, %v2248
        %2250 = vmax.xlane.f32.xlu0 %v2249
        %v2251 = vpop.xlane.xlu0 %2250
        %v2252 = vsel %vm2216, %v1834, -inf
        %v2253 = vsel %vm2216, %v1854, -inf
        %v2254 = vmax.f32 %v2252, %v2253
        %2255 = vmax.xlane.f32.xlu0 %v2254
        %v2256 = vpop.xlane.xlu0 %2255
        %v2257 = vsel %vm2216, %v1879, -inf
        %v2258 = vsel %vm2216, %v1899, -inf
        %v2259 = vmax.f32 %v2257, %v2258
        %2260 = vmax.xlane.f32.xlu0 %v2259
        %v2261 = vpop.xlane.xlu0 %2260
        %v2262 = vsel %vm2216, %v1924, -inf
        %v2263 = vsel %vm2216, %v1944, -inf
        %v2264 = vmax.f32 %v2262, %v2263
        %2265 = vmax.xlane.f32.xlu0 %v2264
        %v2266 = vpop.xlane.xlu0 %2265
        %v2267 = vsel %vm2216, %v1969, -inf
        %v2268 = vsel %vm2216, %v1989, -inf
        %v2269 = vmax.f32 %v2267, %v2268
        %2270 = vmax.xlane.f32.xlu0 %v2269
        %v2271 = vpop.xlane.xlu0 %2270
        %v2272 = vsel %vm2216, %v2014, -inf
        %v2273 = vsel %vm2216, %v2034, -inf
        %v2274 = vmax.f32 %v2272, %v2273
        %2275 = vmax.xlane.f32.xlu0 %v2274
        %v2276 = vpop.xlane.xlu0 %2275
        %v2277 = vsel %vm2216, %v2059, -inf
        %v2278 = vsel %vm2216, %v2079, -inf
        %v2279 = vmax.f32 %v2277, %v2278
        %2280 = vmax.xlane.f32.xlu0 %v2279
        %v2281 = vpop.xlane.xlu0 %2280
        %v2282 = vsel %vm2216, %v2104, -inf
        %v2283 = vsel %vm2216, %v2124, -inf
        %v2284 = vmax.f32 %v2282, %v2283
        %2285 = vmax.xlane.f32.xlu0 %v2284
        %v2286 = vpop.xlane.xlu0 %2285
        %v2287 = vsel %vm2216, %v2149, -inf
        %v2288 = vsel %vm2216, %v2169, -inf
        %v2289 = vmax.f32 %v2287, %v2288
        %2290 = vmax.xlane.f32.xlu0 %v2289
        %v2291 = vpop.xlane.xlu0 %2290
        %v2292 = vsel %vm2216, %v2194, -inf
        %v2293 = vsel %vm2216, %v2214, -inf
        %v2294 = vmax.f32 %v2292, %v2293
        %2295 = vmax.xlane.f32.xlu0 %v2294
        %v2296 = vpop.xlane.xlu0 %2295
        %v2297 = vsub.f32 %v1519, %v2221
        %v2298 = vsub.f32 %v1539, %v2221
        %v2299 = vsub.f32 %v1564, %v2226
        %v2300 = vsub.f32 %v1584, %v2226
        %v2301 = vsub.f32 %v1609, %v2231
        %v2302 = vsub.f32 %v1629, %v2231
        %v2303 = vsub.f32 %v1654, %v2236
        %v2304 = vsub.f32 %v1674, %v2236
        %v2305 = vsub.f32 %v1699, %v2241
        %v2306 = vsub.f32 %v1719, %v2241
        %v2307 = vsub.f32 %v1744, %v2246
        %v2308 = vsub.f32 %v1764, %v2246
        %v2309 = vsub.f32 %v1789, %v2251
        %v2310 = vsub.f32 %v1809, %v2251
        %v2311 = vsub.f32 %v1834, %v2256
        %v2312 = vsub.f32 %v1854, %v2256
        %v2313 = vsub.f32 %v1879, %v2261
        %v2314 = vsub.f32 %v1899, %v2261
        %v2315 = vsub.f32 %v1924, %v2266
        %v2316 = vsub.f32 %v1944, %v2266
        %v2317 = vsub.f32 %v1969, %v2271
        %v2318 = vsub.f32 %v1989, %v2271
        %v2319 = vsub.f32 %v2014, %v2276
        %v2320 = vsub.f32 %v2034, %v2276
        %v2321 = vsub.f32 %v2059, %v2281
        %v2322 = vsub.f32 %v2079, %v2281
        %v2323 = vsub.f32 %v2104, %v2286
        %v2324 = vsub.f32 %v2124, %v2286
        %v2325 = vsub.f32 %v2149, %v2291
        %v2326 = vsub.f32 %v2169, %v2291
        %v2327 = vsub.f32 %v2194, %v2296
        %v2328 = vsub.f32 %v2214, %v2296
        %v2329 = vmul.f32 %v2297, 1.442695
        %v2330 = vpow.pop %v2329
        %v2331 = vmul.f32 %v2298, 1.442695
        %v2332 = vpow.pop %v2331
        %v2333 = vmul.f32 %v2299, 1.442695
        %v2334 = vpow.pop %v2333
        %v2335 = vmul.f32 %v2300, 1.442695
        %v2336 = vpow.pop %v2335
        %v2337 = vmul.f32 %v2301, 1.442695
        %v2338 = vpow.pop %v2337
        %v2339 = vmul.f32 %v2302, 1.442695
        %v2340 = vpow.pop %v2339
        %v2341 = vmul.f32 %v2303, 1.442695
        %v2342 = vpow.pop %v2341
        %v2343 = vmul.f32 %v2304, 1.442695
        %v2344 = vpow.pop %v2343
        %v2345 = vmul.f32 %v2305, 1.442695
        %v2346 = vpow.pop %v2345
        %v2347 = vmul.f32 %v2306, 1.442695
        %v2348 = vpow.pop %v2347
        %v2349 = vmul.f32 %v2307, 1.442695
        %v2350 = vpow.pop %v2349
        %v2351 = vmul.f32 %v2308, 1.442695
        %v2352 = vpow.pop %v2351
        %v2353 = vmul.f32 %v2309, 1.442695
        %v2354 = vpow.pop %v2353
        %v2355 = vmul.f32 %v2310, 1.442695
        %v2356 = vpow.pop %v2355
        %v2357 = vmul.f32 %v2311, 1.442695
        %v2358 = vpow.pop %v2357
        %v2359 = vmul.f32 %v2312, 1.442695
        %v2360 = vpow.pop %v2359
        %v2361 = vmul.f32 %v2313, 1.442695
        %v2362 = vpow.pop %v2361
        %v2363 = vmul.f32 %v2314, 1.442695
        %v2364 = vpow.pop %v2363
        %v2365 = vmul.f32 %v2315, 1.442695
        %v2366 = vpow.pop %v2365
        %v2367 = vmul.f32 %v2316, 1.442695
        %v2368 = vpow.pop %v2367
        %v2369 = vmul.f32 %v2317, 1.442695
        %v2370 = vpow.pop %v2369
        %v2371 = vmul.f32 %v2318, 1.442695
        %v2372 = vpow.pop %v2371
        %v2373 = vmul.f32 %v2319, 1.442695
        %v2374 = vpow.pop %v2373
        %v2375 = vmul.f32 %v2320, 1.442695
        %v2376 = vpow.pop %v2375
        %v2377 = vmul.f32 %v2321, 1.442695
        %v2378 = vpow.pop %v2377
        %v2379 = vmul.f32 %v2322, 1.442695
        %v2380 = vpow.pop %v2379
        %v2381 = vmul.f32 %v2323, 1.442695
        %v2382 = vpow.pop %v2381
        %v2383 = vmul.f32 %v2324, 1.442695
        %v2384 = vpow.pop %v2383
        %v2385 = vmul.f32 %v2325, 1.442695
        %v2386 = vpow.pop %v2385
        %v2387 = vmul.f32 %v2326, 1.442695
        %v2388 = vpow.pop %v2387
        %v2389 = vmul.f32 %v2327, 1.442695
        %v2390 = vpow.pop %v2389
        %v2391 = vmul.f32 %v2328, 1.442695
        %v2392 = vpow.pop %v2391
        %v2393 = vsel %vm2216, %v2330, 0.0
        %v2394 = vsel %vm2216, %v2332, 0.0
        %v2395 = vadd.f32 %v2393, %v2394
        %2396 = vadd.xlane.f32.xlu0 %v2395
        %v2397 = vpop.xlane.xlu0 %2396
        %v2398 = vsel %vm2216, %v2334, 0.0
        %v2399 = vsel %vm2216, %v2336, 0.0
        %v2400 = vadd.f32 %v2398, %v2399
        %2401 = vadd.xlane.f32.xlu0 %v2400
        %v2402 = vpop.xlane.xlu0 %2401
        %v2403 = vsel %vm2216, %v2338, 0.0
        %v2404 = vsel %vm2216, %v2340, 0.0
        %v2405 = vadd.f32 %v2403, %v2404
        %2406 = vadd.xlane.f32.xlu0 %v2405
        %v2407 = vpop.xlane.xlu0 %2406
        %v2408 = vsel %vm2216, %v2342, 0.0
        %v2409 = vsel %vm2216, %v2344, 0.0
        %v2410 = vadd.f32 %v2408, %v2409
        %2411 = vadd.xlane.f32.xlu0 %v2410
        %v2412 = vpop.xlane.xlu0 %2411
        %v2413 = vsel %vm2216, %v2346, 0.0
        %v2414 = vsel %vm2216, %v2348, 0.0
        %v2415 = vadd.f32 %v2413, %v2414
        %2416 = vadd.xlane.f32.xlu0 %v2415
        %v2417 = vpop.xlane.xlu0 %2416
        %v2418 = vsel %vm2216, %v2350, 0.0
        %v2419 = vsel %vm2216, %v2352, 0.0
        %v2420 = vadd.f32 %v2418, %v2419
        %2421 = vadd.xlane.f32.xlu0 %v2420
        %v2422 = vpop.xlane.xlu0 %2421
        %v2423 = vsel %vm2216, %v2354, 0.0
        %v2424 = vsel %vm2216, %v2356, 0.0
        %v2425 = vadd.f32 %v2423, %v2424
        %2426 = vadd.xlane.f32.xlu0 %v2425
        %v2427 = vpop.xlane.xlu0 %2426
        %v2428 = vsel %vm2216, %v2358, 0.0
        %v2429 = vsel %vm2216, %v2360, 0.0
        %v2430 = vadd.f32 %v2428, %v2429
        %2431 = vadd.xlane.f32.xlu0 %v2430
        %v2432 = vpop.xlane.xlu0 %2431
        %v2433 = vsel %vm2216, %v2362, 0.0
        %v2434 = vsel %vm2216, %v2364, 0.0
        %v2435 = vadd.f32 %v2433, %v2434
        %2436 = vadd.xlane.f32.xlu0 %v2435
        %v2437 = vpop.xlane.xlu0 %2436
        %v2438 = vsel %vm2216, %v2366, 0.0
        %v2439 = vsel %vm2216, %v2368, 0.0
        %v2440 = vadd.f32 %v2438, %v2439
        %2441 = vadd.xlane.f32.xlu0 %v2440
        %v2442 = vpop.xlane.xlu0 %2441
        %v2443 = vsel %vm2216, %v2370, 0.0
        %v2444 = vsel %vm2216, %v2372, 0.0
        %v2445 = vadd.f32 %v2443, %v2444
        %2446 = vadd.xlane.f32.xlu0 %v2445
        %v2447 = vpop.xlane.xlu0 %2446
        %v2448 = vsel %vm2216, %v2374, 0.0
        %v2449 = vsel %vm2216, %v2376, 0.0
        %v2450 = vadd.f32 %v2448, %v2449
        %2451 = vadd.xlane.f32.xlu0 %v2450
        %v2452 = vpop.xlane.xlu0 %2451
        %v2453 = vsel %vm2216, %v2378, 0.0
        %v2454 = vsel %vm2216, %v2380, 0.0
        %v2455 = vadd.f32 %v2453, %v2454
        %2456 = vadd.xlane.f32.xlu0 %v2455
        %v2457 = vpop.xlane.xlu0 %2456
        %v2458 = vsel %vm2216, %v2382, 0.0
        %v2459 = vsel %vm2216, %v2384, 0.0
        %v2460 = vadd.f32 %v2458, %v2459
        %2461 = vadd.xlane.f32.xlu0 %v2460
        %v2462 = vpop.xlane.xlu0 %2461
        %v2463 = vsel %vm2216, %v2386, 0.0
        %v2464 = vsel %vm2216, %v2388, 0.0
        %v2465 = vadd.f32 %v2463, %v2464
        %2466 = vadd.xlane.f32.xlu0 %v2465
        %v2467 = vpop.xlane.xlu0 %2466
        %v2468 = vsel %vm2216, %v2390, 0.0
        %v2469 = vsel %vm2216, %v2392, 0.0
        %v2470 = vadd.f32 %v2468, %v2469
        %2471 = vadd.xlane.f32.xlu0 %v2470
        %v2472 = vpop.xlane.xlu0 %2471
        %v2473 = vrcp.pop %v2397
        %v2474 = vmul.f32 %v2397, %v2473
        %v2475 = vsub.f32 1.0, %v2474
        %v2476 = vmul.f32 %v2473, %v2475
        %v2477 = vadd.f32 %v2473, %v2476
        %vm2478 = vweird.f32 %v2397
        %vm2479 = vweird.f32 %v2473
        %vm2480 = vmor %vm2478, %vm2479
        %v2481 = vsel %vm2480, %v2473, %v2477
        %v2482 = vand.u32 2147483647, %v2397
        %vm2483 = vcmp.eq.f32.partialorder %v2482, 8.507059e+37
        %v2484 = vand.u32 %v2397, 2147483648
        %v2485 = vor.u32 1.1754944e-38, %v2484
        %v2486 = vsel %vm2483, %v2485, %v2481
        %v2487 = vrcp.pop %v2402
        %v2488 = vmul.f32 %v2402, %v2487
        %v2489 = vsub.f32 1.0, %v2488
        %v2490 = vmul.f32 %v2487, %v2489
        %v2491 = vadd.f32 %v2487, %v2490
        %vm2492 = vweird.f32 %v2402
        %vm2493 = vweird.f32 %v2487
        %vm2494 = vmor %vm2492, %vm2493
        %v2495 = vsel %vm2494, %v2487, %v2491
        %v2496 = vand.u32 2147483647, %v2402
        %vm2497 = vcmp.eq.f32.partialorder %v2496, 8.507059e+37
        %v2498 = vand.u32 %v2402, 2147483648
        %v2499 = vor.u32 1.1754944e-38, %v2498
        %v2500 = vsel %vm2497, %v2499, %v2495
        %v2501 = vrcp.pop %v2407
        %v2502 = vmul.f32 %v2407, %v2501
        %v2503 = vsub.f32 1.0, %v2502
        %v2504 = vmul.f32 %v2501, %v2503
        %v2505 = vadd.f32 %v2501, %v2504
        %vm2506 = vweird.f32 %v2407
        %vm2507 = vweird.f32 %v2501
        %vm2508 = vmor %vm2506, %vm2507
        %v2509 = vsel %vm2508, %v2501, %v2505
        %v2510 = vand.u32 2147483647, %v2407
        %vm2511 = vcmp.eq.f32.partialorder %v2510, 8.507059e+37
        %v2512 = vand.u32 %v2407, 2147483648
        %v2513 = vor.u32 1.1754944e-38, %v2512
        %v2514 = vsel %vm2511, %v2513, %v2509
        %v2515 = vrcp.pop %v2412
        %v2516 = vmul.f32 %v2412, %v2515
        %v2517 = vsub.f32 1.0, %v2516
        %v2518 = vmul.f32 %v2515, %v2517
        %v2519 = vadd.f32 %v2515, %v2518
        %vm2520 = vweird.f32 %v2412
        %vm2521 = vweird.f32 %v2515
        %vm2522 = vmor %vm2520, %vm2521
        %v2523 = vsel %vm2522, %v2515, %v2519
        %v2524 = vand.u32 2147483647, %v2412
        %vm2525 = vcmp.eq.f32.partialorder %v2524, 8.507059e+37
        %v2526 = vand.u32 %v2412, 2147483648
        %v2527 = vor.u32 1.1754944e-38, %v2526
        %v2528 = vsel %vm2525, %v2527, %v2523
        %v2529 = vrcp.pop %v2417
        %v2530 = vmul.f32 %v2417, %v2529
        %v2531 = vsub.f32 1.0, %v2530
        %v2532 = vmul.f32 %v2529, %v2531
        %v2533 = vadd.f32 %v2529, %v2532
        %vm2534 = vweird.f32 %v2417
        %vm2535 = vweird.f32 %v2529
        %vm2536 = vmor %vm2534, %vm2535
        %v2537 = vsel %vm2536, %v2529, %v2533
        %v2538 = vand.u32 2147483647, %v2417
        %vm2539 = vcmp.eq.f32.partialorder %v2538, 8.507059e+37
        %v2540 = vand.u32 %v2417, 2147483648
        %v2541 = vor.u32 1.1754944e-38, %v2540
        %v2542 = vsel %vm2539, %v2541, %v2537
        %v2543 = vrcp.pop %v2422
        %v2544 = vmul.f32 %v2422, %v2543
        %v2545 = vsub.f32 1.0, %v2544
        %v2546 = vmul.f32 %v2543, %v2545
        %v2547 = vadd.f32 %v2543, %v2546
        %vm2548 = vweird.f32 %v2422
        %vm2549 = vweird.f32 %v2543
        %vm2550 = vmor %vm2548, %vm2549
        %v2551 = vsel %vm2550, %v2543, %v2547
        %v2552 = vand.u32 2147483647, %v2422
        %vm2553 = vcmp.eq.f32.partialorder %v2552, 8.507059e+37
        %v2554 = vand.u32 %v2422, 2147483648
        %v2555 = vor.u32 1.1754944e-38, %v2554
        %v2556 = vsel %vm2553, %v2555, %v2551
        %v2557 = vrcp.pop %v2427
        %v2558 = vmul.f32 %v2427, %v2557
        %v2559 = vsub.f32 1.0, %v2558
        %v2560 = vmul.f32 %v2557, %v2559
        %v2561 = vadd.f32 %v2557, %v2560
        %vm2562 = vweird.f32 %v2427
        %vm2563 = vweird.f32 %v2557
        %vm2564 = vmor %vm2562, %vm2563
        %v2565 = vsel %vm2564, %v2557, %v2561
        %v2566 = vand.u32 2147483647, %v2427
        %vm2567 = vcmp.eq.f32.partialorder %v2566, 8.507059e+37
        %v2568 = vand.u32 %v2427, 2147483648
        %v2569 = vor.u32 1.1754944e-38, %v2568
        %v2570 = vsel %vm2567, %v2569, %v2565
        %v2571 = vrcp.pop %v2432
        %v2572 = vmul.f32 %v2432, %v2571
        %v2573 = vsub.f32 1.0, %v2572
        %v2574 = vmul.f32 %v2571, %v2573
        %v2575 = vadd.f32 %v2571, %v2574
        %vm2576 = vweird.f32 %v2432
        %vm2577 = vweird.f32 %v2571
        %vm2578 = vmor %vm2576, %vm2577
        %v2579 = vsel %vm2578, %v2571, %v2575
        %v2580 = vand.u32 2147483647, %v2432
        %vm2581 = vcmp.eq.f32.partialorder %v2580, 8.507059e+37
        %v2582 = vand.u32 %v2432, 2147483648
        %v2583 = vor.u32 1.1754944e-38, %v2582
        %v2584 = vsel %vm2581, %v2583, %v2579
        %v2585 = vrcp.pop %v2437
        %v2586 = vmul.f32 %v2437, %v2585
        %v2587 = vsub.f32 1.0, %v2586
        %v2588 = vmul.f32 %v2585, %v2587
        %v2589 = vadd.f32 %v2585, %v2588
        %vm2590 = vweird.f32 %v2437
        %vm2591 = vweird.f32 %v2585
        %vm2592 = vmor %vm2590, %vm2591
        %v2593 = vsel %vm2592, %v2585, %v2589
        %v2594 = vand.u32 2147483647, %v2437
        %vm2595 = vcmp.eq.f32.partialorder %v2594, 8.507059e+37
        %v2596 = vand.u32 %v2437, 2147483648
        %v2597 = vor.u32 1.1754944e-38, %v2596
        %v2598 = vsel %vm2595, %v2597, %v2593
        %v2599 = vrcp.pop %v2442
        %v2600 = vmul.f32 %v2442, %v2599
        %v2601 = vsub.f32 1.0, %v2600
        %v2602 = vmul.f32 %v2599, %v2601
        %v2603 = vadd.f32 %v2599, %v2602
        %vm2604 = vweird.f32 %v2442
        %vm2605 = vweird.f32 %v2599
        %vm2606 = vmor %vm2604, %vm2605
        %v2607 = vsel %vm2606, %v2599, %v2603
        %v2608 = vand.u32 2147483647, %v2442
        %vm2609 = vcmp.eq.f32.partialorder %v2608, 8.507059e+37
        %v2610 = vand.u32 %v2442, 2147483648
        %v2611 = vor.u32 1.1754944e-38, %v2610
        %v2612 = vsel %vm2609, %v2611, %v2607
        %v2613 = vrcp.pop %v2447
        %v2614 = vmul.f32 %v2447, %v2613
        %v2615 = vsub.f32 1.0, %v2614
        %v2616 = vmul.f32 %v2613, %v2615
        %v2617 = vadd.f32 %v2613, %v2616
        %vm2618 = vweird.f32 %v2447
        %vm2619 = vweird.f32 %v2613
        %vm2620 = vmor %vm2618, %vm2619
        %v2621 = vsel %vm2620, %v2613, %v2617
        %v2622 = vand.u32 2147483647, %v2447
        %vm2623 = vcmp.eq.f32.partialorder %v2622, 8.507059e+37
        %v2624 = vand.u32 %v2447, 2147483648
        %v2625 = vor.u32 1.1754944e-38, %v2624
        %v2626 = vsel %vm2623, %v2625, %v2621
        %v2627 = vrcp.pop %v2452
        %v2628 = vmul.f32 %v2452, %v2627
        %v2629 = vsub.f32 1.0, %v2628
        %v2630 = vmul.f32 %v2627, %v2629
        %v2631 = vadd.f32 %v2627, %v2630
        %vm2632 = vweird.f32 %v2452
        %vm2633 = vweird.f32 %v2627
        %vm2634 = vmor %vm2632, %vm2633
        %v2635 = vsel %vm2634, %v2627, %v2631
        %v2636 = vand.u32 2147483647, %v2452
        %vm2637 = vcmp.eq.f32.partialorder %v2636, 8.507059e+37
        %v2638 = vand.u32 %v2452, 2147483648
        %v2639 = vor.u32 1.1754944e-38, %v2638
        %v2640 = vsel %vm2637, %v2639, %v2635
        %v2641 = vrcp.pop %v2457
        %v2642 = vmul.f32 %v2457, %v2641
        %v2643 = vsub.f32 1.0, %v2642
        %v2644 = vmul.f32 %v2641, %v2643
        %v2645 = vadd.f32 %v2641, %v2644
        %vm2646 = vweird.f32 %v2457
        %vm2647 = vweird.f32 %v2641
        %vm2648 = vmor %vm2646, %vm2647
        %v2649 = vsel %vm2648, %v2641, %v2645
        %v2650 = vand.u32 2147483647, %v2457
        %vm2651 = vcmp.eq.f32.partialorder %v2650, 8.507059e+37
        %v2652 = vand.u32 %v2457, 2147483648
        %v2653 = vor.u32 1.1754944e-38, %v2652
        %v2654 = vsel %vm2651, %v2653, %v2649
        %v2655 = vrcp.pop %v2462
        %v2656 = vmul.f32 %v2462, %v2655
        %v2657 = vsub.f32 1.0, %v2656
        %v2658 = vmul.f32 %v2655, %v2657
        %v2659 = vadd.f32 %v2655, %v2658
        %vm2660 = vweird.f32 %v2462
        %vm2661 = vweird.f32 %v2655
        %vm2662 = vmor %vm2660, %vm2661
        %v2663 = vsel %vm2662, %v2655, %v2659
        %v2664 = vand.u32 2147483647, %v2462
        %vm2665 = vcmp.eq.f32.partialorder %v2664, 8.507059e+37
        %v2666 = vand.u32 %v2462, 2147483648
        %v2667 = vor.u32 1.1754944e-38, %v2666
        %v2668 = vsel %vm2665, %v2667, %v2663
        %v2669 = vrcp.pop %v2467
        %v2670 = vmul.f32 %v2467, %v2669
        %v2671 = vsub.f32 1.0, %v2670
        %v2672 = vmul.f32 %v2669, %v2671
        %v2673 = vadd.f32 %v2669, %v2672
        %vm2674 = vweird.f32 %v2467
        %vm2675 = vweird.f32 %v2669
        %vm2676 = vmor %vm2674, %vm2675
        %v2677 = vsel %vm2676, %v2669, %v2673
        %v2678 = vand.u32 2147483647, %v2467
        %vm2679 = vcmp.eq.f32.partialorder %v2678, 8.507059e+37
        %v2680 = vand.u32 %v2467, 2147483648
        %v2681 = vor.u32 1.1754944e-38, %v2680
        %v2682 = vsel %vm2679, %v2681, %v2677
        %v2683 = vrcp.pop %v2472
        %v2684 = vmul.f32 %v2472, %v2683
        %v2685 = vsub.f32 1.0, %v2684
        %v2686 = vmul.f32 %v2683, %v2685
        %v2687 = vadd.f32 %v2683, %v2686
        %vm2688 = vweird.f32 %v2472
        %vm2689 = vweird.f32 %v2683
        %vm2690 = vmor %vm2688, %vm2689
        %v2691 = vsel %vm2690, %v2683, %v2687
        %v2692 = vand.u32 2147483647, %v2472
        %vm2693 = vcmp.eq.f32.partialorder %v2692, 8.507059e+37
        %v2694 = vand.u32 %v2472, 2147483648
        %v2695 = vor.u32 1.1754944e-38, %v2694
        %v2696 = vsel %vm2693, %v2695, %v2691
        %v2697 = vmul.f32 %v2330, %v2486
        %v2698 = vmul.f32 %v2332, %v2486
        %v2699 = vmul.f32 %v2334, %v2500
        %v2700 = vmul.f32 %v2336, %v2500
        %v2701 = vmul.f32 %v2338, %v2514
        %v2702 = vmul.f32 %v2340, %v2514
        %v2703 = vmul.f32 %v2342, %v2528
        %v2704 = vmul.f32 %v2344, %v2528
        %v2705 = vmul.f32 %v2346, %v2542
        %v2706 = vmul.f32 %v2348, %v2542
        %v2707 = vmul.f32 %v2350, %v2556
        %v2708 = vmul.f32 %v2352, %v2556
        %v2709 = vmul.f32 %v2354, %v2570
        %v2710 = vmul.f32 %v2356, %v2570
        %v2711 = vmul.f32 %v2358, %v2584
        %v2712 = vmul.f32 %v2360, %v2584
        %v2713 = vmul.f32 %v2362, %v2598
        %v2714 = vmul.f32 %v2364, %v2598
        %v2715 = vmul.f32 %v2366, %v2612
        %v2716 = vmul.f32 %v2368, %v2612
        %v2717 = vmul.f32 %v2370, %v2626
        %v2718 = vmul.f32 %v2372, %v2626
        %v2719 = vmul.f32 %v2374, %v2640
        %v2720 = vmul.f32 %v2376, %v2640
        %v2721 = vmul.f32 %v2378, %v2654
        %v2722 = vmul.f32 %v2380, %v2654
        %v2723 = vmul.f32 %v2382, %v2668
        %v2724 = vmul.f32 %v2384, %v2668
        %v2725 = vmul.f32 %v2386, %v2682
        %v2726 = vmul.f32 %v2388, %v2682
        %v2727 = vmul.f32 %v2390, %v2696
        %v2728 = vmul.f32 %v2392, %v2696
        %2729 = vmatpush.msra.mxu0 %v999
        %2730 = vmatpush.msra.mxu0 %v998
        %2731 = vmatpush.msra.mxu0 %v997
        %2732 = vmatpush.msra.mxu0 %v996
        %2733 = vmatpush.msra.mxu0 %v995
        %2734 = vmatpush.msra.mxu0 %v994
        %2735 = vmatpush.msra.mxu0 %v993
        %2736 = vmatpush.msra.mxu0 %v992
        %2737 = vmatpush.msra.mxu0 %v991
        %2738 = vmatpush.msra.mxu0 %v990
        %2739 = vmatpush.msra.mxu0 %v989
        %2740 = vmatpush.msra.mxu0 %v988
        %2741 = vmatpush.msra.mxu0 %v987
        %2742 = vmatpush.msra.mxu0 %v986
        %2743 = vmatpush.msra.mxu0 %v985
        %2744 = vmatpush.msra.mxu0 %v984
        %2745 = vmatmul.f32.gmra.mxu0 %v2697
        %v2746 = vpop.f32.mrf.mxu0
        %v2747 = vadd.f32 0.0, %v2746
        %2748 = vdwg.mxu0
        %2749 = vmatpush.msra.mxu0 %v1015
        %2750 = vmatpush.msra.mxu0 %v1014
        %2751 = vmatpush.msra.mxu0 %v1013
        %2752 = vmatpush.msra.mxu0 %v1012
        %2753 = vmatpush.msra.mxu0 %v1011
        %2754 = vmatpush.msra.mxu0 %v1010
        %2755 = vmatpush.msra.mxu0 %v1009
        %2756 = vmatpush.msra.mxu0 %v1008
        %2757 = vmatpush.msra.mxu0 %v1007
        %2758 = vmatpush.msra.mxu0 %v1006
        %2759 = vmatpush.msra.mxu0 %v1005
        %2760 = vmatpush.msra.mxu0 %v1004
        %2761 = vmatpush.msra.mxu0 %v1003
        %2762 = vmatpush.msra.mxu0 %v1002
        %2763 = vmatpush.msra.mxu0 %v1001
        %2764 = vmatpush.msra.mxu0 %v1000
        %2765 = vmatmul.f32.gmra.mxu0 %v2698
        %v2766 = vpop.f32.mrf.mxu0
        %v2767 = vadd.f32 %v2747, %v2766
        %2768 = vdwg.mxu0
        %2769 = vmatpush.msra.mxu0 %v1031
        %2770 = vmatpush.msra.mxu0 %v1030
        %2771 = vmatpush.msra.mxu0 %v1029
        %2772 = vmatpush.msra.mxu0 %v1028
        %2773 = vmatpush.msra.mxu0 %v1027
        %2774 = vmatpush.msra.mxu0 %v1026
        %2775 = vmatpush.msra.mxu0 %v1025
        %2776 = vmatpush.msra.mxu0 %v1024
        %2777 = vmatpush.msra.mxu0 %v1023
        %2778 = vmatpush.msra.mxu0 %v1022
        %2779 = vmatpush.msra.mxu0 %v1021
        %2780 = vmatpush.msra.mxu0 %v1020
        %2781 = vmatpush.msra.mxu0 %v1019
        %2782 = vmatpush.msra.mxu0 %v1018
        %2783 = vmatpush.msra.mxu0 %v1017
        %2784 = vmatpush.msra.mxu0 %v1016
        %2785 = vmatmul.f32.gmra.mxu0 %v2699
        %v2786 = vpop.f32.mrf.mxu0
        %v2787 = vadd.f32 0.0, %v2786
        %2788 = vdwg.mxu0
        %2789 = vmatpush.msra.mxu0 %v1047
        %2790 = vmatpush.msra.mxu0 %v1046
        %2791 = vmatpush.msra.mxu0 %v1045
        %2792 = vmatpush.msra.mxu0 %v1044
        %2793 = vmatpush.msra.mxu0 %v1043
        %2794 = vmatpush.msra.mxu0 %v1042
        %2795 = vmatpush.msra.mxu0 %v1041
        %2796 = vmatpush.msra.mxu0 %v1040
        %2797 = vmatpush.msra.mxu0 %v1039
        %2798 = vmatpush.msra.mxu0 %v1038
        %2799 = vmatpush.msra.mxu0 %v1037
        %2800 = vmatpush.msra.mxu0 %v1036
        %2801 = vmatpush.msra.mxu0 %v1035
        %2802 = vmatpush.msra.mxu0 %v1034
        %2803 = vmatpush.msra.mxu0 %v1033
        %2804 = vmatpush.msra.mxu0 %v1032
        %2805 = vmatmul.f32.gmra.mxu0 %v2700
        %v2806 = vpop.f32.mrf.mxu0
        %v2807 = vadd.f32 %v2787, %v2806
        %2808 = vdwg.mxu0
        %2809 = vmatpush.msra.mxu0 %v1063
        %2810 = vmatpush.msra.mxu0 %v1062
        %2811 = vmatpush.msra.mxu0 %v1061
        %2812 = vmatpush.msra.mxu0 %v1060
        %2813 = vmatpush.msra.mxu0 %v1059
        %2814 = vmatpush.msra.mxu0 %v1058
        %2815 = vmatpush.msra.mxu0 %v1057
        %2816 = vmatpush.msra.mxu0 %v1056
        %2817 = vmatpush.msra.mxu0 %v1055
        %2818 = vmatpush.msra.mxu0 %v1054
        %2819 = vmatpush.msra.mxu0 %v1053
        %2820 = vmatpush.msra.mxu0 %v1052
        %2821 = vmatpush.msra.mxu0 %v1051
        %2822 = vmatpush.msra.mxu0 %v1050
        %2823 = vmatpush.msra.mxu0 %v1049
        %2824 = vmatpush.msra.mxu0 %v1048
        %2825 = vmatmul.f32.gmra.mxu0 %v2701
        %v2826 = vpop.f32.mrf.mxu0
        %v2827 = vadd.f32 0.0, %v2826
        %2828 = vdwg.mxu0
        %2829 = vmatpush.msra.mxu0 %v1079
        %2830 = vmatpush.msra.mxu0 %v1078
        %2831 = vmatpush.msra.mxu0 %v1077
        %2832 = vmatpush.msra.mxu0 %v1076
        %2833 = vmatpush.msra.mxu0 %v1075
        %2834 = vmatpush.msra.mxu0 %v1074
        %2835 = vmatpush.msra.mxu0 %v1073
        %2836 = vmatpush.msra.mxu0 %v1072
        %2837 = vmatpush.msra.mxu0 %v1071
        %2838 = vmatpush.msra.mxu0 %v1070
        %2839 = vmatpush.msra.mxu0 %v1069
        %2840 = vmatpush.msra.mxu0 %v1068
        %2841 = vmatpush.msra.mxu0 %v1067
        %2842 = vmatpush.msra.mxu0 %v1066
        %2843 = vmatpush.msra.mxu0 %v1065
        %2844 = vmatpush.msra.mxu0 %v1064
        %2845 = vmatmul.f32.gmra.mxu0 %v2702
        %v2846 = vpop.f32.mrf.mxu0
        %v2847 = vadd.f32 %v2827, %v2846
        %2848 = vdwg.mxu0
        %2849 = vmatpush.msra.mxu0 %v1095
        %2850 = vmatpush.msra.mxu0 %v1094
        %2851 = vmatpush.msra.mxu0 %v1093
        %2852 = vmatpush.msra.mxu0 %v1092
        %2853 = vmatpush.msra.mxu0 %v1091
        %2854 = vmatpush.msra.mxu0 %v1090
        %2855 = vmatpush.msra.mxu0 %v1089
        %2856 = vmatpush.msra.mxu0 %v1088
        %2857 = vmatpush.msra.mxu0 %v1087
        %2858 = vmatpush.msra.mxu0 %v1086
        %2859 = vmatpush.msra.mxu0 %v1085
        %2860 = vmatpush.msra.mxu0 %v1084
        %2861 = vmatpush.msra.mxu0 %v1083
        %2862 = vmatpush.msra.mxu0 %v1082
        %2863 = vmatpush.msra.mxu0 %v1081
        %2864 = vmatpush.msra.mxu0 %v1080
        %2865 = vmatmul.f32.gmra.mxu0 %v2703
        %v2866 = vpop.f32.mrf.mxu0
        %v2867 = vadd.f32 0.0, %v2866
        %2868 = vdwg.mxu0
        %2869 = vmatpush.msra.mxu0 %v1111
        %2870 = vmatpush.msra.mxu0 %v1110
        %2871 = vmatpush.msra.mxu0 %v1109
        %2872 = vmatpush.msra.mxu0 %v1108
        %2873 = vmatpush.msra.mxu0 %v1107
        %2874 = vmatpush.msra.mxu0 %v1106
        %2875 = vmatpush.msra.mxu0 %v1105
        %2876 = vmatpush.msra.mxu0 %v1104
        %2877 = vmatpush.msra.mxu0 %v1103
        %2878 = vmatpush.msra.mxu0 %v1102
        %2879 = vmatpush.msra.mxu0 %v1101
        %2880 = vmatpush.msra.mxu0 %v1100
        %2881 = vmatpush.msra.mxu0 %v1099
        %2882 = vmatpush.msra.mxu0 %v1098
        %2883 = vmatpush.msra.mxu0 %v1097
        %2884 = vmatpush.msra.mxu0 %v1096
        %2885 = vmatmul.f32.gmra.mxu0 %v2704
        %v2886 = vpop.f32.mrf.mxu0
        %v2887 = vadd.f32 %v2867, %v2886
        %2888 = vdwg.mxu0
        %2889 = vmatpush.msra.mxu0 %v1127
        %2890 = vmatpush.msra.mxu0 %v1126
        %2891 = vmatpush.msra.mxu0 %v1125
        %2892 = vmatpush.msra.mxu0 %v1124
        %2893 = vmatpush.msra.mxu0 %v1123
        %2894 = vmatpush.msra.mxu0 %v1122
        %2895 = vmatpush.msra.mxu0 %v1121
        %2896 = vmatpush.msra.mxu0 %v1120
        %2897 = vmatpush.msra.mxu0 %v1119
        %2898 = vmatpush.msra.mxu0 %v1118
        %2899 = vmatpush.msra.mxu0 %v1117
        %2900 = vmatpush.msra.mxu0 %v1116
        %2901 = vmatpush.msra.mxu0 %v1115
        %2902 = vmatpush.msra.mxu0 %v1114
        %2903 = vmatpush.msra.mxu0 %v1113
        %2904 = vmatpush.msra.mxu0 %v1112
        %2905 = vmatmul.f32.gmra.mxu0 %v2705
        %v2906 = vpop.f32.mrf.mxu0
        %v2907 = vadd.f32 0.0, %v2906
        %2908 = vdwg.mxu0
        %2909 = vmatpush.msra.mxu0 %v1143
        %2910 = vmatpush.msra.mxu0 %v1142
        %2911 = vmatpush.msra.mxu0 %v1141
        %2912 = vmatpush.msra.mxu0 %v1140
        %2913 = vmatpush.msra.mxu0 %v1139
        %2914 = vmatpush.msra.mxu0 %v1138
        %2915 = vmatpush.msra.mxu0 %v1137
        %2916 = vmatpush.msra.mxu0 %v1136
        %2917 = vmatpush.msra.mxu0 %v1135
        %2918 = vmatpush.msra.mxu0 %v1134
        %2919 = vmatpush.msra.mxu0 %v1133
        %2920 = vmatpush.msra.mxu0 %v1132
        %2921 = vmatpush.msra.mxu0 %v1131
        %2922 = vmatpush.msra.mxu0 %v1130
        %2923 = vmatpush.msra.mxu0 %v1129
        %2924 = vmatpush.msra.mxu0 %v1128
        %2925 = vmatmul.f32.gmra.mxu0 %v2706
        %v2926 = vpop.f32.mrf.mxu0
        %v2927 = vadd.f32 %v2907, %v2926
        %2928 = vdwg.mxu0
        %2929 = vmatpush.msra.mxu0 %v1159
        %2930 = vmatpush.msra.mxu0 %v1158
        %2931 = vmatpush.msra.mxu0 %v1157
        %2932 = vmatpush.msra.mxu0 %v1156
        %2933 = vmatpush.msra.mxu0 %v1155
        %2934 = vmatpush.msra.mxu0 %v1154
        %2935 = vmatpush.msra.mxu0 %v1153
        %2936 = vmatpush.msra.mxu0 %v1152
        %2937 = vmatpush.msra.mxu0 %v1151
        %2938 = vmatpush.msra.mxu0 %v1150
        %2939 = vmatpush.msra.mxu0 %v1149
        %2940 = vmatpush.msra.mxu0 %v1148
        %2941 = vmatpush.msra.mxu0 %v1147
        %2942 = vmatpush.msra.mxu0 %v1146
        %2943 = vmatpush.msra.mxu0 %v1145
        %2944 = vmatpush.msra.mxu0 %v1144
        %2945 = vmatmul.f32.gmra.mxu0 %v2707
        %v2946 = vpop.f32.mrf.mxu0
        %v2947 = vadd.f32 0.0, %v2946
        %2948 = vdwg.mxu0
        %2949 = vmatpush.msra.mxu0 %v1175
        %2950 = vmatpush.msra.mxu0 %v1174
        %2951 = vmatpush.msra.mxu0 %v1173
        %2952 = vmatpush.msra.mxu0 %v1172
        %2953 = vmatpush.msra.mxu0 %v1171
        %2954 = vmatpush.msra.mxu0 %v1170
        %2955 = vmatpush.msra.mxu0 %v1169
        %2956 = vmatpush.msra.mxu0 %v1168
        %2957 = vmatpush.msra.mxu0 %v1167
        %2958 = vmatpush.msra.mxu0 %v1166
        %2959 = vmatpush.msra.mxu0 %v1165
        %2960 = vmatpush.msra.mxu0 %v1164
        %2961 = vmatpush.msra.mxu0 %v1163
        %2962 = vmatpush.msra.mxu0 %v1162
        %2963 = vmatpush.msra.mxu0 %v1161
        %2964 = vmatpush.msra.mxu0 %v1160
        %2965 = vmatmul.f32.gmra.mxu0 %v2708
        %v2966 = vpop.f32.mrf.mxu0
        %v2967 = vadd.f32 %v2947, %v2966
        %2968 = vdwg.mxu0
        %2969 = vmatpush.msra.mxu0 %v1191
        %2970 = vmatpush.msra.mxu0 %v1190
        %2971 = vmatpush.msra.mxu0 %v1189
        %2972 = vmatpush.msra.mxu0 %v1188
        %2973 = vmatpush.msra.mxu0 %v1187
        %2974 = vmatpush.msra.mxu0 %v1186
        %2975 = vmatpush.msra.mxu0 %v1185
        %2976 = vmatpush.msra.mxu0 %v1184
        %2977 = vmatpush.msra.mxu0 %v1183
        %2978 = vmatpush.msra.mxu0 %v1182
        %2979 = vmatpush.msra.mxu0 %v1181
        %2980 = vmatpush.msra.mxu0 %v1180
        %2981 = vmatpush.msra.mxu0 %v1179
        %2982 = vmatpush.msra.mxu0 %v1178
        %2983 = vmatpush.msra.mxu0 %v1177
        %2984 = vmatpush.msra.mxu0 %v1176
        %2985 = vmatmul.f32.gmra.mxu0 %v2709
        %v2986 = vpop.f32.mrf.mxu0
        %v2987 = vadd.f32 0.0, %v2986
        %2988 = vdwg.mxu0
        %2989 = vmatpush.msra.mxu0 %v1207
        %2990 = vmatpush.msra.mxu0 %v1206
        %2991 = vmatpush.msra.mxu0 %v1205
        %2992 = vmatpush.msra.mxu0 %v1204
        %2993 = vmatpush.msra.mxu0 %v1203
        %2994 = vmatpush.msra.mxu0 %v1202
        %2995 = vmatpush.msra.mxu0 %v1201
        %2996 = vmatpush.msra.mxu0 %v1200
        %2997 = vmatpush.msra.mxu0 %v1199
        %2998 = vmatpush.msra.mxu0 %v1198
        %2999 = vmatpush.msra.mxu0 %v1197
        %3000 = vmatpush.msra.mxu0 %v1196
        %3001 = vmatpush.msra.mxu0 %v1195
        %3002 = vmatpush.msra.mxu0 %v1194
        %3003 = vmatpush.msra.mxu0 %v1193
        %3004 = vmatpush.msra.mxu0 %v1192
        %3005 = vmatmul.f32.gmra.mxu0 %v2710
        %v3006 = vpop.f32.mrf.mxu0
        %v3007 = vadd.f32 %v2987, %v3006
        %3008 = vdwg.mxu0
        %3009 = vmatpush.msra.mxu0 %v1223
        %3010 = vmatpush.msra.mxu0 %v1222
        %3011 = vmatpush.msra.mxu0 %v1221
        %3012 = vmatpush.msra.mxu0 %v1220
        %3013 = vmatpush.msra.mxu0 %v1219
        %3014 = vmatpush.msra.mxu0 %v1218
        %3015 = vmatpush.msra.mxu0 %v1217
        %3016 = vmatpush.msra.mxu0 %v1216
        %3017 = vmatpush.msra.mxu0 %v1215
        %3018 = vmatpush.msra.mxu0 %v1214
        %3019 = vmatpush.msra.mxu0 %v1213
        %3020 = vmatpush.msra.mxu0 %v1212
        %3021 = vmatpush.msra.mxu0 %v1211
        %3022 = vmatpush.msra.mxu0 %v1210
        %3023 = vmatpush.msra.mxu0 %v1209
        %3024 = vmatpush.msra.mxu0 %v1208
        %3025 = vmatmul.f32.gmra.mxu0 %v2711
        %v3026 = vpop.f32.mrf.mxu0
        %v3027 = vadd.f32 0.0, %v3026
        %3028 = vdwg.mxu0
        %3029 = vmatpush.msra.mxu0 %v1239
        %3030 = vmatpush.msra.mxu0 %v1238
        %3031 = vmatpush.msra.mxu0 %v1237
        %3032 = vmatpush.msra.mxu0 %v1236
        %3033 = vmatpush.msra.mxu0 %v1235
        %3034 = vmatpush.msra.mxu0 %v1234
        %3035 = vmatpush.msra.mxu0 %v1233
        %3036 = vmatpush.msra.mxu0 %v1232
        %3037 = vmatpush.msra.mxu0 %v1231
        %3038 = vmatpush.msra.mxu0 %v1230
        %3039 = vmatpush.msra.mxu0 %v1229
        %3040 = vmatpush.msra.mxu0 %v1228
        %3041 = vmatpush.msra.mxu0 %v1227
        %3042 = vmatpush.msra.mxu0 %v1226
        %3043 = vmatpush.msra.mxu0 %v1225
        %3044 = vmatpush.msra.mxu0 %v1224
        %3045 = vmatmul.f32.gmra.mxu0 %v2712
        %v3046 = vpop.f32.mrf.mxu0
        %v3047 = vadd.f32 %v3027, %v3046
        %3048 = vdwg.mxu0
        %3049 = vmatpush.msra.mxu0 %v1255
        %3050 = vmatpush.msra.mxu0 %v1254
        %3051 = vmatpush.msra.mxu0 %v1253
        %3052 = vmatpush.msra.mxu0 %v1252
        %3053 = vmatpush.msra.mxu0 %v1251
        %3054 = vmatpush.msra.mxu0 %v1250
        %3055 = vmatpush.msra.mxu0 %v1249
        %3056 = vmatpush.msra.mxu0 %v1248
        %3057 = vmatpush.msra.mxu0 %v1247
        %3058 = vmatpush.msra.mxu0 %v1246
        %3059 = vmatpush.msra.mxu0 %v1245
        %3060 = vmatpush.msra.mxu0 %v1244
        %3061 = vmatpush.msra.mxu0 %v1243
        %3062 = vmatpush.msra.mxu0 %v1242
        %3063 = vmatpush.msra.mxu0 %v1241
        %3064 = vmatpush.msra.mxu0 %v1240
        %3065 = vmatmul.f32.gmra.mxu0 %v2713
        %v3066 = vpop.f32.mrf.mxu0
        %v3067 = vadd.f32 0.0, %v3066
        %3068 = vdwg.mxu0
        %3069 = vmatpush.msra.mxu0 %v1271
        %3070 = vmatpush.msra.mxu0 %v1270
        %3071 = vmatpush.msra.mxu0 %v1269
        %3072 = vmatpush.msra.mxu0 %v1268
        %3073 = vmatpush.msra.mxu0 %v1267
        %3074 = vmatpush.msra.mxu0 %v1266
        %3075 = vmatpush.msra.mxu0 %v1265
        %3076 = vmatpush.msra.mxu0 %v1264
        %3077 = vmatpush.msra.mxu0 %v1263
        %3078 = vmatpush.msra.mxu0 %v1262
        %3079 = vmatpush.msra.mxu0 %v1261
        %3080 = vmatpush.msra.mxu0 %v1260
        %3081 = vmatpush.msra.mxu0 %v1259
        %3082 = vmatpush.msra.mxu0 %v1258
        %3083 = vmatpush.msra.mxu0 %v1257
        %3084 = vmatpush.msra.mxu0 %v1256
        %3085 = vmatmul.f32.gmra.mxu0 %v2714
        %v3086 = vpop.f32.mrf.mxu0
        %v3087 = vadd.f32 %v3067, %v3086
        %3088 = vdwg.mxu0
        %3089 = vmatpush.msra.mxu0 %v1287
        %3090 = vmatpush.msra.mxu0 %v1286
        %3091 = vmatpush.msra.mxu0 %v1285
        %3092 = vmatpush.msra.mxu0 %v1284
        %3093 = vmatpush.msra.mxu0 %v1283
        %3094 = vmatpush.msra.mxu0 %v1282
        %3095 = vmatpush.msra.mxu0 %v1281
        %3096 = vmatpush.msra.mxu0 %v1280
        %3097 = vmatpush.msra.mxu0 %v1279
        %3098 = vmatpush.msra.mxu0 %v1278
        %3099 = vmatpush.msra.mxu0 %v1277
        %3100 = vmatpush.msra.mxu0 %v1276
        %3101 = vmatpush.msra.mxu0 %v1275
        %3102 = vmatpush.msra.mxu0 %v1274
        %3103 = vmatpush.msra.mxu0 %v1273
        %3104 = vmatpush.msra.mxu0 %v1272
        %3105 = vmatmul.f32.gmra.mxu0 %v2715
        %v3106 = vpop.f32.mrf.mxu0
        %v3107 = vadd.f32 0.0, %v3106
        %3108 = vdwg.mxu0
        %3109 = vmatpush.msra.mxu0 %v1303
        %3110 = vmatpush.msra.mxu0 %v1302
        %3111 = vmatpush.msra.mxu0 %v1301
        %3112 = vmatpush.msra.mxu0 %v1300
        %3113 = vmatpush.msra.mxu0 %v1299
        %3114 = vmatpush.msra.mxu0 %v1298
        %3115 = vmatpush.msra.mxu0 %v1297
        %3116 = vmatpush.msra.mxu0 %v1296
        %3117 = vmatpush.msra.mxu0 %v1295
        %3118 = vmatpush.msra.mxu0 %v1294
        %3119 = vmatpush.msra.mxu0 %v1293
        %3120 = vmatpush.msra.mxu0 %v1292
        %3121 = vmatpush.msra.mxu0 %v1291
        %3122 = vmatpush.msra.mxu0 %v1290
        %3123 = vmatpush.msra.mxu0 %v1289
        %3124 = vmatpush.msra.mxu0 %v1288
        %3125 = vmatmul.f32.gmra.mxu0 %v2716
        %v3126 = vpop.f32.mrf.mxu0
        %v3127 = vadd.f32 %v3107, %v3126
        %3128 = vdwg.mxu0
        %3129 = vmatpush.msra.mxu0 %v1319
        %3130 = vmatpush.msra.mxu0 %v1318
        %3131 = vmatpush.msra.mxu0 %v1317
        %3132 = vmatpush.msra.mxu0 %v1316
        %3133 = vmatpush.msra.mxu0 %v1315
        %3134 = vmatpush.msra.mxu0 %v1314
        %3135 = vmatpush.msra.mxu0 %v1313
        %3136 = vmatpush.msra.mxu0 %v1312
        %3137 = vmatpush.msra.mxu0 %v1311
        %3138 = vmatpush.msra.mxu0 %v1310
        %3139 = vmatpush.msra.mxu0 %v1309
        %3140 = vmatpush.msra.mxu0 %v1308
        %3141 = vmatpush.msra.mxu0 %v1307
        %3142 = vmatpush.msra.mxu0 %v1306
        %3143 = vmatpush.msra.mxu0 %v1305
        %3144 = vmatpush.msra.mxu0 %v1304
        %3145 = vmatmul.f32.gmra.mxu0 %v2717
        %v3146 = vpop.f32.mrf.mxu0
        %v3147 = vadd.f32 0.0, %v3146
        %3148 = vdwg.mxu0
        %3149 = vmatpush.msra.mxu0 %v1335
        %3150 = vmatpush.msra.mxu0 %v1334
        %3151 = vmatpush.msra.mxu0 %v1333
        %3152 = vmatpush.msra.mxu0 %v1332
        %3153 = vmatpush.msra.mxu0 %v1331
        %3154 = vmatpush.msra.mxu0 %v1330
        %3155 = vmatpush.msra.mxu0 %v1329
        %3156 = vmatpush.msra.mxu0 %v1328
        %3157 = vmatpush.msra.mxu0 %v1327
        %3158 = vmatpush.msra.mxu0 %v1326
        %3159 = vmatpush.msra.mxu0 %v1325
        %3160 = vmatpush.msra.mxu0 %v1324
        %3161 = vmatpush.msra.mxu0 %v1323
        %3162 = vmatpush.msra.mxu0 %v1322
        %3163 = vmatpush.msra.mxu0 %v1321
        %3164 = vmatpush.msra.mxu0 %v1320
        %3165 = vmatmul.f32.gmra.mxu0 %v2718
        %v3166 = vpop.f32.mrf.mxu0
        %v3167 = vadd.f32 %v3147, %v3166
        %3168 = vdwg.mxu0
        %3169 = vmatpush.msra.mxu0 %v1351
        %3170 = vmatpush.msra.mxu0 %v1350
        %3171 = vmatpush.msra.mxu0 %v1349
        %3172 = vmatpush.msra.mxu0 %v1348
        %3173 = vmatpush.msra.mxu0 %v1347
        %3174 = vmatpush.msra.mxu0 %v1346
        %3175 = vmatpush.msra.mxu0 %v1345
        %3176 = vmatpush.msra.mxu0 %v1344
        %3177 = vmatpush.msra.mxu0 %v1343
        %3178 = vmatpush.msra.mxu0 %v1342
        %3179 = vmatpush.msra.mxu0 %v1341
        %3180 = vmatpush.msra.mxu0 %v1340
        %3181 = vmatpush.msra.mxu0 %v1339
        %3182 = vmatpush.msra.mxu0 %v1338
        %3183 = vmatpush.msra.mxu0 %v1337
        %3184 = vmatpush.msra.mxu0 %v1336
        %3185 = vmatmul.f32.gmra.mxu0 %v2719
        %v3186 = vpop.f32.mrf.mxu0
        %v3187 = vadd.f32 0.0, %v3186
        %3188 = vdwg.mxu0
        %3189 = vmatpush.msra.mxu0 %v1367
        %3190 = vmatpush.msra.mxu0 %v1366
        %3191 = vmatpush.msra.mxu0 %v1365
        %3192 = vmatpush.msra.mxu0 %v1364
        %3193 = vmatpush.msra.mxu0 %v1363
        %3194 = vmatpush.msra.mxu0 %v1362
        %3195 = vmatpush.msra.mxu0 %v1361
        %3196 = vmatpush.msra.mxu0 %v1360
        %3197 = vmatpush.msra.mxu0 %v1359
        %3198 = vmatpush.msra.mxu0 %v1358
        %3199 = vmatpush.msra.mxu0 %v1357
        %3200 = vmatpush.msra.mxu0 %v1356
        %3201 = vmatpush.msra.mxu0 %v1355
        %3202 = vmatpush.msra.mxu0 %v1354
        %3203 = vmatpush.msra.mxu0 %v1353
        %3204 = vmatpush.msra.mxu0 %v1352
        %3205 = vmatmul.f32.gmra.mxu0 %v2720
        %v3206 = vpop.f32.mrf.mxu0
        %v3207 = vadd.f32 %v3187, %v3206
        %3208 = vdwg.mxu0
        %3209 = vmatpush.msra.mxu0 %v1383
        %3210 = vmatpush.msra.mxu0 %v1382
        %3211 = vmatpush.msra.mxu0 %v1381
        %3212 = vmatpush.msra.mxu0 %v1380
        %3213 = vmatpush.msra.mxu0 %v1379
        %3214 = vmatpush.msra.mxu0 %v1378
        %3215 = vmatpush.msra.mxu0 %v1377
        %3216 = vmatpush.msra.mxu0 %v1376
        %3217 = vmatpush.msra.mxu0 %v1375
        %3218 = vmatpush.msra.mxu0 %v1374
        %3219 = vmatpush.msra.mxu0 %v1373
        %3220 = vmatpush.msra.mxu0 %v1372
        %3221 = vmatpush.msra.mxu0 %v1371
        %3222 = vmatpush.msra.mxu0 %v1370
        %3223 = vmatpush.msra.mxu0 %v1369
        %3224 = vmatpush.msra.mxu0 %v1368
        %3225 = vmatmul.f32.gmra.mxu0 %v2721
        %v3226 = vpop.f32.mrf.mxu0
        %v3227 = vadd.f32 0.0, %v3226
        %3228 = vdwg.mxu0
        %3229 = vmatpush.msra.mxu0 %v1399
        %3230 = vmatpush.msra.mxu0 %v1398
        %3231 = vmatpush.msra.mxu0 %v1397
        %3232 = vmatpush.msra.mxu0 %v1396
        %3233 = vmatpush.msra.mxu0 %v1395
        %3234 = vmatpush.msra.mxu0 %v1394
        %3235 = vmatpush.msra.mxu0 %v1393
        %3236 = vmatpush.msra.mxu0 %v1392
        %3237 = vmatpush.msra.mxu0 %v1391
        %3238 = vmatpush.msra.mxu0 %v1390
        %3239 = vmatpush.msra.mxu0 %v1389
        %3240 = vmatpush.msra.mxu0 %v1388
        %3241 = vmatpush.msra.mxu0 %v1387
        %3242 = vmatpush.msra.mxu0 %v1386
        %3243 = vmatpush.msra.mxu0 %v1385
        %3244 = vmatpush.msra.mxu0 %v1384
        %3245 = vmatmul.f32.gmra.mxu0 %v2722
        %v3246 = vpop.f32.mrf.mxu0
        %v3247 = vadd.f32 %v3227, %v3246
        %3248 = vdwg.mxu0
        %3249 = vmatpush.msra.mxu0 %v1415
        %3250 = vmatpush.msra.mxu0 %v1414
        %3251 = vmatpush.msra.mxu0 %v1413
        %3252 = vmatpush.msra.mxu0 %v1412
        %3253 = vmatpush.msra.mxu0 %v1411
        %3254 = vmatpush.msra.mxu0 %v1410
        %3255 = vmatpush.msra.mxu0 %v1409
        %3256 = vmatpush.msra.mxu0 %v1408
        %3257 = vmatpush.msra.mxu0 %v1407
        %3258 = vmatpush.msra.mxu0 %v1406
        %3259 = vmatpush.msra.mxu0 %v1405
        %3260 = vmatpush.msra.mxu0 %v1404
        %3261 = vmatpush.msra.mxu0 %v1403
        %3262 = vmatpush.msra.mxu0 %v1402
        %3263 = vmatpush.msra.mxu0 %v1401
        %3264 = vmatpush.msra.mxu0 %v1400
        %3265 = vmatmul.f32.gmra.mxu0 %v2723
        %v3266 = vpop.f32.mrf.mxu0
        %v3267 = vadd.f32 0.0, %v3266
        %3268 = vdwg.mxu0
        %3269 = vmatpush.msra.mxu0 %v1431
        %3270 = vmatpush.msra.mxu0 %v1430
        %3271 = vmatpush.msra.mxu0 %v1429
        %3272 = vmatpush.msra.mxu0 %v1428
        %3273 = vmatpush.msra.mxu0 %v1427
        %3274 = vmatpush.msra.mxu0 %v1426
        %3275 = vmatpush.msra.mxu0 %v1425
        %3276 = vmatpush.msra.mxu0 %v1424
        %3277 = vmatpush.msra.mxu0 %v1423
        %3278 = vmatpush.msra.mxu0 %v1422
        %3279 = vmatpush.msra.mxu0 %v1421
        %3280 = vmatpush.msra.mxu0 %v1420
        %3281 = vmatpush.msra.mxu0 %v1419
        %3282 = vmatpush.msra.mxu0 %v1418
        %3283 = vmatpush.msra.mxu0 %v1417
        %3284 = vmatpush.msra.mxu0 %v1416
        %3285 = vmatmul.f32.gmra.mxu0 %v2724
        %v3286 = vpop.f32.mrf.mxu0
        %v3287 = vadd.f32 %v3267, %v3286
        %3288 = vdwg.mxu0
        %3289 = vmatpush.msra.mxu0 %v1447
        %3290 = vmatpush.msra.mxu0 %v1446
        %3291 = vmatpush.msra.mxu0 %v1445
        %3292 = vmatpush.msra.mxu0 %v1444
        %3293 = vmatpush.msra.mxu0 %v1443
        %3294 = vmatpush.msra.mxu0 %v1442
        %3295 = vmatpush.msra.mxu0 %v1441
        %3296 = vmatpush.msra.mxu0 %v1440
        %3297 = vmatpush.msra.mxu0 %v1439
        %3298 = vmatpush.msra.mxu0 %v1438
        %3299 = vmatpush.msra.mxu0 %v1437
        %3300 = vmatpush.msra.mxu0 %v1436
        %3301 = vmatpush.msra.mxu0 %v1435
        %3302 = vmatpush.msra.mxu0 %v1434
        %3303 = vmatpush.msra.mxu0 %v1433
        %3304 = vmatpush.msra.mxu0 %v1432
        %3305 = vmatmul.f32.gmra.mxu0 %v2725
        %v3306 = vpop.f32.mrf.mxu0
        %v3307 = vadd.f32 0.0, %v3306
        %3308 = vdwg.mxu0
        %3309 = vmatpush.msra.mxu0 %v1463
        %3310 = vmatpush.msra.mxu0 %v1462
        %3311 = vmatpush.msra.mxu0 %v1461
        %3312 = vmatpush.msra.mxu0 %v1460
        %3313 = vmatpush.msra.mxu0 %v1459
        %3314 = vmatpush.msra.mxu0 %v1458
        %3315 = vmatpush.msra.mxu0 %v1457
        %3316 = vmatpush.msra.mxu0 %v1456
        %3317 = vmatpush.msra.mxu0 %v1455
        %3318 = vmatpush.msra.mxu0 %v1454
        %3319 = vmatpush.msra.mxu0 %v1453
        %3320 = vmatpush.msra.mxu0 %v1452
        %3321 = vmatpush.msra.mxu0 %v1451
        %3322 = vmatpush.msra.mxu0 %v1450
        %3323 = vmatpush.msra.mxu0 %v1449
        %3324 = vmatpush.msra.mxu0 %v1448
        %3325 = vmatmul.f32.gmra.mxu0 %v2726
        %v3326 = vpop.f32.mrf.mxu0
        %v3327 = vadd.f32 %v3307, %v3326
        %3328 = vdwg.mxu0
        %3329 = vmatpush.msra.mxu0 %v1479
        %3330 = vmatpush.msra.mxu0 %v1478
        %3331 = vmatpush.msra.mxu0 %v1477
        %3332 = vmatpush.msra.mxu0 %v1476
        %3333 = vmatpush.msra.mxu0 %v1475
        %3334 = vmatpush.msra.mxu0 %v1474
        %3335 = vmatpush.msra.mxu0 %v1473
        %3336 = vmatpush.msra.mxu0 %v1472
        %3337 = vmatpush.msra.mxu0 %v1471
        %3338 = vmatpush.msra.mxu0 %v1470
        %3339 = vmatpush.msra.mxu0 %v1469
        %3340 = vmatpush.msra.mxu0 %v1468
        %3341 = vmatpush.msra.mxu0 %v1467
        %3342 = vmatpush.msra.mxu0 %v1466
        %3343 = vmatpush.msra.mxu0 %v1465
        %3344 = vmatpush.msra.mxu0 %v1464
        %3345 = vmatmul.f32.gmra.mxu0 %v2727
        %v3346 = vpop.f32.mrf.mxu0
        %v3347 = vadd.f32 0.0, %v3346
        %3348 = vdwg.mxu0
        %3349 = vmatpush.msra.mxu0 %v1495
        %3350 = vmatpush.msra.mxu0 %v1494
        %3351 = vmatpush.msra.mxu0 %v1493
        %3352 = vmatpush.msra.mxu0 %v1492
        %3353 = vmatpush.msra.mxu0 %v1491
        %3354 = vmatpush.msra.mxu0 %v1490
        %3355 = vmatpush.msra.mxu0 %v1489
        %3356 = vmatpush.msra.mxu0 %v1488
        %3357 = vmatpush.msra.mxu0 %v1487
        %3358 = vmatpush.msra.mxu0 %v1486
        %3359 = vmatpush.msra.mxu0 %v1485
        %3360 = vmatpush.msra.mxu0 %v1484
        %3361 = vmatpush.msra.mxu0 %v1483
        %3362 = vmatpush.msra.mxu0 %v1482
        %3363 = vmatpush.msra.mxu0 %v1481
        %3364 = vmatpush.msra.mxu0 %v1480
        %3365 = vmatmul.f32.gmra.mxu0 %v2728
        %v3366 = vpop.f32.mrf.mxu0
        %v3367 = vadd.f32 %v3347, %v3366
        %3368 = vdwg.mxu0
        %3369 = vst [vmem:[%s402] sm:$0x1] %v2767
        %3370 = vst [vmem:[%s402 + $0x1] sm:$0x1] %v2807
        %3371 = vst [vmem:[%s402 + $0x2] sm:$0x1] %v2847
        %3372 = vst [vmem:[%s402 + $0x3] sm:$0x1] %v2887
        %3373 = vst [vmem:[%s402 + $0x4] sm:$0x1] %v2927
        %3374 = vst [vmem:[%s402 + $0x5] sm:$0x1] %v2967
        %3375 = vst [vmem:[%s402 + $0x6] sm:$0x1] %v3007
        %3376 = vst [vmem:[%s402 + $0x7] sm:$0x1] %v3047
        %3377 = vst [vmem:[%s402 + $0x8] sm:$0x1] %v3087
        %3378 = vst [vmem:[%s402 + $0x9] sm:$0x1] %v3127
        %3379 = vst [vmem:[%s402 + $0xa] sm:$0x1] %v3167
        %3380 = vst [vmem:[%s402 + $0xb] sm:$0x1] %v3207
        %3381 = vst [vmem:[%s402 + $0xc] sm:$0x1] %v3247
        %3382 = vst [vmem:[%s402 + $0xd] sm:$0x1] %v3287
        %3383 = vst [vmem:[%s402 + $0xe] sm:$0x1] %v3327
        %3384 = vst [vmem:[%s402 + $0xf] sm:$0x1] %v3367
        %v3417 = vrot.slane %v2698, 7
        %v3418 = vrot.slane %v2700, 7
        %v3419 = vrot.slane %v2702, 7
        %v3420 = vrot.slane %v2704, 7
        %v3421 = vrot.slane %v2706, 7
        %v3422 = vrot.slane %v2708, 7
        %v3423 = vrot.slane %v2710, 7
        %v3424 = vrot.slane %v2712, 7
        %v3425 = vrot.slane %v2714, 7
        %v3426 = vrot.slane %v2716, 7
        %v3427 = vrot.slane %v2718, 7
        %v3428 = vrot.slane %v2720, 7
        %v3429 = vrot.slane %v2722, 7
        %v3430 = vrot.slane %v2724, 7
        %v3431 = vrot.slane %v2726, 7
        %v3432 = vrot.slane %v2728, 7
        %v3433 = vsel %vm2216, %v2697, %v3417
        %v3434 = vsel %vm2216, %v2699, %v3418
        %v3435 = vsel %vm2216, %v2701, %v3419
        %v3436 = vsel %vm2216, %v2703, %v3420
        %v3437 = vsel %vm2216, %v2705, %v3421
        %v3438 = vsel %vm2216, %v2707, %v3422
        %v3439 = vsel %vm2216, %v2709, %v3423
        %v3440 = vsel %vm2216, %v2711, %v3424
        %v3441 = vsel %vm2216, %v2713, %v3425
        %v3442 = vsel %vm2216, %v2715, %v3426
        %v3443 = vsel %vm2216, %v2717, %v3427
        %v3444 = vsel %vm2216, %v2719, %v3428
        %v3445 = vsel %vm2216, %v2721, %v3429
        %v3446 = vsel %vm2216, %v2723, %v3430
        %v3447 = vsel %vm2216, %v2725, %v3431
        %v3448 = vsel %vm2216, %v2727, %v3432
        %v3465 = vlaneseq
        %vm3466 = vcmp.ge.s32.totalorder %v3465, 0
        %vm3467 = vcmp.lt.s32.totalorder %v3465, 256
        %vm3468 = vmand %vm3466, %vm3467
        %3469 = vst.msk [vmem:[%s409] sm:$0x3] %vm3468, %v3433
        %3470 = vst.msk [vmem:[%s409 + $0x2] sm:$0x3] %vm3468, %v3434
        %3471 = vst.msk [vmem:[%s409 + $0x4] sm:$0x3] %vm3468, %v3435
        %3472 = vst.msk [vmem:[%s409 + $0x6] sm:$0x3] %vm3468, %v3436
        %3473 = vst.msk [vmem:[%s409 + $0x8] sm:$0x3] %vm3468, %v3437
        %3474 = vst.msk [vmem:[%s409 + $0xa] sm:$0x3] %vm3468, %v3438
        %3475 = vst.msk [vmem:[%s409 + $0xc] sm:$0x3] %vm3468, %v3439
        %3476 = vst.msk [vmem:[%s409 + $0xe] sm:$0x3] %vm3468, %v3440
        %3477 = vst.msk [vmem:[%s409 + $0x10] sm:$0x3] %vm3468, %v3441
        %3478 = vst.msk [vmem:[%s409 + $0x12] sm:$0x3] %vm3468, %v3442
        %3479 = vst.msk [vmem:[%s409 + $0x14] sm:$0x3] %vm3468, %v3443
        %3480 = vst.msk [vmem:[%s409 + $0x16] sm:$0x3] %vm3468, %v3444
        %3481 = vst.msk [vmem:[%s409 + $0x18] sm:$0x3] %vm3468, %v3445
        %3482 = vst.msk [vmem:[%s409 + $0x1a] sm:$0x3] %vm3468, %v3446
        %3483 = vst.msk [vmem:[%s409 + $0x1c] sm:$0x3] %vm3468, %v3447
        %3484 = vst.msk [vmem:[%s409 + $0x1e] sm:$0x3] %vm3468, %v3448
        %s3485 = sand.u32 %s144, 1
        %s3486 = scalar_lea.sflag [#allocation4], %s3485
        %s3487 = sand.u32 %s144, 1
        %s3488 = smul.addr %s3487, 16
        %s3489 = scalar_lea.vmem [#allocation10], %s3488
        %s3490 = sand.u32 %s170, 1
        %s3491 = scalar_lea.sflag [#allocation12], %s3490
        %s3492 = sand.u32 %s170, 1
        %s3493 = smul.addr %s3492, 32
        %s3494 = scalar_lea.vmem [#allocation11], %s3493
        // Predicated region
        $region53: #{tpu_custom_call.1} parent=35 // pred_check
          %p3495 = pneg %p154
        $region54: #{tpu_custom_call.1} parent=35 // pred_check_branch
          %3497 = sbr.rel (%p3495) target = $region56
        $region55: #{tpu_custom_call.1} parent=35 // pred_region
          %s3498 = smul.u32 16, %s32
          %s3499 = ssub.s32 24, %s3498
          %p3500 = scmp.lt.s32.totalorder %s3499, 16
          %s3501 = scalar_select %p3500, %s3499, 16
          %s3502 = ssub.s32 16, %s3501
          %s3503 = sshll.u32 %s3502, 4
          %3504 = vsyncadd %s3486, %s3503
          %p3505 = scmp.ne.s32.totalorder 0, %s3501
          %s3506 = scalar_lea.hbm %s4, %s3498
          %s3507 = sshll.u32 %s3489, 4
          %s3508 = int_to_ptr.vmem [resolvable:$true] %s3507
          %s3509 = sshll.u32 %s3506, 4
          %s3510 = int_to_ptr.hbm [resolvable:$true] %s3509
          %s3511 = sshll.u32 %s3501, 4
          %3515 = dma.vmem_to_hbm [thread:$0]  (%p3505), %s3508, %s3511, %s3510, %s3486, 16, 16, 1
        $region56: #{tpu_custom_call.1} parent=35 // pred_fallthru
          _
        // Predicated region
        $region57: #{tpu_custom_call.1} parent=35 // pred_check
          %p3516 = pneg %p180
        $region58: #{tpu_custom_call.1} parent=35 // pred_check_branch
          %3518 = sbr.rel (%p3516) target = $region60
        $region59: #{tpu_custom_call.1} parent=35 // pred_region
          %s3519 = smul.u32 16, %s32
          %s3520 = ssub.s32 24, %s3519
          %p3521 = scmp.lt.s32.totalorder %s3520, 16
          %s3522 = scalar_select %p3521, %s3520, 16
          %s3523 = smul.u32 %s3522, 2
          %s3524 = ssub.s32 32, %s3523
          %s3525 = sshll.u32 %s3524, 4
          %3526 = vsyncadd %s3491, %s3525
          %p3527 = scmp.ne.s32.totalorder 0, %s3523
          %s3528 = smul.addr %s3519, 2
          %s3529 = scalar_lea.hbm %s5, %s3528
          %s3530 = smul.u32 2, %s3522
          %s3531 = sshll.u32 %s3494, 4
          %s3532 = int_to_ptr.vmem [resolvable:$true] %s3531
          %s3533 = sshll.u32 %s3529, 4
          %s3534 = int_to_ptr.hbm [resolvable:$true] %s3533
          %s3535 = sshll.u32 %s3530, 4
          %3539 = dma.vmem_to_hbm [thread:$0]  (%p3527), %s3532, %s3535, %s3534, %s3491, 32, 32, 2
        $region60: #{tpu_custom_call.1} parent=35 // pred_fallthru
          _
      $region36: #{tpu_custom_call.1} parent=5 // pred_fallthru
        _
      %p3540 = scmp.le.s32.totalorder 2, %s27
      // Predicated region
      $region61: #{tpu_custom_call.1} parent=5 // pred_check
        %p3541 = pneg %p3540
      $region62: #{tpu_custom_call.1} parent=5 // pred_check_branch
        %3543 = sbr.rel (%p3541) target = $region64
      $region63: #{tpu_custom_call.1} parent=5 // pred_region
        %s3544 = ssub.s32 %s27, 2
        // Predicated region
        $region65: #{tpu_custom_call.1} parent=63 // pred_check
          %p3545 = pneg %p160
        $region66: #{tpu_custom_call.1} parent=63 // pred_check_branch
          %3547 = sbr.rel (%p3545) target = $region68
        $region67: #{tpu_custom_call.1} parent=63 // pred_region
          %s3548 = sand.u32 %s145, 1
          %s3549 = scalar_lea.sflag [#allocation4], %s3548
          %s3550 = sand.u32 %s145, 1
          %s3551 = smul.addr %s3550, 16
          %s3552 = scalar_lea.vmem [#allocation10], %s3551
          %3554 = dma.done %s3549, 256
        $region68: #{tpu_custom_call.1} parent=63 // pred_fallthru
          _
        // Predicated region
        $region69: #{tpu_custom_call.1} parent=63 // pred_check
          %p3555 = pneg %p186
        $region70: #{tpu_custom_call.1} parent=63 // pred_check_branch
          %3557 = sbr.rel (%p3555) target = $region72
        $region71: #{tpu_custom_call.1} parent=63 // pred_region
          %s3558 = sand.u32 %s171, 1
          %s3559 = scalar_lea.sflag [#allocation12], %s3558
          %s3560 = sand.u32 %s171, 1
          %s3561 = smul.addr %s3560, 32
          %s3562 = scalar_lea.vmem [#allocation11], %s3561
          %3564 = dma.done %s3559, 512
        $region72: #{tpu_custom_call.1} parent=63 // pred_fallthru
          _
      $region64: #{tpu_custom_call.1} parent=5 // pred_fallthru
        _
    $region6: #{tpu_custom_call.1} parent=1 // loop_footer
      %s31 = sadd.s32 1, %s27
    $region7: #{tpu_custom_call.1} parent=1 // loop_footer_branch
      %26 = sbr.rel target = $region3
    $region8: #{tpu_custom_call.1} parent=1 // loop_exit
      _
    %3565 = vsyncpa [#allocation3], 1
    %s3566 = scalar_lea.sflag [#allocation3], 1
    %3567 = vsyncpa %s3566, 1
    %3568 = vsyncpa [#allocation6], 1
    %s3569 = scalar_lea.sflag [#allocation6], 1
    %3570 = vsyncpa %s3569, 1
    %3571 = vsyncpa [#allocation9], 1
    %s3572 = scalar_lea.sflag [#allocation9], 1
    %3573 = vsyncpa %s3572, 1
    %3574 = vsyncpa [#allocation4], 1
    %s3575 = scalar_lea.sflag [#allocation4], 1
    %3576 = vsyncpa %s3575, 1
    %3577 = vsyncpa [#allocation12], 1
    %s3578 = scalar_lea.sflag [#allocation12], 1
    %3579 = vsyncpa %s3578, 1

</llo_original>
